<compile_context>
chip_gen: v6e
topology: v6e:2x2x1
jax: 0.10.0
libtpu: 0.0.40
codegen_flags: <defaults>
</compile_context>

<pallas_src>
import math

import jax
import jax.numpy as jnp
from jax.experimental import pallas as pl
from jax.experimental.pallas import tpu as pltpu


def _activation(h, act, dtype):
    """Activation in `dtype` (bf16 on v6e/v7x fast path, f32 otherwise).
    Python-float constants are weakly typed so bf16 stays bf16."""
    h = h.astype(dtype)
    if act == "wavelet":
        # sin(h) + cos(h) == sqrt(2) * sin(h + pi/4): one EUP push instead of two.
        return math.sqrt(2.0) * jnp.sin(h + math.pi / 4.0)
    elif act == "sin":
        return jnp.sin(h)
    else:
        return jnp.tanh(h)


def _make_pinn_kernel(n_linear, act, input_dim, use_vpu_first, use_reduce_last,
                      act_dtype, mm_dtype):
    """Kernel refs: (x_ref, w0, b0, w1, b1, ..., w{L-1}, b{L-1}, out_ref).

    All tensors use the transposed (features, batch_tile) layout; weights are
    pre-oriented (and pre-cast) in the wrapper so the kernel needs no
    in-kernel transposes.  The whole batch tile stays in VMEM across layers.
    """

    def kernel(x_ref, *refs):
        out_ref = refs[-1]
        wb = refs[:-1]

        x = x_ref[...].astype(jnp.float32)                 # (input_dim, tile_n)

        # ---- layer 0: (width, input_dim) x (input_dim, tile_n) ----
        w0 = wb[0][...].astype(jnp.float32)                # (width, input_dim)
        b0 = wb[1][...].astype(jnp.float32)                # (width, 1)
        if use_vpu_first:
            # K = input_dim is tiny: VPU broadcast FMAs beat a >95%-padded MXU matmul.
            h = w0[:, 0:1] * x[0:1, :]
            for k in range(1, input_dim):
                h = h + w0[:, k:k + 1] * x[k:k + 1, :]
            h = h + b0
        else:
            h = jnp.dot(w0, x, preferred_element_type=jnp.float32) + b0
        h = _activation(h, act, act_dtype)

        # ---- hidden (width, width) layers: MXU ----
        for i in range(1, n_linear - 1):
            w = wb[2 * i][...]                              # (width, width) = W_i^T
            b = wb[2 * i + 1][...].astype(jnp.float32)      # (width, 1)
            h = jnp.dot(w.astype(mm_dtype), h.astype(mm_dtype),
                        preferred_element_type=jnp.float32) + b
            h = _activation(h, act, act_dtype)
        # TODO(synk): if a bundle dump shows layer-i sin serializing against the
        # layer-(i+1) matmul, chunk the lane dim here so EUP and MXU overlap.

        # ---- final layer (no activation) ----
        wl = wb[2 * (n_linear - 1)][...].astype(jnp.float32)
        bl = wb[2 * (n_linear - 1) + 1][...].astype(jnp.float32)  # (out_dim, 1)
        hf = h.astype(jnp.float32)
        if use_reduce_last:
            # out_dim == 1: multiply + sublane reduce instead of an N=1 MXU matmul.
            out = jnp.sum(wl * hf, axis=0, keepdims=True) + bl     # wl: (width, 1)
        else:
            out = jnp.dot(wl, hf, preferred_element_type=jnp.float32) + bl
        out_ref[...] = out.astype(out_ref.dtype)

    return kernel


def _round_up(v, m):
    return ((v + m - 1) // m) * m


def _round_down(v, m):
    return (v // m) * m


def _pad8(d):
    return max(8, _round_up(d, 8))


def _hw_info():
    """Best-effort TPU-generation / VMEM query with safe fallbacks."""
    kind = ""
    try:
        kind = jax.devices()[0].device_kind.lower()
    except Exception:
        pass
    is_v7 = "v7" in kind
    bf16_units = is_v7 or ("v6" in kind)          # v5e has no bf16 VPU/EUP path
    try:
        vmem_cap = int(pltpu.get_tpu_info().vmem_capacity_bytes)
    except Exception:
        vmem_cap = (64 << 20) if is_v7 else (128 << 20)
    return is_v7, bf16_units, vmem_cap


def _per_lane_bytes(input_dim, width, out_dim):
    # f32 worst case: double-buffered x/out blocks + ~3 live (width, tile_n)
    # activation/accumulator slabs.
    return 4 * (2 * _pad8(input_dim) + 2 * _pad8(out_dim) + 3 * _pad8(width))


def _pick_tile(n, input_dim, width, out_dim, weight_vmem_bytes, vmem_budget,
               prefer_two_tiles, max_tile=16384):
    """Largest lane-dense (multiple of 128) tile that fits the VMEM budget;
    on v7x also keep grid >= 2 so both TensorCores get work."""
    per_lane = _per_lane_bytes(input_dim, width, out_dim)
    budget_left = max(vmem_budget - weight_vmem_bytes, per_lane * 128)
    t_budget = max(128, _round_down(budget_left // per_lane, 128))
    t = min(max_tile, _round_up(n, 128), t_budget)
    if prefer_two_tiles and n > 128:
        t = min(t, max(128, _round_down(n - 1, 128)))   # ensures cdiv(n, t) >= 2
    return max(128, t)


def pinn_forward(x, params, *, act="wavelet", tile_n=None, fast_math=False):
    """PINN MLP forward pass with a single pallas_call.

    x:         (N, input_dim) float32
    params:    list of (W, b) with W shaped (in, out), b shaped (out,)
    fast_math: on v6e/v7x, run the activation (and width>=128 matmuls) in bf16.
    returns:   (N, output_dim) float32
    """
    N, input_dim = x.shape
    act = act.lower()
    n_linear = len(params)
    width = params[0][0].shape[1]
    out_dim = params[-1][0].shape[1]

    is_v7, bf16_units, vmem_cap = _hw_info()
    use_bf16 = bool(fast_math and bf16_units)
    act_dtype = jnp.bfloat16 if use_bf16 else jnp.float32
    mm_dtype = jnp.bfloat16 if (use_bf16 and width >= 128) else jnp.float32

    use_vpu_first = input_dim <= 8
    use_reduce_last = out_dim == 1

    # Flatten params: weights pre-oriented (and pre-cast) so the kernel does
    # no transposes and no repeated weight casts.
    flat_args = []
    for li, (w, b) in enumerate(params):
        if li == n_linear - 1 and use_reduce_last:
            w_arg = w                                   # (width, 1) -> reduce path
        else:
            w_arg = w.T                                 # (out, in) -> h_new = W^T @ h
            if 0 < li < n_linear - 1 and mm_dtype == jnp.bfloat16:
                w_arg = w_arg.astype(jnp.bfloat16)      # MXU operand cast once, host side
        b_arg = b.reshape(-1, 1)                        # (out, 1), broadcasts over lanes
        flat_args.append(w_arg)
        flat_args.append(b_arg)

    weight_bytes_once = sum(int(a.size) * a.dtype.itemsize for a in flat_args)
    weight_vmem_bytes = 2 * weight_bytes_once           # conservative (fallback double-buffer)

    vmem_budget = int(vmem_cap * 0.55)                  # leave headroom for compiler scratch
    if tile_n is None:
        tile_n = _pick_tile(N, input_dim, width, out_dim, weight_vmem_bytes,
                            vmem_budget, prefer_two_tiles=is_v7)
    assert tile_n % 128 == 0, "tile_n must be lane-dense (multiple of 128)"

    grid = (pl.cdiv(N, tile_n),)

    # No host-side pad and no post-kernel slice: the last (ragged) block is
    # handled by Pallas's clipped block DMAs; garbage lanes only ever feed
    # columns whose output write-back is skipped.
    x_t = x.T                                           # (input_dim, N)

    footprint = _per_lane_bytes(input_dim, width, out_dim) * tile_n + weight_vmem_bytes
    vmem_limit = int(min(vmem_cap * 3 // 4, max(2 * footprint, 32 << 20)))

    # Advisory cost estimate (weights counted once: constant block indices).
    dims = [input_dim] + [p[0].shape[1] for p in params]
    padded_n = grid[0] * tile_n
    flops = 2 * padded_n * sum(dims[i] * dims[i + 1] for i in range(n_linear))
    transcendentals = padded_n * width * (n_linear - 1)
    bytes_accessed = N * input_dim * 4 + N * out_dim * 4 + weight_bytes_once

    kernel = _make_pinn_kernel(n_linear, act, input_dim, use_vpu_first,
                               use_reduce_last, act_dtype, mm_dtype)
    out_spec = pl.BlockSpec((out_dim, tile_n), lambda i: (0, i))

    def _build_in_specs(single_buffer_weights):
        specs = [pl.BlockSpec((input_dim, tile_n), lambda i: (0, i))]
        for a in flat_args:
            if single_buffer_weights:
                # Constant index_map -> fetched once; Buffered(1) drops the
                # pointless second VMEM buffer and swap bookkeeping.
                specs.append(pl.BlockSpec(a.shape, lambda i: (0, 0),
                                          pipeline_mode=pl.Buffered(1)))
            else:
                specs.append(pl.BlockSpec(a.shape, lambda i: (0, 0)))
        return specs

    def _run(single_buffer_weights):
        return pl.pallas_call(
            kernel,
            out_shape=jax.ShapeDtypeStruct((out_dim, N), x.dtype),
            grid_spec=pltpu.PrefetchScalarGridSpec(
                num_scalar_prefetch=0,
                grid=grid,
                in_specs=_build_in_specs(single_buffer_weights),
                out_specs=out_spec,
            ),
            compiler_params=pltpu.CompilerParams(
                dimension_semantics=("parallel",),
                vmem_limit_bytes=vmem_limit,
            ),
            cost_estimate=pl.CostEstimate(
                flops=int(flops),
                transcendentals=int(transcendentals),
                bytes_accessed=int(bytes_accessed),
            ),
        )(x_t, *flat_args)

    try:
        out_t = _run(True)
    except Exception:
        # pl.Buffered(1) on constant blocks is a VMEM-only optimization; fall
        # back to default double-buffered specs if this build rejects it.
        out_t = _run(False)

    return out_t.T                                      # (N, out_dim)


def init_pinn_params(key, input_dim, output_dim, n_hidden, width_layer):
    """Deterministic init mimicking torch.nn.Linear defaults:
    W, b ~ U(-1/sqrt(fan_in), 1/sqrt(fan_in)). W stored as (in, out)."""
    dims = [input_dim] + [width_layer] * (n_hidden + 1) + [output_dim]
    params = []
    for i in range(len(dims) - 1):
        fan_in, fan_out = dims[i], dims[i + 1]
        key, kw, kb = jax.random.split(key, 3)
        bound = 1.0 / (fan_in ** 0.5)
        w = jax.random.uniform(kw, (fan_in, fan_out), jnp.float32, -bound, bound)
        b = jax.random.uniform(kb, (fan_out,), jnp.float32, -bound, bound)
        params.append((w, b))
    return params


def pinn_forward_ref(x, params, act="wavelet"):
    """Plain-JAX reference (uses the literal sin+cos wavelet form)."""
    h = x
    n = len(params)
    for i, (w, b) in enumerate(params):
        h = h @ w + b
        if i < n - 1:
            if act == "wavelet":
                h = jnp.sin(h) + jnp.cos(h)
            elif act == "sin":
                h = jnp.sin(h)
            else:
                h = jnp.tanh(h)
    return h


if __name__ == "__main__":
    # Small PINN config: 2 input coords (x, t), 1 output field, 2 hidden
    # blocks of width 32, wavelet activation (module default).
    input_dim, output_dim = 2, 1
    n_hidden, width_layer = 2, 32
    batch = 256

    key = jax.random.PRNGKey(0)
    key, kx = jax.random.split(key)
    x = jax.random.uniform(kx, (batch, input_dim), jnp.float32, -1.0, 1.0)
    params = init_pinn_params(key, input_dim, output_dim, n_hidden, width_layer)

    # 1) Default full-f32 path vs. reference (tight tolerance).
    out = jax.block_until_ready(pinn_forward(x, params, act="wavelet"))
    ref = pinn_forward_ref(x, params, act="wavelet")
    assert out.shape == (batch, output_dim)
    assert jnp.allclose(out, ref, atol=1e-5, rtol=1e-4), "wavelet mismatch vs reference"

    # 2) Fast-math path (bf16 activations on v6e/v7x; identical f32 on v5e).
    out_f = jax.block_until_ready(pinn_forward(x, params, act="wavelet", fast_math=True))
    assert out_f.shape == (batch, output_dim)
    assert bool(jnp.all(jnp.isfinite(out_f)))
    assert jnp.allclose(out_f, ref, atol=1e-1, rtol=1e-1), "fast-math wavelet diverged"

    # 3) Tanh branch + ragged last tile (batch not a multiple of the tile).
    key, kx2 = jax.random.split(key)
    x2 = jax.random.uniform(kx2, (200, input_dim), jnp.float32, -1.0, 1.0)
    out2 = jax.block_until_ready(pinn_forward(x2, params, act="tanh"))
    ref2 = pinn_forward_ref(x2, params, act="tanh")
    assert out2.shape == (200, output_dim)
    assert jnp.allclose(out2, ref2, atol=1e-5, rtol=1e-4), "tanh mismatch vs reference"

    print("KERNEL_OK")
</pallas_src>

<mosaic_0001>
module attributes {stable_mosaic.version = 11 : i64} {
  func.func @kernel(%arg0: i32, %arg1: memref<2x256xf32, #tpu.memory_space<vmem>>, %arg2: memref<32x2xf32, #tpu.memory_space<vmem>>, %arg3: memref<32x1xf32, #tpu.memory_space<vmem>>, %arg4: memref<32x32xf32, #tpu.memory_space<vmem>>, %arg5: memref<32x1xf32, #tpu.memory_space<vmem>>, %arg6: memref<32x32xf32, #tpu.memory_space<vmem>>, %arg7: memref<32x1xf32, #tpu.memory_space<vmem>>, %arg8: memref<32x1xf32, #tpu.memory_space<vmem>>, %arg9: memref<1x1xf32, #tpu.memory_space<vmem>>, %arg10: memref<1x256xf32, #tpu.memory_space<vmem>>) attributes {dimension_semantics = [#tpu.dimension_semantics<parallel>], iteration_bounds = array<i64: 1>, scalar_prefetch = 0 : i64, scratch_operands = 0 : i64, tpu.core_type = #tpu.core_type<tc>, window_params = [{transform_indices = @transform_0, window_bounds = array<i64: 2, 256>}, {pipeline_mode = #tpu.pipeline_mode<synchronous>, transform_indices = @transform_1, window_bounds = array<i64: 32, 2>}, {pipeline_mode = #tpu.pipeline_mode<synchronous>, transform_indices = @transform_2, window_bounds = array<i64: 32, 1>}, {pipeline_mode = #tpu.pipeline_mode<synchronous>, transform_indices = @transform_3, window_bounds = array<i64: 32, 32>}, {pipeline_mode = #tpu.pipeline_mode<synchronous>, transform_indices = @transform_4, window_bounds = array<i64: 32, 1>}, {pipeline_mode = #tpu.pipeline_mode<synchronous>, transform_indices = @transform_5, window_bounds = array<i64: 32, 32>}, {pipeline_mode = #tpu.pipeline_mode<synchronous>, transform_indices = @transform_6, window_bounds = array<i64: 32, 1>}, {pipeline_mode = #tpu.pipeline_mode<synchronous>, transform_indices = @transform_7, window_bounds = array<i64: 32, 1>}, {pipeline_mode = #tpu.pipeline_mode<synchronous>, transform_indices = @transform_8, window_bounds = array<i64: 1, 1>}, {transform_indices = @transform_9, window_bounds = array<i64: 1, 256>}]} {
    %c0 = arith.constant 0 : index
    %c0_0 = arith.constant 0 : index
    %0 = vector.load %arg1[%c0, %c0_0] : memref<2x256xf32, #tpu.memory_space<vmem>>, vector<2x256xf32>
    %c0_1 = arith.constant 0 : index
    %c0_2 = arith.constant 0 : index
    %1 = vector.load %arg2[%c0_1, %c0_2] : memref<32x2xf32, #tpu.memory_space<vmem>>, vector<32x2xf32>
    %c0_3 = arith.constant 0 : index
    %c0_4 = arith.constant 0 : index
    %2 = vector.load %arg3[%c0_3, %c0_4] : memref<32x1xf32, #tpu.memory_space<vmem>>, vector<32x1xf32>
    %3 = vector.extract_strided_slice %1 {offsets = [0, 0], sizes = [32, 1], strides = [1, 1]} : vector<32x2xf32> to vector<32x1xf32>
    %4 = vector.extract_strided_slice %0 {offsets = [0, 0], sizes = [1, 256], strides = [1, 1]} : vector<2x256xf32> to vector<1x256xf32>
    %5 = vector.broadcast %3 : vector<32x1xf32> to vector<32x256xf32>
    %6 = vector.broadcast %4 : vector<1x256xf32> to vector<32x256xf32>
    %7 = arith.mulf %5, %6 : vector<32x256xf32>
    %8 = vector.extract_strided_slice %1 {offsets = [0, 1], sizes = [32, 1], strides = [1, 1]} : vector<32x2xf32> to vector<32x1xf32>
    %9 = vector.extract_strided_slice %0 {offsets = [1, 0], sizes = [1, 256], strides = [1, 1]} : vector<2x256xf32> to vector<1x256xf32>
    %10 = vector.broadcast %8 : vector<32x1xf32> to vector<32x256xf32>
    %11 = vector.broadcast %9 : vector<1x256xf32> to vector<32x256xf32>
    %12 = arith.mulf %10, %11 : vector<32x256xf32>
    %13 = arith.addf %7, %12 : vector<32x256xf32>
    %14 = vector.broadcast %2 : vector<32x1xf32> to vector<32x256xf32>
    %15 = arith.addf %13, %14 : vector<32x256xf32>
    %cst = arith.constant 0.785398185 : f32
    %16 = vector.broadcast %cst : f32 to vector<32x256xf32>
    %17 = arith.addf %15, %16 : vector<32x256xf32>
    %18 = math.sin %17 : vector<32x256xf32>
    %cst_5 = arith.constant 1.41421354 : f32
    %19 = vector.broadcast %cst_5 : f32 to vector<32x256xf32>
    %20 = arith.mulf %19, %18 : vector<32x256xf32>
    %c0_6 = arith.constant 0 : index
    %c0_7 = arith.constant 0 : index
    %21 = vector.load %arg4[%c0_6, %c0_7] : memref<32x32xf32, #tpu.memory_space<vmem>>, vector<32x32xf32>
    %c0_8 = arith.constant 0 : index
    %c0_9 = arith.constant 0 : index
    %22 = vector.load %arg5[%c0_8, %c0_9] : memref<32x1xf32, #tpu.memory_space<vmem>>, vector<32x1xf32>
    %cst_10 = arith.constant dense<0.000000e+00> : vector<32x256xf32>
    %23 = tpu.matmul %21, %20, %cst_10 {dimension_numbers = #tpu.dot_dimension_numbers<[1], [0], [0], [1], [0, 0, 1, 1], [], []>} : vector<32x32xf32>, vector<32x256xf32>, vector<32x256xf32> -> vector<32x256xf32>
    %24 = vector.broadcast %22 : vector<32x1xf32> to vector<32x256xf32>
    %25 = arith.addf %23, %24 : vector<32x256xf32>
    %cst_11 = arith.constant 0.785398185 : f32
    %26 = vector.broadcast %cst_11 : f32 to vector<32x256xf32>
    %27 = arith.addf %25, %26 : vector<32x256xf32>
    %28 = math.sin %27 : vector<32x256xf32>
    %cst_12 = arith.constant 1.41421354 : f32
    %29 = vector.broadcast %cst_12 : f32 to vector<32x256xf32>
    %30 = arith.mulf %29, %28 : vector<32x256xf32>
    %c0_13 = arith.constant 0 : index
    %c0_14 = arith.constant 0 : index
    %31 = vector.load %arg6[%c0_13, %c0_14] : memref<32x32xf32, #tpu.memory_space<vmem>>, vector<32x32xf32>
    %c0_15 = arith.constant 0 : index
    %c0_16 = arith.constant 0 : index
    %32 = vector.load %arg7[%c0_15, %c0_16] : memref<32x1xf32, #tpu.memory_space<vmem>>, vector<32x1xf32>
    %cst_17 = arith.constant dense<0.000000e+00> : vector<32x256xf32>
    %33 = tpu.matmul %31, %30, %cst_17 {dimension_numbers = #tpu.dot_dimension_numbers<[1], [0], [0], [1], [0, 0, 1, 1], [], []>} : vector<32x32xf32>, vector<32x256xf32>, vector<32x256xf32> -> vector<32x256xf32>
    %34 = vector.broadcast %32 : vector<32x1xf32> to vector<32x256xf32>
    %35 = arith.addf %33, %34 : vector<32x256xf32>
    %cst_18 = arith.constant 0.785398185 : f32
    %36 = vector.broadcast %cst_18 : f32 to vector<32x256xf32>
    %37 = arith.addf %35, %36 : vector<32x256xf32>
    %38 = math.sin %37 : vector<32x256xf32>
    %cst_19 = arith.constant 1.41421354 : f32
    %39 = vector.broadcast %cst_19 : f32 to vector<32x256xf32>
    %40 = arith.mulf %39, %38 : vector<32x256xf32>
    %c0_20 = arith.constant 0 : index
    %c0_21 = arith.constant 0 : index
    %41 = vector.load %arg8[%c0_20, %c0_21] : memref<32x1xf32, #tpu.memory_space<vmem>>, vector<32x1xf32>
    %c0_22 = arith.constant 0 : index
    %c0_23 = arith.constant 0 : index
    %42 = vector.load %arg9[%c0_22, %c0_23] : memref<1x1xf32, #tpu.memory_space<vmem>>, vector<1x1xf32>
    %43 = vector.broadcast %41 : vector<32x1xf32> to vector<32x256xf32>
    %44 = arith.mulf %43, %40 : vector<32x256xf32>
    %cst_24 = arith.constant dense<0.000000e+00> : vector<256xf32>
    %45 = vector.multi_reduction <add>, %44, %cst_24 [0] : vector<32x256xf32> to vector<256xf32>
    %46 = vector.shape_cast %45 : vector<256xf32> to vector<1x256xf32>
    %47 = vector.broadcast %42 : vector<1x1xf32> to vector<1x256xf32>
    %48 = arith.addf %46, %47 : vector<1x256xf32>
    %c0_25 = arith.constant 0 : index
    %c0_26 = arith.constant 0 : index
    %49 = vector.load %arg10[%c0_25, %c0_26] : memref<1x256xf32, #tpu.memory_space<vmem>>, vector<1x256xf32>
    tpu.vector_store %arg10[%c0_25, %c0_26], %48 {strides = array<i32>} : memref<1x256xf32, #tpu.memory_space<vmem>>, vector<1x256xf32>,
    return
  }
  func.func @transform_0(%arg0: i32) -> (i32, i32) {
    %c0_i32 = arith.constant 0 : i32
    %c0_i32_0 = arith.constant 0 : i32
    return %c0_i32, %arg0 : i32, i32
  }
  func.func @transform_1(%arg0: i32) -> (i32, i32) {
    %c0_i32 = arith.constant 0 : i32
    %c0_i32_0 = arith.constant 0 : i32
    %c0_i32_1 = arith.constant 0 : i32
    return %c0_i32, %c0_i32_0 : i32, i32
  }
  func.func @transform_2(%arg0: i32) -> (i32, i32) {
    %c0_i32 = arith.constant 0 : i32
    %c0_i32_0 = arith.constant 0 : i32
    %c0_i32_1 = arith.constant 0 : i32
    return %c0_i32, %c0_i32_0 : i32, i32
  }
  func.func @transform_3(%arg0: i32) -> (i32, i32) {
    %c0_i32 = arith.constant 0 : i32
    %c0_i32_0 = arith.constant 0 : i32
    %c0_i32_1 = arith.constant 0 : i32
    return %c0_i32, %c0_i32_0 : i32, i32
  }
  func.func @transform_4(%arg0: i32) -> (i32, i32) {
    %c0_i32 = arith.constant 0 : i32
    %c0_i32_0 = arith.constant 0 : i32
    %c0_i32_1 = arith.constant 0 : i32
    return %c0_i32, %c0_i32_0 : i32, i32
  }
  func.func @transform_5(%arg0: i32) -> (i32, i32) {
    %c0_i32 = arith.constant 0 : i32
    %c0_i32_0 = arith.constant 0 : i32
    %c0_i32_1 = arith.constant 0 : i32
    return %c0_i32, %c0_i32_0 : i32, i32
  }
  func.func @transform_6(%arg0: i32) -> (i32, i32) {
    %c0_i32 = arith.constant 0 : i32
    %c0_i32_0 = arith.constant 0 : i32
    %c0_i32_1 = arith.constant 0 : i32
    return %c0_i32, %c0_i32_0 : i32, i32
  }
  func.func @transform_7(%arg0: i32) -> (i32, i32) {
    %c0_i32 = arith.constant 0 : i32
    %c0_i32_0 = arith.constant 0 : i32
    %c0_i32_1 = arith.constant 0 : i32
    return %c0_i32, %c0_i32_0 : i32, i32
  }
  func.func @transform_8(%arg0: i32) -> (i32, i32) {
    %c0_i32 = arith.constant 0 : i32
    %c0_i32_0 = arith.constant 0 : i32
    %c0_i32_1 = arith.constant 0 : i32
    return %c0_i32, %c0_i32_0 : i32, i32
  }
  func.func @transform_9(%arg0: i32) -> (i32, i32) {
    %c0_i32 = arith.constant 0 : i32
    %c0_i32_0 = arith.constant 0 : i32
    return %c0_i32, %arg0 : i32, i32
  }
}

module attributes {stable_mosaic.version = 11 : i64} {
  func.func @kernel(%arg0: i32, %arg1: memref<2x256xf32, #tpu.memory_space<vmem>>, %arg2: memref<32x2xf32, #tpu.memory_space<vmem>>, %arg3: memref<32x1xf32, #tpu.memory_space<vmem>>, %arg4: memref<32x32xf32, #tpu.memory_space<vmem>>, %arg5: memref<32x1xf32, #tpu.memory_space<vmem>>, %arg6: memref<32x32xf32, #tpu.memory_space<vmem>>, %arg7: memref<32x1xf32, #tpu.memory_space<vmem>>, %arg8: memref<32x1xf32, #tpu.memory_space<vmem>>, %arg9: memref<1x1xf32, #tpu.memory_space<vmem>>, %arg10: memref<1x256xf32, #tpu.memory_space<vmem>>) attributes {dimension_semantics = [#tpu.dimension_semantics<parallel>], iteration_bounds = array<i64: 1>, scalar_prefetch = 0 : i64, scratch_operands = 0 : i64, tpu.core_type = #tpu.core_type<tc>, window_params = [{transform_indices = @transform_0, window_bounds = array<i64: 2, 256>}, {pipeline_mode = #tpu.pipeline_mode<synchronous>, transform_indices = @transform_1, window_bounds = array<i64: 32, 2>}, {pipeline_mode = #tpu.pipeline_mode<synchronous>, transform_indices = @transform_2, window_bounds = array<i64: 32, 1>}, {pipeline_mode = #tpu.pipeline_mode<synchronous>, transform_indices = @transform_3, window_bounds = array<i64: 32, 32>}, {pipeline_mode = #tpu.pipeline_mode<synchronous>, transform_indices = @transform_4, window_bounds = array<i64: 32, 1>}, {pipeline_mode = #tpu.pipeline_mode<synchronous>, transform_indices = @transform_5, window_bounds = array<i64: 32, 32>}, {pipeline_mode = #tpu.pipeline_mode<synchronous>, transform_indices = @transform_6, window_bounds = array<i64: 32, 1>}, {pipeline_mode = #tpu.pipeline_mode<synchronous>, transform_indices = @transform_7, window_bounds = array<i64: 32, 1>}, {pipeline_mode = #tpu.pipeline_mode<synchronous>, transform_indices = @transform_8, window_bounds = array<i64: 1, 1>}, {transform_indices = @transform_9, window_bounds = array<i64: 1, 256>}]} {
    %c0 = arith.constant 0 : index
    %c0_0 = arith.constant 0 : index
    %0 = vector.load %arg1[%c0, %c0_0] : memref<2x256xf32, #tpu.memory_space<vmem>>, vector<2x256xf32>
    %c0_1 = arith.constant 0 : index
    %c0_2 = arith.constant 0 : index
    %1 = vector.load %arg2[%c0_1, %c0_2] : memref<32x2xf32, #tpu.memory_space<vmem>>, vector<32x2xf32>
    %c0_3 = arith.constant 0 : index
    %c0_4 = arith.constant 0 : index
    %2 = vector.load %arg3[%c0_3, %c0_4] : memref<32x1xf32, #tpu.memory_space<vmem>>, vector<32x1xf32>
    %3 = vector.extract_strided_slice %1 {offsets = [0, 0], sizes = [32, 1], strides = [1, 1]} : vector<32x2xf32> to vector<32x1xf32>
    %4 = vector.extract_strided_slice %0 {offsets = [0, 0], sizes = [1, 256], strides = [1, 1]} : vector<2x256xf32> to vector<1x256xf32>
    %5 = vector.broadcast %3 : vector<32x1xf32> to vector<32x256xf32>
    %6 = vector.broadcast %4 : vector<1x256xf32> to vector<32x256xf32>
    %7 = arith.mulf %5, %6 : vector<32x256xf32>
    %8 = vector.extract_strided_slice %1 {offsets = [0, 1], sizes = [32, 1], strides = [1, 1]} : vector<32x2xf32> to vector<32x1xf32>
    %9 = vector.extract_strided_slice %0 {offsets = [1, 0], sizes = [1, 256], strides = [1, 1]} : vector<2x256xf32> to vector<1x256xf32>
    %10 = vector.broadcast %8 : vector<32x1xf32> to vector<32x256xf32>
    %11 = vector.broadcast %9 : vector<1x256xf32> to vector<32x256xf32>
    %12 = arith.mulf %10, %11 : vector<32x256xf32>
    %13 = arith.addf %7, %12 : vector<32x256xf32>
    %14 = vector.broadcast %2 : vector<32x1xf32> to vector<32x256xf32>
    %15 = arith.addf %13, %14 : vector<32x256xf32>
    %cst = arith.constant 0.785398185 : f32
    %16 = vector.broadcast %cst : f32 to vector<32x256xf32>
    %17 = arith.addf %15, %16 : vector<32x256xf32>
    %18 = math.sin %17 : vector<32x256xf32>
    %cst_5 = arith.constant 1.41421354 : f32
    %19 = vector.broadcast %cst_5 : f32 to vector<32x256xf32>
    %20 = arith.mulf %19, %18 : vector<32x256xf32>
    %c0_6 = arith.constant 0 : index
    %c0_7 = arith.constant 0 : index
    %21 = vector.load %arg4[%c0_6, %c0_7] : memref<32x32xf32, #tpu.memory_space<vmem>>, vector<32x32xf32>
    %c0_8 = arith.constant 0 : index
    %c0_9 = arith.constant 0 : index
    %22 = vector.load %arg5[%c0_8, %c0_9] : memref<32x1xf32, #tpu.memory_space<vmem>>, vector<32x1xf32>
    %cst_10 = arith.constant dense<0.000000e+00> : vector<32x256xf32>
    %23 = tpu.matmul %21, %20, %cst_10 {dimension_numbers = #tpu.dot_dimension_numbers<[1], [0], [0], [1], [0, 0, 1, 1], [], []>} : vector<32x32xf32>, vector<32x256xf32>, vector<32x256xf32> -> vector<32x256xf32>
    %24 = vector.broadcast %22 : vector<32x1xf32> to vector<32x256xf32>
    %25 = arith.addf %23, %24 : vector<32x256xf32>
    %cst_11 = arith.constant 0.785398185 : f32
    %26 = vector.broadcast %cst_11 : f32 to vector<32x256xf32>
    %27 = arith.addf %25, %26 : vector<32x256xf32>
    %28 = math.sin %27 : vector<32x256xf32>
    %cst_12 = arith.constant 1.41421354 : f32
    %29 = vector.broadcast %cst_12 : f32 to vector<32x256xf32>
    %30 = arith.mulf %29, %28 : vector<32x256xf32>
    %c0_13 = arith.constant 0 : index
    %c0_14 = arith.constant 0 : index
    %31 = vector.load %arg6[%c0_13, %c0_14] : memref<32x32xf32, #tpu.memory_space<vmem>>, vector<32x32xf32>
    %c0_15 = arith.constant 0 : index
    %c0_16 = arith.constant 0 : index
    %32 = vector.load %arg7[%c0_15, %c0_16] : memref<32x1xf32, #tpu.memory_space<vmem>>, vector<32x1xf32>
    %cst_17 = arith.constant dense<0.000000e+00> : vector<32x256xf32>
    %33 = tpu.matmul %31, %30, %cst_17 {dimension_numbers = #tpu.dot_dimension_numbers<[1], [0], [0], [1], [0, 0, 1, 1], [], []>} : vector<32x32xf32>, vector<32x256xf32>, vector<32x256xf32> -> vector<32x256xf32>
    %34 = vector.broadcast %32 : vector<32x1xf32> to vector<32x256xf32>
    %35 = arith.addf %33, %34 : vector<32x256xf32>
    %cst_18 = arith.constant 0.785398185 : f32
    %36 = vector.broadcast %cst_18 : f32 to vector<32x256xf32>
    %37 = arith.addf %35, %36 : vector<32x256xf32>
    %38 = math.sin %37 : vector<32x256xf32>
    %cst_19 = arith.constant 1.41421354 : f32
    %39 = vector.broadcast %cst_19 : f32 to vector<32x256xf32>
    %40 = arith.mulf %39, %38 : vector<32x256xf32>
    %c0_20 = arith.constant 0 : index
    %c0_21 = arith.constant 0 : index
    %41 = vector.load %arg8[%c0_20, %c0_21] : memref<32x1xf32, #tpu.memory_space<vmem>>, vector<32x1xf32>
    %c0_22 = arith.constant 0 : index
    %c0_23 = arith.constant 0 : index
    %42 = vector.load %arg9[%c0_22, %c0_23] : memref<1x1xf32, #tpu.memory_space<vmem>>, vector<1x1xf32>
    %43 = vector.broadcast %41 : vector<32x1xf32> to vector<32x256xf32>
    %44 = arith.mulf %43, %40 : vector<32x256xf32>
    %cst_24 = arith.constant dense<0.000000e+00> : vector<256xf32>
    %45 = vector.multi_reduction <add>, %44, %cst_24 [0] : vector<32x256xf32> to vector<256xf32>
    %46 = vector.shape_cast %45 : vector<256xf32> to vector<1x256xf32>
    %47 = vector.broadcast %42 : vector<1x1xf32> to vector<1x256xf32>
    %48 = arith.addf %46, %47 : vector<1x256xf32>
    %c0_25 = arith.constant 0 : index
    %c0_26 = arith.constant 0 : index
    %49 = vector.load %arg10[%c0_25, %c0_26] : memref<1x256xf32, #tpu.memory_space<vmem>>, vector<1x256xf32>
    tpu.vector_store %arg10[%c0_25, %c0_26], %48 {strides = array<i32>} : memref<1x256xf32, #tpu.memory_space<vmem>>, vector<1x256xf32>,
    return
  }
  func.func @transform_0(%arg0: i32) -> (i32, i32) {
    %c0_i32 = arith.constant 0 : i32
    %c0_i32_0 = arith.constant 0 : i32
    return %c0_i32, %arg0 : i32, i32
  }
  func.func @transform_1(%arg0: i32) -> (i32, i32) {
    %c0_i32 = arith.constant 0 : i32
    %c0_i32_0 = arith.constant 0 : i32
    %c0_i32_1 = arith.constant 0 : i32
    return %c0_i32, %c0_i32_0 : i32, i32
  }
  func.func @transform_2(%arg0: i32) -> (i32, i32) {
    %c0_i32 = arith.constant 0 : i32
    %c0_i32_0 = arith.constant 0 : i32
    %c0_i32_1 = arith.constant 0 : i32
    return %c0_i32, %c0_i32_0 : i32, i32
  }
  func.func @transform_3(%arg0: i32) -> (i32, i32) {
    %c0_i32 = arith.constant 0 : i32
    %c0_i32_0 = arith.constant 0 : i32
    %c0_i32_1 = arith.constant 0 : i32
    return %c0_i32, %c0_i32_0 : i32, i32
  }
  func.func @transform_4(%arg0: i32) -> (i32, i32) {
    %c0_i32 = arith.constant 0 : i32
    %c0_i32_0 = arith.constant 0 : i32
    %c0_i32_1 = arith.constant 0 : i32
    return %c0_i32, %c0_i32_0 : i32, i32
  }
  func.func @transform_5(%arg0: i32) -> (i32, i32) {
    %c0_i32 = arith.constant 0 : i32
    %c0_i32_0 = arith.constant 0 : i32
    %c0_i32_1 = arith.constant 0 : i32
    return %c0_i32, %c0_i32_0 : i32, i32
  }
  func.func @transform_6(%arg0: i32) -> (i32, i32) {
    %c0_i32 = arith.constant 0 : i32
    %c0_i32_0 = arith.constant 0 : i32
    %c0_i32_1 = arith.constant 0 : i32
    return %c0_i32, %c0_i32_0 : i32, i32
  }
  func.func @transform_7(%arg0: i32) -> (i32, i32) {
    %c0_i32 = arith.constant 0 : i32
    %c0_i32_0 = arith.constant 0 : i32
    %c0_i32_1 = arith.constant 0 : i32
    return %c0_i32, %c0_i32_0 : i32, i32
  }
  func.func @transform_8(%arg0: i32) -> (i32, i32) {
    %c0_i32 = arith.constant 0 : i32
    %c0_i32_0 = arith.constant 0 : i32
    %c0_i32_1 = arith.constant 0 : i32
    return %c0_i32, %c0_i32_0 : i32, i32
  }
  func.func @transform_9(%arg0: i32) -> (i32, i32) {
    %c0_i32 = arith.constant 0 : i32
    %c0_i32_0 = arith.constant 0 : i32
    return %c0_i32, %arg0 : i32, i32
  }
}

</mosaic_0001>

<llo_original>
// kernel: tpu_custom_call.1
$region0: #{tpu_custom_call.1}
  #allocation0 [shape = 'u32[]', space=smem, size = 0x4, offset = 0x4, fixed_abs, tag = 'smem constant byte address 0x4 - core index']
  #allocation1 [shape = 'u32[144,128]{1,0:T(1,128)}', space=vmem, size = 0x12000, scoped, tag = 'internal scratch']
  #allocation2 [shape = 'f32[1,1]{1,0:T(1,128)S(1)}', space=vmem, size = 0x200, scoped, tag = 'scoped memory for tpu_custom_call.1']
  %s0 = inlined_call_operand.vmem [shape: f32[2,256], index: 0, kind: input, shape index: {}]
  %s1 = inlined_call_operand.vmem [shape: f32[32,2], index: 1, kind: input, shape index: {}]
  %s2 = inlined_call_operand.vmem [shape: f32[32,1], index: 2, kind: input, shape index: {}]
  %s3 = inlined_call_operand.vmem [shape: f32[32,32], index: 3, kind: input, shape index: {}]
  %s4 = inlined_call_operand.vmem [shape: f32[32,1], index: 4, kind: input, shape index: {}]
  %s5 = inlined_call_operand.vmem [shape: f32[32,32], index: 5, kind: input, shape index: {}]
  %s6 = inlined_call_operand.vmem [shape: f32[32,1], index: 6, kind: input, shape index: {}]
  %s7 = inlined_call_operand.vmem [shape: f32[32,1], index: 7, kind: input, shape index: {}]
  %s8 = inlined_call_operand.<no memory space> [shape: f32[1,1], index: 8, kind: input, shape index: {}]
  %s9 = inlined_call_operand.hbm [shape: f32[1,256], index: 9, kind: output, shape index: {}]
  %s10 = sld [smem:[#allocation0]]
  $region46: #{tpu_custom_call.1} parent=0
    _
  %s12 = ssub.s32 1, %s10
  %s13 = scalar_select 0, %s12, %s10
  %v14 = vstv %s8
  %15 = vst [vmem:[#allocation2] sm:$0x1] %v14
  $region1: #{tpu_custom_call.1} parent=0
    #allocation3 [shape = 'u8[1024]{0}', space=vmem, size = 0x400, scoped, tag = 'output window, operand 0, single buffered']
    #allocation4 [shape = 's32[1]{0}', space=sflag, size = 0x4, scoped, tag = 'scoped memory for tpu_custom_call.1']
    %16 = vsyncpa [#allocation4], 0
    // Predicated region
    $region2: #{tpu_custom_call.1} parent=1 // pred_check
      _
    $region3: #{tpu_custom_call.1} parent=1 // pred_check_branch
      %18 = sbr.rel (0) target = $region5
    $region4: #{tpu_custom_call.1} parent=1 // pred_region
      _
    $region5: #{tpu_custom_call.1} parent=1 // pred_fallthru
      _
    // Predicated region
    $region6: #{tpu_custom_call.1} parent=1 // pred_check
      _
    $region7: #{tpu_custom_call.1} parent=1 // pred_check_branch
      %20 = sbr.rel (0) target = $region9
    $region8: #{tpu_custom_call.1} parent=1 // pred_region
      _
    $region9: #{tpu_custom_call.1} parent=1 // pred_fallthru
      _
    // Predicated region
    $region10: #{tpu_custom_call.1} parent=1 // pred_check
      _
    $region11: #{tpu_custom_call.1} parent=1 // pred_check_branch
      %22 = sbr.rel (0) target = $region13
    $region12: #{tpu_custom_call.1} parent=1 // pred_region
      _
    $region13: #{tpu_custom_call.1} parent=1 // pred_fallthru
      _
    // Predicated region
    $region14: #{tpu_custom_call.1} parent=1 // pred_check
      _
    $region15: #{tpu_custom_call.1} parent=1 // pred_check_branch
      %24 = sbr.rel (0) target = $region17
    $region16: #{tpu_custom_call.1} parent=1 // pred_region
      _
    $region17: #{tpu_custom_call.1} parent=1 // pred_fallthru
      _
    // Predicated region
    $region18: #{tpu_custom_call.1} parent=1 // pred_check
      _
    $region19: #{tpu_custom_call.1} parent=1 // pred_check_branch
      %26 = sbr.rel (0) target = $region21
    $region20: #{tpu_custom_call.1} parent=1 // pred_region
      _
    $region21: #{tpu_custom_call.1} parent=1 // pred_fallthru
      _
    // Predicated region
    $region22: #{tpu_custom_call.1} parent=1 // pred_check
      _
    $region23: #{tpu_custom_call.1} parent=1 // pred_check_branch
      %28 = sbr.rel (0) target = $region25
    $region24: #{tpu_custom_call.1} parent=1 // pred_region
      _
    $region25: #{tpu_custom_call.1} parent=1 // pred_fallthru
      _
    // Predicated region
    $region26: #{tpu_custom_call.1} parent=1 // pred_check
      _
    $region27: #{tpu_custom_call.1} parent=1 // pred_check_branch
      %30 = sbr.rel (0) target = $region29
    $region28: #{tpu_custom_call.1} parent=1 // pred_region
      _
    $region29: #{tpu_custom_call.1} parent=1 // pred_fallthru
      _
    // Predicated region
    $region30: #{tpu_custom_call.1} parent=1 // pred_check
      _
    $region31: #{tpu_custom_call.1} parent=1 // pred_check_branch
      %32 = sbr.rel (0) target = $region33
    $region32: #{tpu_custom_call.1} parent=1 // pred_region
      _
    $region33: #{tpu_custom_call.1} parent=1 // pred_fallthru
      _
    // Predicated region
    $region34: #{tpu_custom_call.1} parent=1 // pred_check
      _
    $region35: #{tpu_custom_call.1} parent=1 // pred_check_branch
      %34 = sbr.rel (0) target = $region37
    $region36: #{tpu_custom_call.1} parent=1 // pred_region
      _
    $region37: #{tpu_custom_call.1} parent=1 // pred_fallthru
      _
    %v35 = vld [vmem:[%s0] sm:$0xf]
    %v36 = vld [vmem:[%s1] sm:$0xff]
    %v37 = vld [vmem:[%s1 + $0x8] sm:$0xff]
    %v38 = vld [vmem:[%s1 + $0x10] sm:$0xff]
    %v39 = vld [vmem:[%s1 + $0x18] sm:$0xff]
    %v40 = vld [vmem:[%s2] sm:$0xff]
    %v41 = vld [vmem:[%s2 + $0x8] sm:$0xff]
    %v42 = vld [vmem:[%s2 + $0x10] sm:$0xff]
    %v43 = vld [vmem:[%s2 + $0x18] sm:$0xff]
    %45 = vset.pattern.permute.xlu0 0
    %46 = vperm.xlu0 %45, %v36
    %v47 = vpop.permute.xlu0 %46
    %50 = vset.pattern.permute.xlu0 0
    %51 = vperm.xlu0 %50, %v37
    %v52 = vpop.permute.xlu0 %51
    %55 = vset.pattern.permute.xlu0 0
    %56 = vperm.xlu0 %55, %v38
    %v57 = vpop.permute.xlu0 %56
    %60 = vset.pattern.permute.xlu0 0
    %61 = vperm.xlu0 %60, %v39
    %v62 = vpop.permute.xlu0 %61
    %v65 = vlaneseq
    %v66 = vshrl.u32 %v65, 7
    %v67 = vsub.s32 0, %v66
    %v68 = vrot.slane %v35, %v67
    %v69 = vlaneseq
    %v70 = vshrl.u32 %v69, 7
    %v71 = vsub.s32 2, %v70
    %v72 = vrot.slane %v35, %v71
    %v75 = vlaneseq
    %v76 = vshrl.u32 %v75, 7
    %v77 = vsub.s32 0, %v76
    %v78 = vrot.slane %v68, %v77
    %v79 = vlaneseq
    %v80 = vshrl.u32 %v79, 7
    %v81 = vsub.s32 0, %v80
    %v82 = vrot.slane %v72, %v81
    %v83 = vmul.f32 %v47, %v78
    %v84 = vmul.f32 %v47, %v82
    %v85 = vmul.f32 %v52, %v78
    %v86 = vmul.f32 %v52, %v82
    %v87 = vmul.f32 %v57, %v78
    %v88 = vmul.f32 %v57, %v82
    %v89 = vmul.f32 %v62, %v78
    %v90 = vmul.f32 %v62, %v82
    %91 = vset.pattern.permute.xlu0 1
    %92 = vperm.xlu0 %91, %v36
    %v93 = vpop.permute.xlu0 %92
    %95 = vset.pattern.permute.xlu0 1
    %96 = vperm.xlu0 %95, %v37
    %v97 = vpop.permute.xlu0 %96
    %99 = vset.pattern.permute.xlu0 1
    %100 = vperm.xlu0 %99, %v38
    %v101 = vpop.permute.xlu0 %100
    %103 = vset.pattern.permute.xlu0 1
    %104 = vperm.xlu0 %103, %v39
    %v105 = vpop.permute.xlu0 %104
    %v107 = vlaneseq
    %v108 = vshrl.u32 %v107, 7
    %v109 = vsub.s32 1, %v108
    %v110 = vrot.slane %v35, %v109
    %v111 = vlaneseq
    %v112 = vshrl.u32 %v111, 7
    %v113 = vsub.s32 3, %v112
    %v114 = vrot.slane %v35, %v113
    %v117 = vlaneseq
    %v118 = vshrl.u32 %v117, 7
    %v119 = vsub.s32 1, %v118
    %v120 = vrot.slane %v110, %v119
    %v121 = vlaneseq
    %v122 = vshrl.u32 %v121, 7
    %v123 = vsub.s32 1, %v122
    %v124 = vrot.slane %v114, %v123
    %v125 = vmul.f32 %v93, %v120
    %v126 = vmul.f32 %v93, %v124
    %v127 = vmul.f32 %v97, %v120
    %v128 = vmul.f32 %v97, %v124
    %v129 = vmul.f32 %v101, %v120
    %v130 = vmul.f32 %v101, %v124
    %v131 = vmul.f32 %v105, %v120
    %v132 = vmul.f32 %v105, %v124
    %v133 = vadd.f32 %v83, %v125
    %v134 = vadd.f32 %v84, %v126
    %v135 = vadd.f32 %v85, %v127
    %v136 = vadd.f32 %v86, %v128
    %v137 = vadd.f32 %v87, %v129
    %v138 = vadd.f32 %v88, %v130
    %v139 = vadd.f32 %v89, %v131
    %v140 = vadd.f32 %v90, %v132
    %142 = vset.pattern.permute.xlu0 0
    %143 = vperm.xlu0 %142, %v40
    %v144 = vpop.permute.xlu0 %143
    %147 = vset.pattern.permute.xlu0 0
    %148 = vperm.xlu0 %147, %v41
    %v149 = vpop.permute.xlu0 %148
    %152 = vset.pattern.permute.xlu0 0
    %153 = vperm.xlu0 %152, %v42
    %v154 = vpop.permute.xlu0 %153
    %157 = vset.pattern.permute.xlu0 0
    %158 = vperm.xlu0 %157, %v43
    %v159 = vpop.permute.xlu0 %158
    %v161 = vadd.f32 %v133, %v144
    %v162 = vadd.f32 %v134, %v144
    %v163 = vadd.f32 %v135, %v149
    %v164 = vadd.f32 %v136, %v149
    %v165 = vadd.f32 %v137, %v154
    %v166 = vadd.f32 %v138, %v154
    %v167 = vadd.f32 %v139, %v159
    %v168 = vadd.f32 %v140, %v159
    %v169 = vadd.f32 %v161, 0.7853982
    %v170 = vadd.f32 %v162, 0.7853982
    %v171 = vadd.f32 %v163, 0.7853982
    %v172 = vadd.f32 %v164, 0.7853982
    %v173 = vadd.f32 %v165, 0.7853982
    %v174 = vadd.f32 %v166, 0.7853982
    %v175 = vadd.f32 %v167, 0.7853982
    %v176 = vadd.f32 %v168, 0.7853982
    %v177 = vand.u32 2147483647, %v169
    %vm178 = vcmp.le.f32.partialorder %v177, 0.7853982
    %vm179 = vcmp.lt.s32.totalorder %v169, 0
    %v180 = vand.u32 %v169, 2139095040
    %v181 = vshrl.u32 %v180, 23
    %v182 = vsub.s32 %v181, 127
    %v183 = vand.u32 2147483647, %v169
    %v184 = vand.u32 %v183, 8388607
    %v185 = vor.u32 %v184, 8388608
    %v186 = vsub.s32 0, %v185
    %v187 = vadd.s32 %v182, 1
    %vm188 = vcmp.gt.s32.totalorder %v187, 0
    %v189 = vsel %vm188, %v187, 0
    %v190 = vshrl.u32 %v189, 5
    %v191 = vand.u32 %v189, 31
    %v192 = vsub.s32 32, %v191
    %v193 = vshrl.u32 683565275, %v192
    %v194 = vshll.u32 683565275, %v191
    %v195 = vshrl.u32 2475754826, %v192
    %v196 = vor.u32 %v194, %v195
    %v197 = vshll.u32 2475754826, %v191
    %v198 = vshrl.u32 2131351028, %v192
    %v199 = vor.u32 %v197, %v198
    %v200 = vshll.u32 2131351028, %v191
    %v201 = vshrl.u32 2102212464, %v192
    %v202 = vor.u32 %v200, %v201
    %v203 = vshll.u32 2102212464, %v191
    %v204 = vshrl.u32 920167782, %v192
    %v205 = vor.u32 %v203, %v204
    %v206 = vshll.u32 920167782, %v191
    %v207 = vshrl.u32 1326507024, %v192
    %v208 = vor.u32 %v206, %v207
    %vm209 = vcmp.lt.s32.totalorder %v190, 1
    %vm210 = vcmp.lt.s32.totalorder %v190, 2
    %vm211 = vcmp.lt.s32.totalorder %v190, 3
    %vm212 = vcmp.lt.s32.totalorder %v190, 4
    %v213 = vsel %vm209, %v193, %v196
    %v214 = vsel %vm212, %v202, 2102212464
    %v215 = vsel %vm211, %v199, %v214
    %v216 = vsel %vm210, %v213, %v215
    %v217 = vsel %vm209, %v196, %v199
    %v218 = vsel %vm212, %v205, 920167782
    %v219 = vsel %vm211, %v202, %v218
    %v220 = vsel %vm210, %v217, %v219
    %v221 = vsel %vm209, %v199, %v202
    %v222 = vsel %vm212, %v208, 1326507024
    %v223 = vsel %vm211, %v205, %v222
    %v224 = vsel %vm210, %v221, %v223
    %v225 = vshll.u32 %v185, 8
    %v226 = vmul.u32.u64.compose %v225, %v224
    %v227 = vextract.low.u32 %v226
    %v228 = vextract.high.u32 %v226
    %v229 = vmul.u32.u64.compose %v225, %v220
    %v230 = vextract.low.u32 %v229
    %v231 = vextract.high.u32 %v229
    %v232 = vmul.u32 %v225, %v216
    %v233 = vadd.s32 %v228, %v230
    %vm234 = vc.u32 %v228, %v230
    %v235 = vadd.s32 %v231, 1
    %v236 = vsel %vm234, %v235, %v231
    %v237 = vadd.s32 %v232, %v236
    %v238 = vadd.s32 %v237, 536870912
    %v239 = vshrl.u32 %v238, 30
    %v240 = vshll.u32 %v239, 30
    %v241 = vsub.s32 %v237, %v240
    %vm242 = vcmp.lt.s32.totalorder %v241, 0
    %v243 = vsub.s32 0, %v241
    %v244 = vsel %vm242, %v243, %v241
    %v245 = vclz %v244
    %v246 = vsub.s32 %v245, 2
    %vm247 = vcmp.gt.s32.totalorder 0, %v246
    %v248 = vsel %vm247, 0, %v246
    %v249 = vsub.s32 32, %v248
    %v250 = vshll.u32 %v241, %v248
    %v251 = vshrl.u32 %v233, %v249
    %v252 = vor.u32 %v250, %v251
    %v253 = vsub.s32 4294967266, %v248
    %v254 = vadd.s32 %v253, 127
    %v255 = vshll.u32 %v254, 23
    %v256 = vor.u32 4788187, %v255
    %v257 = vand.u32 2147483647, %v256
    %v259 = vcvt.s32.f32 %v252
    %v260 = vmul.f32 %v259, %v257
    %v261 = vxor.u32 %v260, 2147483648
    %v262 = vsel %vm179, %v261, %v260
    %v263 = vsub.s32 4, %v239
    %v264 = vsel %vm179, %v263, %v239
    %v265 = vsel %vm178, %v169, %v262
    %v266 = vsel %vm178, 0, %v264
    %v267 = vcosq.f32.pop %v265
    %v268 = vsinq.f32.pop %v265
    %vm269 = vweird.f32 %v169
    %v270 = vadd.s32 %v266, 3
    %v271 = vand.u32 %v270, 3
    %vm272 = vcmp.lt.s32.totalorder %v271, 2
    %vm273 = vcmp.eq.s32.totalorder %v271, 0
    %v274 = vxor.u32 %v268, 2147483648
    %v275 = vsel %vm273, %v267, %v274
    %vm276 = vcmp.eq.s32.totalorder %v271, 2
    %v277 = vxor.u32 %v267, 2147483648
    %v278 = vsel %vm276, %v277, %v268
    %v279 = vsel %vm272, %v275, %v278
    %v280 = vsel %vm269, nan, %v279
    %v281 = vand.u32 2147483647, %v170
    %vm282 = vcmp.le.f32.partialorder %v281, 0.7853982
    %vm283 = vcmp.lt.s32.totalorder %v170, 0
    %v284 = vand.u32 %v170, 2139095040
    %v285 = vshrl.u32 %v284, 23
    %v286 = vsub.s32 %v285, 127
    %v287 = vand.u32 2147483647, %v170
    %v288 = vand.u32 %v287, 8388607
    %v289 = vor.u32 %v288, 8388608
    %v290 = vsub.s32 0, %v289
    %v291 = vadd.s32 %v286, 1
    %vm292 = vcmp.gt.s32.totalorder %v291, 0
    %v293 = vsel %vm292, %v291, 0
    %v294 = vshrl.u32 %v293, 5
    %v295 = vand.u32 %v293, 31
    %v296 = vsub.s32 32, %v295
    %v297 = vshrl.u32 683565275, %v296
    %v298 = vshll.u32 683565275, %v295
    %v299 = vshrl.u32 2475754826, %v296
    %v300 = vor.u32 %v298, %v299
    %v301 = vshll.u32 2475754826, %v295
    %v302 = vshrl.u32 2131351028, %v296
    %v303 = vor.u32 %v301, %v302
    %v304 = vshll.u32 2131351028, %v295
    %v305 = vshrl.u32 2102212464, %v296
    %v306 = vor.u32 %v304, %v305
    %v307 = vshll.u32 2102212464, %v295
    %v308 = vshrl.u32 920167782, %v296
    %v309 = vor.u32 %v307, %v308
    %v310 = vshll.u32 920167782, %v295
    %v311 = vshrl.u32 1326507024, %v296
    %v312 = vor.u32 %v310, %v311
    %vm313 = vcmp.lt.s32.totalorder %v294, 1
    %vm314 = vcmp.lt.s32.totalorder %v294, 2
    %vm315 = vcmp.lt.s32.totalorder %v294, 3
    %vm316 = vcmp.lt.s32.totalorder %v294, 4
    %v317 = vsel %vm313, %v297, %v300
    %v318 = vsel %vm316, %v306, 2102212464
    %v319 = vsel %vm315, %v303, %v318
    %v320 = vsel %vm314, %v317, %v319
    %v321 = vsel %vm313, %v300, %v303
    %v322 = vsel %vm316, %v309, 920167782
    %v323 = vsel %vm315, %v306, %v322
    %v324 = vsel %vm314, %v321, %v323
    %v325 = vsel %vm313, %v303, %v306
    %v326 = vsel %vm316, %v312, 1326507024
    %v327 = vsel %vm315, %v309, %v326
    %v328 = vsel %vm314, %v325, %v327
    %v329 = vshll.u32 %v289, 8
    %v330 = vmul.u32.u64.compose %v329, %v328
    %v331 = vextract.low.u32 %v330
    %v332 = vextract.high.u32 %v330
    %v333 = vmul.u32.u64.compose %v329, %v324
    %v334 = vextract.low.u32 %v333
    %v335 = vextract.high.u32 %v333
    %v336 = vmul.u32 %v329, %v320
    %v337 = vadd.s32 %v332, %v334
    %vm338 = vc.u32 %v332, %v334
    %v339 = vadd.s32 %v335, 1
    %v340 = vsel %vm338, %v339, %v335
    %v341 = vadd.s32 %v336, %v340
    %v342 = vadd.s32 %v341, 536870912
    %v343 = vshrl.u32 %v342, 30
    %v344 = vshll.u32 %v343, 30
    %v345 = vsub.s32 %v341, %v344
    %vm346 = vcmp.lt.s32.totalorder %v345, 0
    %v347 = vsub.s32 0, %v345
    %v348 = vsel %vm346, %v347, %v345
    %v349 = vclz %v348
    %v350 = vsub.s32 %v349, 2
    %vm351 = vcmp.gt.s32.totalorder 0, %v350
    %v352 = vsel %vm351, 0, %v350
    %v353 = vsub.s32 32, %v352
    %v354 = vshll.u32 %v345, %v352
    %v355 = vshrl.u32 %v337, %v353
    %v356 = vor.u32 %v354, %v355
    %v357 = vsub.s32 4294967266, %v352
    %v358 = vadd.s32 %v357, 127
    %v359 = vshll.u32 %v358, 23
    %v360 = vor.u32 4788187, %v359
    %v361 = vand.u32 2147483647, %v360
    %v363 = vcvt.s32.f32 %v356
    %v364 = vmul.f32 %v363, %v361
    %v365 = vxor.u32 %v364, 2147483648
    %v366 = vsel %vm283, %v365, %v364
    %v367 = vsub.s32 4, %v343
    %v368 = vsel %vm283, %v367, %v343
    %v369 = vsel %vm282, %v170, %v366
    %v370 = vsel %vm282, 0, %v368
    %v371 = vcosq.f32.pop %v369
    %v372 = vsinq.f32.pop %v369
    %vm373 = vweird.f32 %v170
    %v374 = vadd.s32 %v370, 3
    %v375 = vand.u32 %v374, 3
    %vm376 = vcmp.lt.s32.totalorder %v375, 2
    %vm377 = vcmp.eq.s32.totalorder %v375, 0
    %v378 = vxor.u32 %v372, 2147483648
    %v379 = vsel %vm377, %v371, %v378
    %vm380 = vcmp.eq.s32.totalorder %v375, 2
    %v381 = vxor.u32 %v371, 2147483648
    %v382 = vsel %vm380, %v381, %v372
    %v383 = vsel %vm376, %v379, %v382
    %v384 = vsel %vm373, nan, %v383
    %v385 = vand.u32 2147483647, %v171
    %vm386 = vcmp.le.f32.partialorder %v385, 0.7853982
    %vm387 = vcmp.lt.s32.totalorder %v171, 0
    %v388 = vand.u32 %v171, 2139095040
    %v389 = vshrl.u32 %v388, 23
    %v390 = vsub.s32 %v389, 127
    %v391 = vand.u32 2147483647, %v171
    %v392 = vand.u32 %v391, 8388607
    %v393 = vor.u32 %v392, 8388608
    %v394 = vsub.s32 0, %v393
    %v395 = vadd.s32 %v390, 1
    %vm396 = vcmp.gt.s32.totalorder %v395, 0
    %v397 = vsel %vm396, %v395, 0
    %v398 = vshrl.u32 %v397, 5
    %v399 = vand.u32 %v397, 31
    %v400 = vsub.s32 32, %v399
    %v401 = vshrl.u32 683565275, %v400
    %v402 = vshll.u32 683565275, %v399
    %v403 = vshrl.u32 2475754826, %v400
    %v404 = vor.u32 %v402, %v403
    %v405 = vshll.u32 2475754826, %v399
    %v406 = vshrl.u32 2131351028, %v400
    %v407 = vor.u32 %v405, %v406
    %v408 = vshll.u32 2131351028, %v399
    %v409 = vshrl.u32 2102212464, %v400
    %v410 = vor.u32 %v408, %v409
    %v411 = vshll.u32 2102212464, %v399
    %v412 = vshrl.u32 920167782, %v400
    %v413 = vor.u32 %v411, %v412
    %v414 = vshll.u32 920167782, %v399
    %v415 = vshrl.u32 1326507024, %v400
    %v416 = vor.u32 %v414, %v415
    %vm417 = vcmp.lt.s32.totalorder %v398, 1
    %vm418 = vcmp.lt.s32.totalorder %v398, 2
    %vm419 = vcmp.lt.s32.totalorder %v398, 3
    %vm420 = vcmp.lt.s32.totalorder %v398, 4
    %v421 = vsel %vm417, %v401, %v404
    %v422 = vsel %vm420, %v410, 2102212464
    %v423 = vsel %vm419, %v407, %v422
    %v424 = vsel %vm418, %v421, %v423
    %v425 = vsel %vm417, %v404, %v407
    %v426 = vsel %vm420, %v413, 920167782
    %v427 = vsel %vm419, %v410, %v426
    %v428 = vsel %vm418, %v425, %v427
    %v429 = vsel %vm417, %v407, %v410
    %v430 = vsel %vm420, %v416, 1326507024
    %v431 = vsel %vm419, %v413, %v430
    %v432 = vsel %vm418, %v429, %v431
    %v433 = vshll.u32 %v393, 8
    %v434 = vmul.u32.u64.compose %v433, %v432
    %v435 = vextract.low.u32 %v434
    %v436 = vextract.high.u32 %v434
    %v437 = vmul.u32.u64.compose %v433, %v428
    %v438 = vextract.low.u32 %v437
    %v439 = vextract.high.u32 %v437
    %v440 = vmul.u32 %v433, %v424
    %v441 = vadd.s32 %v436, %v438
    %vm442 = vc.u32 %v436, %v438
    %v443 = vadd.s32 %v439, 1
    %v444 = vsel %vm442, %v443, %v439
    %v445 = vadd.s32 %v440, %v444
    %v446 = vadd.s32 %v445, 536870912
    %v447 = vshrl.u32 %v446, 30
    %v448 = vshll.u32 %v447, 30
    %v449 = vsub.s32 %v445, %v448
    %vm450 = vcmp.lt.s32.totalorder %v449, 0
    %v451 = vsub.s32 0, %v449
    %v452 = vsel %vm450, %v451, %v449
    %v453 = vclz %v452
    %v454 = vsub.s32 %v453, 2
    %vm455 = vcmp.gt.s32.totalorder 0, %v454
    %v456 = vsel %vm455, 0, %v454
    %v457 = vsub.s32 32, %v456
    %v458 = vshll.u32 %v449, %v456
    %v459 = vshrl.u32 %v441, %v457
    %v460 = vor.u32 %v458, %v459
    %v461 = vsub.s32 4294967266, %v456
    %v462 = vadd.s32 %v461, 127
    %v463 = vshll.u32 %v462, 23
    %v464 = vor.u32 4788187, %v463
    %v465 = vand.u32 2147483647, %v464
    %v467 = vcvt.s32.f32 %v460
    %v468 = vmul.f32 %v467, %v465
    %v469 = vxor.u32 %v468, 2147483648
    %v470 = vsel %vm387, %v469, %v468
    %v471 = vsub.s32 4, %v447
    %v472 = vsel %vm387, %v471, %v447
    %v473 = vsel %vm386, %v171, %v470
    %v474 = vsel %vm386, 0, %v472
    %v475 = vcosq.f32.pop %v473
    %v476 = vsinq.f32.pop %v473
    %vm477 = vweird.f32 %v171
    %v478 = vadd.s32 %v474, 3
    %v479 = vand.u32 %v478, 3
    %vm480 = vcmp.lt.s32.totalorder %v479, 2
    %vm481 = vcmp.eq.s32.totalorder %v479, 0
    %v482 = vxor.u32 %v476, 2147483648
    %v483 = vsel %vm481, %v475, %v482
    %vm484 = vcmp.eq.s32.totalorder %v479, 2
    %v485 = vxor.u32 %v475, 2147483648
    %v486 = vsel %vm484, %v485, %v476
    %v487 = vsel %vm480, %v483, %v486
    %v488 = vsel %vm477, nan, %v487
    %v489 = vand.u32 2147483647, %v172
    %vm490 = vcmp.le.f32.partialorder %v489, 0.7853982
    %vm491 = vcmp.lt.s32.totalorder %v172, 0
    %v492 = vand.u32 %v172, 2139095040
    %v493 = vshrl.u32 %v492, 23
    %v494 = vsub.s32 %v493, 127
    %v495 = vand.u32 2147483647, %v172
    %v496 = vand.u32 %v495, 8388607
    %v497 = vor.u32 %v496, 8388608
    %v498 = vsub.s32 0, %v497
    %v499 = vadd.s32 %v494, 1
    %vm500 = vcmp.gt.s32.totalorder %v499, 0
    %v501 = vsel %vm500, %v499, 0
    %v502 = vshrl.u32 %v501, 5
    %v503 = vand.u32 %v501, 31
    %v504 = vsub.s32 32, %v503
    %v505 = vshrl.u32 683565275, %v504
    %v506 = vshll.u32 683565275, %v503
    %v507 = vshrl.u32 2475754826, %v504
    %v508 = vor.u32 %v506, %v507
    %v509 = vshll.u32 2475754826, %v503
    %v510 = vshrl.u32 2131351028, %v504
    %v511 = vor.u32 %v509, %v510
    %v512 = vshll.u32 2131351028, %v503
    %v513 = vshrl.u32 2102212464, %v504
    %v514 = vor.u32 %v512, %v513
    %v515 = vshll.u32 2102212464, %v503
    %v516 = vshrl.u32 920167782, %v504
    %v517 = vor.u32 %v515, %v516
    %v518 = vshll.u32 920167782, %v503
    %v519 = vshrl.u32 1326507024, %v504
    %v520 = vor.u32 %v518, %v519
    %vm521 = vcmp.lt.s32.totalorder %v502, 1
    %vm522 = vcmp.lt.s32.totalorder %v502, 2
    %vm523 = vcmp.lt.s32.totalorder %v502, 3
    %vm524 = vcmp.lt.s32.totalorder %v502, 4
    %v525 = vsel %vm521, %v505, %v508
    %v526 = vsel %vm524, %v514, 2102212464
    %v527 = vsel %vm523, %v511, %v526
    %v528 = vsel %vm522, %v525, %v527
    %v529 = vsel %vm521, %v508, %v511
    %v530 = vsel %vm524, %v517, 920167782
    %v531 = vsel %vm523, %v514, %v530
    %v532 = vsel %vm522, %v529, %v531
    %v533 = vsel %vm521, %v511, %v514
    %v534 = vsel %vm524, %v520, 1326507024
    %v535 = vsel %vm523, %v517, %v534
    %v536 = vsel %vm522, %v533, %v535
    %v537 = vshll.u32 %v497, 8
    %v538 = vmul.u32.u64.compose %v537, %v536
    %v539 = vextract.low.u32 %v538
    %v540 = vextract.high.u32 %v538
    %v541 = vmul.u32.u64.compose %v537, %v532
    %v542 = vextract.low.u32 %v541
    %v543 = vextract.high.u32 %v541
    %v544 = vmul.u32 %v537, %v528
    %v545 = vadd.s32 %v540, %v542
    %vm546 = vc.u32 %v540, %v542
    %v547 = vadd.s32 %v543, 1
    %v548 = vsel %vm546, %v547, %v543
    %v549 = vadd.s32 %v544, %v548
    %v550 = vadd.s32 %v549, 536870912
    %v551 = vshrl.u32 %v550, 30
    %v552 = vshll.u32 %v551, 30
    %v553 = vsub.s32 %v549, %v552
    %vm554 = vcmp.lt.s32.totalorder %v553, 0
    %v555 = vsub.s32 0, %v553
    %v556 = vsel %vm554, %v555, %v553
    %v557 = vclz %v556
    %v558 = vsub.s32 %v557, 2
    %vm559 = vcmp.gt.s32.totalorder 0, %v558
    %v560 = vsel %vm559, 0, %v558
    %v561 = vsub.s32 32, %v560
    %v562 = vshll.u32 %v553, %v560
    %v563 = vshrl.u32 %v545, %v561
    %v564 = vor.u32 %v562, %v563
    %v565 = vsub.s32 4294967266, %v560
    %v566 = vadd.s32 %v565, 127
    %v567 = vshll.u32 %v566, 23
    %v568 = vor.u32 4788187, %v567
    %v569 = vand.u32 2147483647, %v568
    %v571 = vcvt.s32.f32 %v564
    %v572 = vmul.f32 %v571, %v569
    %v573 = vxor.u32 %v572, 2147483648
    %v574 = vsel %vm491, %v573, %v572
    %v575 = vsub.s32 4, %v551
    %v576 = vsel %vm491, %v575, %v551
    %v577 = vsel %vm490, %v172, %v574
    %v578 = vsel %vm490, 0, %v576
    %v579 = vcosq.f32.pop %v577
    %v580 = vsinq.f32.pop %v577
    %vm581 = vweird.f32 %v172
    %v582 = vadd.s32 %v578, 3
    %v583 = vand.u32 %v582, 3
    %vm584 = vcmp.lt.s32.totalorder %v583, 2
    %vm585 = vcmp.eq.s32.totalorder %v583, 0
    %v586 = vxor.u32 %v580, 2147483648
    %v587 = vsel %vm585, %v579, %v586
    %vm588 = vcmp.eq.s32.totalorder %v583, 2
    %v589 = vxor.u32 %v579, 2147483648
    %v590 = vsel %vm588, %v589, %v580
    %v591 = vsel %vm584, %v587, %v590
    %v592 = vsel %vm581, nan, %v591
    %v593 = vand.u32 2147483647, %v173
    %vm594 = vcmp.le.f32.partialorder %v593, 0.7853982
    %vm595 = vcmp.lt.s32.totalorder %v173, 0
    %v596 = vand.u32 %v173, 2139095040
    %v597 = vshrl.u32 %v596, 23
    %v598 = vsub.s32 %v597, 127
    %v599 = vand.u32 2147483647, %v173
    %v600 = vand.u32 %v599, 8388607
    %v601 = vor.u32 %v600, 8388608
    %v602 = vsub.s32 0, %v601
    %v603 = vadd.s32 %v598, 1
    %vm604 = vcmp.gt.s32.totalorder %v603, 0
    %v605 = vsel %vm604, %v603, 0
    %v606 = vshrl.u32 %v605, 5
    %v607 = vand.u32 %v605, 31
    %v608 = vsub.s32 32, %v607
    %v609 = vshrl.u32 683565275, %v608
    %v610 = vshll.u32 683565275, %v607
    %v611 = vshrl.u32 2475754826, %v608
    %v612 = vor.u32 %v610, %v611
    %v613 = vshll.u32 2475754826, %v607
    %v614 = vshrl.u32 2131351028, %v608
    %v615 = vor.u32 %v613, %v614
    %v616 = vshll.u32 2131351028, %v607
    %v617 = vshrl.u32 2102212464, %v608
    %v618 = vor.u32 %v616, %v617
    %v619 = vshll.u32 2102212464, %v607
    %v620 = vshrl.u32 920167782, %v608
    %v621 = vor.u32 %v619, %v620
    %v622 = vshll.u32 920167782, %v607
    %v623 = vshrl.u32 1326507024, %v608
    %v624 = vor.u32 %v622, %v623
    %vm625 = vcmp.lt.s32.totalorder %v606, 1
    %vm626 = vcmp.lt.s32.totalorder %v606, 2
    %vm627 = vcmp.lt.s32.totalorder %v606, 3
    %vm628 = vcmp.lt.s32.totalorder %v606, 4
    %v629 = vsel %vm625, %v609, %v612
    %v630 = vsel %vm628, %v618, 2102212464
    %v631 = vsel %vm627, %v615, %v630
    %v632 = vsel %vm626, %v629, %v631
    %v633 = vsel %vm625, %v612, %v615
    %v634 = vsel %vm628, %v621, 920167782
    %v635 = vsel %vm627, %v618, %v634
    %v636 = vsel %vm626, %v633, %v635
    %v637 = vsel %vm625, %v615, %v618
    %v638 = vsel %vm628, %v624, 1326507024
    %v639 = vsel %vm627, %v621, %v638
    %v640 = vsel %vm626, %v637, %v639
    %v641 = vshll.u32 %v601, 8
    %v642 = vmul.u32.u64.compose %v641, %v640
    %v643 = vextract.low.u32 %v642
    %v644 = vextract.high.u32 %v642
    %v645 = vmul.u32.u64.compose %v641, %v636
    %v646 = vextract.low.u32 %v645
    %v647 = vextract.high.u32 %v645
    %v648 = vmul.u32 %v641, %v632
    %v649 = vadd.s32 %v644, %v646
    %vm650 = vc.u32 %v644, %v646
    %v651 = vadd.s32 %v647, 1
    %v652 = vsel %vm650, %v651, %v647
    %v653 = vadd.s32 %v648, %v652
    %v654 = vadd.s32 %v653, 536870912
    %v655 = vshrl.u32 %v654, 30
    %v656 = vshll.u32 %v655, 30
    %v657 = vsub.s32 %v653, %v656
    %vm658 = vcmp.lt.s32.totalorder %v657, 0
    %v659 = vsub.s32 0, %v657
    %v660 = vsel %vm658, %v659, %v657
    %v661 = vclz %v660
    %v662 = vsub.s32 %v661, 2
    %vm663 = vcmp.gt.s32.totalorder 0, %v662
    %v664 = vsel %vm663, 0, %v662
    %v665 = vsub.s32 32, %v664
    %v666 = vshll.u32 %v657, %v664
    %v667 = vshrl.u32 %v649, %v665
    %v668 = vor.u32 %v666, %v667
    %v669 = vsub.s32 4294967266, %v664
    %v670 = vadd.s32 %v669, 127
    %v671 = vshll.u32 %v670, 23
    %v672 = vor.u32 4788187, %v671
    %v673 = vand.u32 2147483647, %v672
    %v675 = vcvt.s32.f32 %v668
    %v676 = vmul.f32 %v675, %v673
    %v677 = vxor.u32 %v676, 2147483648
    %v678 = vsel %vm595, %v677, %v676
    %v679 = vsub.s32 4, %v655
    %v680 = vsel %vm595, %v679, %v655
    %v681 = vsel %vm594, %v173, %v678
    %v682 = vsel %vm594, 0, %v680
    %v683 = vcosq.f32.pop %v681
    %v684 = vsinq.f32.pop %v681
    %vm685 = vweird.f32 %v173
    %v686 = vadd.s32 %v682, 3
    %v687 = vand.u32 %v686, 3
    %vm688 = vcmp.lt.s32.totalorder %v687, 2
    %vm689 = vcmp.eq.s32.totalorder %v687, 0
    %v690 = vxor.u32 %v684, 2147483648
    %v691 = vsel %vm689, %v683, %v690
    %vm692 = vcmp.eq.s32.totalorder %v687, 2
    %v693 = vxor.u32 %v683, 2147483648
    %v694 = vsel %vm692, %v693, %v684
    %v695 = vsel %vm688, %v691, %v694
    %v696 = vsel %vm685, nan, %v695
    %v697 = vand.u32 2147483647, %v174
    %vm698 = vcmp.le.f32.partialorder %v697, 0.7853982
    %vm699 = vcmp.lt.s32.totalorder %v174, 0
    %v700 = vand.u32 %v174, 2139095040
    %v701 = vshrl.u32 %v700, 23
    %v702 = vsub.s32 %v701, 127
    %v703 = vand.u32 2147483647, %v174
    %v704 = vand.u32 %v703, 8388607
    %v705 = vor.u32 %v704, 8388608
    %v706 = vsub.s32 0, %v705
    %v707 = vadd.s32 %v702, 1
    %vm708 = vcmp.gt.s32.totalorder %v707, 0
    %v709 = vsel %vm708, %v707, 0
    %v710 = vshrl.u32 %v709, 5
    %v711 = vand.u32 %v709, 31
    %v712 = vsub.s32 32, %v711
    %v713 = vshrl.u32 683565275, %v712
    %v714 = vshll.u32 683565275, %v711
    %v715 = vshrl.u32 2475754826, %v712
    %v716 = vor.u32 %v714, %v715
    %v717 = vshll.u32 2475754826, %v711
    %v718 = vshrl.u32 2131351028, %v712
    %v719 = vor.u32 %v717, %v718
    %v720 = vshll.u32 2131351028, %v711
    %v721 = vshrl.u32 2102212464, %v712
    %v722 = vor.u32 %v720, %v721
    %v723 = vshll.u32 2102212464, %v711
    %v724 = vshrl.u32 920167782, %v712
    %v725 = vor.u32 %v723, %v724
    %v726 = vshll.u32 920167782, %v711
    %v727 = vshrl.u32 1326507024, %v712
    %v728 = vor.u32 %v726, %v727
    %vm729 = vcmp.lt.s32.totalorder %v710, 1
    %vm730 = vcmp.lt.s32.totalorder %v710, 2
    %vm731 = vcmp.lt.s32.totalorder %v710, 3
    %vm732 = vcmp.lt.s32.totalorder %v710, 4
    %v733 = vsel %vm729, %v713, %v716
    %v734 = vsel %vm732, %v722, 2102212464
    %v735 = vsel %vm731, %v719, %v734
    %v736 = vsel %vm730, %v733, %v735
    %v737 = vsel %vm729, %v716, %v719
    %v738 = vsel %vm732, %v725, 920167782
    %v739 = vsel %vm731, %v722, %v738
    %v740 = vsel %vm730, %v737, %v739
    %v741 = vsel %vm729, %v719, %v722
    %v742 = vsel %vm732, %v728, 1326507024
    %v743 = vsel %vm731, %v725, %v742
    %v744 = vsel %vm730, %v741, %v743
    %v745 = vshll.u32 %v705, 8
    %v746 = vmul.u32.u64.compose %v745, %v744
    %v747 = vextract.low.u32 %v746
    %v748 = vextract.high.u32 %v746
    %v749 = vmul.u32.u64.compose %v745, %v740
    %v750 = vextract.low.u32 %v749
    %v751 = vextract.high.u32 %v749
    %v752 = vmul.u32 %v745, %v736
    %v753 = vadd.s32 %v748, %v750
    %vm754 = vc.u32 %v748, %v750
    %v755 = vadd.s32 %v751, 1
    %v756 = vsel %vm754, %v755, %v751
    %v757 = vadd.s32 %v752, %v756
    %v758 = vadd.s32 %v757, 536870912
    %v759 = vshrl.u32 %v758, 30
    %v760 = vshll.u32 %v759, 30
    %v761 = vsub.s32 %v757, %v760
    %vm762 = vcmp.lt.s32.totalorder %v761, 0
    %v763 = vsub.s32 0, %v761
    %v764 = vsel %vm762, %v763, %v761
    %v765 = vclz %v764
    %v766 = vsub.s32 %v765, 2
    %vm767 = vcmp.gt.s32.totalorder 0, %v766
    %v768 = vsel %vm767, 0, %v766
    %v769 = vsub.s32 32, %v768
    %v770 = vshll.u32 %v761, %v768
    %v771 = vshrl.u32 %v753, %v769
    %v772 = vor.u32 %v770, %v771
    %v773 = vsub.s32 4294967266, %v768
    %v774 = vadd.s32 %v773, 127
    %v775 = vshll.u32 %v774, 23
    %v776 = vor.u32 4788187, %v775
    %v777 = vand.u32 2147483647, %v776
    %v779 = vcvt.s32.f32 %v772
    %v780 = vmul.f32 %v779, %v777
    %v781 = vxor.u32 %v780, 2147483648
    %v782 = vsel %vm699, %v781, %v780
    %v783 = vsub.s32 4, %v759
    %v784 = vsel %vm699, %v783, %v759
    %v785 = vsel %vm698, %v174, %v782
    %v786 = vsel %vm698, 0, %v784
    %v787 = vcosq.f32.pop %v785
    %v788 = vsinq.f32.pop %v785
    %vm789 = vweird.f32 %v174
    %v790 = vadd.s32 %v786, 3
    %v791 = vand.u32 %v790, 3
    %vm792 = vcmp.lt.s32.totalorder %v791, 2
    %vm793 = vcmp.eq.s32.totalorder %v791, 0
    %v794 = vxor.u32 %v788, 2147483648
    %v795 = vsel %vm793, %v787, %v794
    %vm796 = vcmp.eq.s32.totalorder %v791, 2
    %v797 = vxor.u32 %v787, 2147483648
    %v798 = vsel %vm796, %v797, %v788
    %v799 = vsel %vm792, %v795, %v798
    %v800 = vsel %vm789, nan, %v799
    %v801 = vand.u32 2147483647, %v175
    %vm802 = vcmp.le.f32.partialorder %v801, 0.7853982
    %vm803 = vcmp.lt.s32.totalorder %v175, 0
    %v804 = vand.u32 %v175, 2139095040
    %v805 = vshrl.u32 %v804, 23
    %v806 = vsub.s32 %v805, 127
    %v807 = vand.u32 2147483647, %v175
    %v808 = vand.u32 %v807, 8388607
    %v809 = vor.u32 %v808, 8388608
    %v810 = vsub.s32 0, %v809
    %v811 = vadd.s32 %v806, 1
    %vm812 = vcmp.gt.s32.totalorder %v811, 0
    %v813 = vsel %vm812, %v811, 0
    %v814 = vshrl.u32 %v813, 5
    %v815 = vand.u32 %v813, 31
    %v816 = vsub.s32 32, %v815
    %v817 = vshrl.u32 683565275, %v816
    %v818 = vshll.u32 683565275, %v815
    %v819 = vshrl.u32 2475754826, %v816
    %v820 = vor.u32 %v818, %v819
    %v821 = vshll.u32 2475754826, %v815
    %v822 = vshrl.u32 2131351028, %v816
    %v823 = vor.u32 %v821, %v822
    %v824 = vshll.u32 2131351028, %v815
    %v825 = vshrl.u32 2102212464, %v816
    %v826 = vor.u32 %v824, %v825
    %v827 = vshll.u32 2102212464, %v815
    %v828 = vshrl.u32 920167782, %v816
    %v829 = vor.u32 %v827, %v828
    %v830 = vshll.u32 920167782, %v815
    %v831 = vshrl.u32 1326507024, %v816
    %v832 = vor.u32 %v830, %v831
    %vm833 = vcmp.lt.s32.totalorder %v814, 1
    %vm834 = vcmp.lt.s32.totalorder %v814, 2
    %vm835 = vcmp.lt.s32.totalorder %v814, 3
    %vm836 = vcmp.lt.s32.totalorder %v814, 4
    %v837 = vsel %vm833, %v817, %v820
    %v838 = vsel %vm836, %v826, 2102212464
    %v839 = vsel %vm835, %v823, %v838
    %v840 = vsel %vm834, %v837, %v839
    %v841 = vsel %vm833, %v820, %v823
    %v842 = vsel %vm836, %v829, 920167782
    %v843 = vsel %vm835, %v826, %v842
    %v844 = vsel %vm834, %v841, %v843
    %v845 = vsel %vm833, %v823, %v826
    %v846 = vsel %vm836, %v832, 1326507024
    %v847 = vsel %vm835, %v829, %v846
    %v848 = vsel %vm834, %v845, %v847
    %v849 = vshll.u32 %v809, 8
    %v850 = vmul.u32.u64.compose %v849, %v848
    %v851 = vextract.low.u32 %v850
    %v852 = vextract.high.u32 %v850
    %v853 = vmul.u32.u64.compose %v849, %v844
    %v854 = vextract.low.u32 %v853
    %v855 = vextract.high.u32 %v853
    %v856 = vmul.u32 %v849, %v840
    %v857 = vadd.s32 %v852, %v854
    %vm858 = vc.u32 %v852, %v854
    %v859 = vadd.s32 %v855, 1
    %v860 = vsel %vm858, %v859, %v855
    %v861 = vadd.s32 %v856, %v860
    %v862 = vadd.s32 %v861, 536870912
    %v863 = vshrl.u32 %v862, 30
    %v864 = vshll.u32 %v863, 30
    %v865 = vsub.s32 %v861, %v864
    %vm866 = vcmp.lt.s32.totalorder %v865, 0
    %v867 = vsub.s32 0, %v865
    %v868 = vsel %vm866, %v867, %v865
    %v869 = vclz %v868
    %v870 = vsub.s32 %v869, 2
    %vm871 = vcmp.gt.s32.totalorder 0, %v870
    %v872 = vsel %vm871, 0, %v870
    %v873 = vsub.s32 32, %v872
    %v874 = vshll.u32 %v865, %v872
    %v875 = vshrl.u32 %v857, %v873
    %v876 = vor.u32 %v874, %v875
    %v877 = vsub.s32 4294967266, %v872
    %v878 = vadd.s32 %v877, 127
    %v879 = vshll.u32 %v878, 23
    %v880 = vor.u32 4788187, %v879
    %v881 = vand.u32 2147483647, %v880
    %v883 = vcvt.s32.f32 %v876
    %v884 = vmul.f32 %v883, %v881
    %v885 = vxor.u32 %v884, 2147483648
    %v886 = vsel %vm803, %v885, %v884
    %v887 = vsub.s32 4, %v863
    %v888 = vsel %vm803, %v887, %v863
    %v889 = vsel %vm802, %v175, %v886
    %v890 = vsel %vm802, 0, %v888
    %v891 = vcosq.f32.pop %v889
    %v892 = vsinq.f32.pop %v889
    %vm893 = vweird.f32 %v175
    %v894 = vadd.s32 %v890, 3
    %v895 = vand.u32 %v894, 3
    %vm896 = vcmp.lt.s32.totalorder %v895, 2
    %vm897 = vcmp.eq.s32.totalorder %v895, 0
    %v898 = vxor.u32 %v892, 2147483648
    %v899 = vsel %vm897, %v891, %v898
    %vm900 = vcmp.eq.s32.totalorder %v895, 2
    %v901 = vxor.u32 %v891, 2147483648
    %v902 = vsel %vm900, %v901, %v892
    %v903 = vsel %vm896, %v899, %v902
    %v904 = vsel %vm893, nan, %v903
    %v905 = vand.u32 2147483647, %v176
    %vm906 = vcmp.le.f32.partialorder %v905, 0.7853982
    %vm907 = vcmp.lt.s32.totalorder %v176, 0
    %v908 = vand.u32 %v176, 2139095040
    %v909 = vshrl.u32 %v908, 23
    %v910 = vsub.s32 %v909, 127
    %v911 = vand.u32 2147483647, %v176
    %v912 = vand.u32 %v911, 8388607
    %v913 = vor.u32 %v912, 8388608
    %v914 = vsub.s32 0, %v913
    %v915 = vadd.s32 %v910, 1
    %vm916 = vcmp.gt.s32.totalorder %v915, 0
    %v917 = vsel %vm916, %v915, 0
    %v918 = vshrl.u32 %v917, 5
    %v919 = vand.u32 %v917, 31
    %v920 = vsub.s32 32, %v919
    %v921 = vshrl.u32 683565275, %v920
    %v922 = vshll.u32 683565275, %v919
    %v923 = vshrl.u32 2475754826, %v920
    %v924 = vor.u32 %v922, %v923
    %v925 = vshll.u32 2475754826, %v919
    %v926 = vshrl.u32 2131351028, %v920
    %v927 = vor.u32 %v925, %v926
    %v928 = vshll.u32 2131351028, %v919
    %v929 = vshrl.u32 2102212464, %v920
    %v930 = vor.u32 %v928, %v929
    %v931 = vshll.u32 2102212464, %v919
    %v932 = vshrl.u32 920167782, %v920
    %v933 = vor.u32 %v931, %v932
    %v934 = vshll.u32 920167782, %v919
    %v935 = vshrl.u32 1326507024, %v920
    %v936 = vor.u32 %v934, %v935
    %vm937 = vcmp.lt.s32.totalorder %v918, 1
    %vm938 = vcmp.lt.s32.totalorder %v918, 2
    %vm939 = vcmp.lt.s32.totalorder %v918, 3
    %vm940 = vcmp.lt.s32.totalorder %v918, 4
    %v941 = vsel %vm937, %v921, %v924
    %v942 = vsel %vm940, %v930, 2102212464
    %v943 = vsel %vm939, %v927, %v942
    %v944 = vsel %vm938, %v941, %v943
    %v945 = vsel %vm937, %v924, %v927
    %v946 = vsel %vm940, %v933, 920167782
    %v947 = vsel %vm939, %v930, %v946
    %v948 = vsel %vm938, %v945, %v947
    %v949 = vsel %vm937, %v927, %v930
    %v950 = vsel %vm940, %v936, 1326507024
    %v951 = vsel %vm939, %v933, %v950
    %v952 = vsel %vm938, %v949, %v951
    %v953 = vshll.u32 %v913, 8
    %v954 = vmul.u32.u64.compose %v953, %v952
    %v955 = vextract.low.u32 %v954
    %v956 = vextract.high.u32 %v954
    %v957 = vmul.u32.u64.compose %v953, %v948
    %v958 = vextract.low.u32 %v957
    %v959 = vextract.high.u32 %v957
    %v960 = vmul.u32 %v953, %v944
    %v961 = vadd.s32 %v956, %v958
    %vm962 = vc.u32 %v956, %v958
    %v963 = vadd.s32 %v959, 1
    %v964 = vsel %vm962, %v963, %v959
    %v965 = vadd.s32 %v960, %v964
    %v966 = vadd.s32 %v965, 536870912
    %v967 = vshrl.u32 %v966, 30
    %v968 = vshll.u32 %v967, 30
    %v969 = vsub.s32 %v965, %v968
    %vm970 = vcmp.lt.s32.totalorder %v969, 0
    %v971 = vsub.s32 0, %v969
    %v972 = vsel %vm970, %v971, %v969
    %v973 = vclz %v972
    %v974 = vsub.s32 %v973, 2
    %vm975 = vcmp.gt.s32.totalorder 0, %v974
    %v976 = vsel %vm975, 0, %v974
    %v977 = vsub.s32 32, %v976
    %v978 = vshll.u32 %v969, %v976
    %v979 = vshrl.u32 %v961, %v977
    %v980 = vor.u32 %v978, %v979
    %v981 = vsub.s32 4294967266, %v976
    %v982 = vadd.s32 %v981, 127
    %v983 = vshll.u32 %v982, 23
    %v984 = vor.u32 4788187, %v983
    %v985 = vand.u32 2147483647, %v984
    %v987 = vcvt.s32.f32 %v980
    %v988 = vmul.f32 %v987, %v985
    %v989 = vxor.u32 %v988, 2147483648
    %v990 = vsel %vm907, %v989, %v988
    %v991 = vsub.s32 4, %v967
    %v992 = vsel %vm907, %v991, %v967
    %v993 = vsel %vm906, %v176, %v990
    %v994 = vsel %vm906, 0, %v992
    %v995 = vcosq.f32.pop %v993
    %v996 = vsinq.f32.pop %v993
    %vm997 = vweird.f32 %v176
    %v998 = vadd.s32 %v994, 3
    %v999 = vand.u32 %v998, 3
    %vm1000 = vcmp.lt.s32.totalorder %v999, 2
    %vm1001 = vcmp.eq.s32.totalorder %v999, 0
    %v1002 = vxor.u32 %v996, 2147483648
    %v1003 = vsel %vm1001, %v995, %v1002
    %vm1004 = vcmp.eq.s32.totalorder %v999, 2
    %v1005 = vxor.u32 %v995, 2147483648
    %v1006 = vsel %vm1004, %v1005, %v996
    %v1007 = vsel %vm1000, %v1003, %v1006
    %v1008 = vsel %vm997, nan, %v1007
    %v1009 = vmul.f32 %v280, 1.4142135
    %v1010 = vmul.f32 %v384, 1.4142135
    %v1011 = vmul.f32 %v488, 1.4142135
    %v1012 = vmul.f32 %v592, 1.4142135
    %v1013 = vmul.f32 %v696, 1.4142135
    %v1014 = vmul.f32 %v800, 1.4142135
    %v1015 = vmul.f32 %v904, 1.4142135
    %v1016 = vmul.f32 %v1008, 1.4142135
    %v1017 = vld [vmem:[%s3] sm:$0xff]
    %v1018 = vld [vmem:[%s3 + $0x8] sm:$0xff]
    %v1019 = vld [vmem:[%s3 + $0x10] sm:$0xff]
    %v1020 = vld [vmem:[%s3 + $0x18] sm:$0xff]
    %v1021 = vld [vmem:[%s4] sm:$0xff]
    %v1022 = vld [vmem:[%s4 + $0x8] sm:$0xff]
    %v1023 = vld [vmem:[%s4 + $0x10] sm:$0xff]
    %v1024 = vld [vmem:[%s4 + $0x18] sm:$0xff]
    %1026 = vset.pattern.permute.xlu0 0
    %1027 = vperm.xlu0 %1026, %v1021
    %v1028 = vpop.permute.xlu0 %1027
    %1031 = vset.pattern.permute.xlu0 0
    %1032 = vperm.xlu0 %1031, %v1022
    %v1033 = vpop.permute.xlu0 %1032
    %1036 = vset.pattern.permute.xlu0 0
    %1037 = vperm.xlu0 %1036, %v1023
    %v1038 = vpop.permute.xlu0 %1037
    %1041 = vset.pattern.permute.xlu0 0
    %1042 = vperm.xlu0 %1041, %v1024
    %v1043 = vpop.permute.xlu0 %1042
    %vm1045 = vcmask 261120
    %v1047 = vsel %vm1045, %v1017, 0
    %v1050 = vsel %vm1045, %v1018, 0
    %v1053 = vsel %vm1045, %v1019, 0
    %v1056 = vsel %vm1045, %v1020, 0
    %1058 = vmatprep.subr.mxu0 0.0
    %1059 = vmatpush1.msra.mxu0 0.0
    %1060 = vmatprep.subr.mxu0 0.0
    %1061 = vmatpush1.msra.mxu0 0.0
    %1062 = vmatprep.subr.mxu0 0.0
    %1063 = vmatpush1.msra.mxu0 0.0
    %1064 = vmatprep.subr.mxu0 0.0
    %1065 = vmatpush1.msra.mxu0 0.0
    %1066 = vmatprep.subr.mxu0 0.0
    %1067 = vmatpush1.msra.mxu0 0.0
    %1068 = vmatprep.subr.mxu0 0.0
    %1069 = vmatpush1.msra.mxu0 0.0
    %1070 = vmatprep.subr.mxu0 0.0
    %1071 = vmatpush1.msra.mxu0 0.0
    %1072 = vmatprep.subr.mxu0 0.0
    %1073 = vmatpush1.msra.mxu0 0.0
    %1074 = vmatprep.subr.mxu0 0.0
    %1075 = vmatpush1.msra.mxu0 0.0
    %1076 = vmatprep.subr.mxu0 0.0
    %1077 = vmatpush1.msra.mxu0 0.0
    %1078 = vmatprep.subr.mxu0 0.0
    %1079 = vmatpush1.msra.mxu0 0.0
    %1080 = vmatprep.subr.mxu0 0.0
    %1081 = vmatpush1.msra.mxu0 0.0
    %1082 = vmatprep.subr.mxu0 %v1016
    %1083 = vmatpush1.msra.mxu0 %v1015
    %1084 = vmatprep.subr.mxu0 %v1014
    %1085 = vmatpush1.msra.mxu0 %v1013
    %1086 = vmatprep.subr.mxu0 %v1012
    %1087 = vmatpush1.msra.mxu0 %v1011
    %1088 = vmatprep.subr.mxu0 %v1010
    %1089 = vmatpush1.msra.mxu0 %v1009
    %1090 = vmatprep.subr.mxu0 0.0
    %1091 = vmatpush2.msra.mxu0 0.0
    %1092 = vmatprep.subr.mxu0 0.0
    %1093 = vmatpush2.msra.mxu0 0.0
    %1094 = vmatprep.subr.mxu0 0.0
    %1095 = vmatpush2.msra.mxu0 0.0
    %1096 = vmatprep.subr.mxu0 0.0
    %1097 = vmatpush2.msra.mxu0 0.0
    %1098 = vmatprep.subr.mxu0 0.0
    %1099 = vmatpush2.msra.mxu0 0.0
    %1100 = vmatprep.subr.mxu0 0.0
    %1101 = vmatpush2.msra.mxu0 0.0
    %1102 = vmatprep.subr.mxu0 0.0
    %1103 = vmatpush2.msra.mxu0 0.0
    %1104 = vmatprep.subr.mxu0 0.0
    %1105 = vmatpush2.msra.mxu0 0.0
    %1106 = vmatprep.subr.mxu0 0.0
    %1107 = vmatpush2.msra.mxu0 0.0
    %1108 = vmatprep.subr.mxu0 0.0
    %1109 = vmatpush2.msra.mxu0 0.0
    %1110 = vmatprep.subr.mxu0 0.0
    %1111 = vmatpush2.msra.mxu0 0.0
    %1112 = vmatprep.subr.mxu0 0.0
    %1113 = vmatpush2.msra.mxu0 0.0
    %1114 = vmatprep.subr.mxu0 0.0
    %1115 = vmatpush2.msra.mxu0 0.0
    %1116 = vmatprep.subr.mxu0 0.0
    %1117 = vmatpush2.msra.mxu0 0.0
    %1118 = vmatprep.subr.mxu0 0.0
    %1119 = vmatpush2.msra.mxu0 0.0
    %1120 = vmatprep.subr.mxu0 0.0
    %1121 = vmatpush2.msra.mxu0 0.0
    %1122 = vmatprep.mubr.f32.mxu0 0.0
    %1123 = vmatmul.mubr.f32.gmra.mxu0 %v1047
    %v1124 = vpop.f32.mrf.mxu0
    %v1125 = vadd.f32 %v1028, %v1124
    %v1126 = vpop.f32.mrf.mxu0
    %v1127 = vadd.f32 %v1028, %v1126
    %1128 = vmatprep.mubr.f32.mxu0 0.0
    %1129 = vmatmul.mubr.f32.gmra.mxu0 %v1050
    %v1130 = vpop.f32.mrf.mxu0
    %v1131 = vadd.f32 %v1033, %v1130
    %v1132 = vpop.f32.mrf.mxu0
    %v1133 = vadd.f32 %v1033, %v1132
    %1134 = vmatprep.mubr.f32.mxu0 0.0
    %1135 = vmatmul.mubr.f32.gmra.mxu0 %v1053
    %v1136 = vpop.f32.mrf.mxu0
    %v1137 = vadd.f32 %v1038, %v1136
    %v1138 = vpop.f32.mrf.mxu0
    %v1139 = vadd.f32 %v1038, %v1138
    %1140 = vmatprep.mubr.f32.mxu0 0.0
    %1141 = vmatmul.mubr.f32.gmra.mxu0 %v1056
    %v1142 = vpop.f32.mrf.mxu0
    %v1143 = vadd.f32 %v1043, %v1142
    %v1144 = vpop.f32.mrf.mxu0
    %v1145 = vadd.f32 %v1043, %v1144
    %1146 = vdwg.mxu0
    %v1147 = vadd.f32 %v1125, 0.7853982
    %v1148 = vadd.f32 %v1127, 0.7853982
    %v1149 = vadd.f32 %v1131, 0.7853982
    %v1150 = vadd.f32 %v1133, 0.7853982
    %v1151 = vadd.f32 %v1137, 0.7853982
    %v1152 = vadd.f32 %v1139, 0.7853982
    %v1153 = vadd.f32 %v1143, 0.7853982
    %v1154 = vadd.f32 %v1145, 0.7853982
    %v1155 = vand.u32 2147483647, %v1147
    %vm1156 = vcmp.le.f32.partialorder %v1155, 0.7853982
    %vm1157 = vcmp.lt.s32.totalorder %v1147, 0
    %v1158 = vand.u32 %v1147, 2139095040
    %v1159 = vshrl.u32 %v1158, 23
    %v1160 = vsub.s32 %v1159, 127
    %v1161 = vand.u32 2147483647, %v1147
    %v1162 = vand.u32 %v1161, 8388607
    %v1163 = vor.u32 %v1162, 8388608
    %v1164 = vsub.s32 0, %v1163
    %v1165 = vadd.s32 %v1160, 1
    %vm1166 = vcmp.gt.s32.totalorder %v1165, 0
    %v1167 = vsel %vm1166, %v1165, 0
    %v1168 = vshrl.u32 %v1167, 5
    %v1169 = vand.u32 %v1167, 31
    %v1170 = vsub.s32 32, %v1169
    %v1171 = vshrl.u32 683565275, %v1170
    %v1172 = vshll.u32 683565275, %v1169
    %v1173 = vshrl.u32 2475754826, %v1170
    %v1174 = vor.u32 %v1172, %v1173
    %v1175 = vshll.u32 2475754826, %v1169
    %v1176 = vshrl.u32 2131351028, %v1170
    %v1177 = vor.u32 %v1175, %v1176
    %v1178 = vshll.u32 2131351028, %v1169
    %v1179 = vshrl.u32 2102212464, %v1170
    %v1180 = vor.u32 %v1178, %v1179
    %v1181 = vshll.u32 2102212464, %v1169
    %v1182 = vshrl.u32 920167782, %v1170
    %v1183 = vor.u32 %v1181, %v1182
    %v1184 = vshll.u32 920167782, %v1169
    %v1185 = vshrl.u32 1326507024, %v1170
    %v1186 = vor.u32 %v1184, %v1185
    %vm1187 = vcmp.lt.s32.totalorder %v1168, 1
    %vm1188 = vcmp.lt.s32.totalorder %v1168, 2
    %vm1189 = vcmp.lt.s32.totalorder %v1168, 3
    %vm1190 = vcmp.lt.s32.totalorder %v1168, 4
    %v1191 = vsel %vm1187, %v1171, %v1174
    %v1192 = vsel %vm1190, %v1180, 2102212464
    %v1193 = vsel %vm1189, %v1177, %v1192
    %v1194 = vsel %vm1188, %v1191, %v1193
    %v1195 = vsel %vm1187, %v1174, %v1177
    %v1196 = vsel %vm1190, %v1183, 920167782
    %v1197 = vsel %vm1189, %v1180, %v1196
    %v1198 = vsel %vm1188, %v1195, %v1197
    %v1199 = vsel %vm1187, %v1177, %v1180
    %v1200 = vsel %vm1190, %v1186, 1326507024
    %v1201 = vsel %vm1189, %v1183, %v1200
    %v1202 = vsel %vm1188, %v1199, %v1201
    %v1203 = vshll.u32 %v1163, 8
    %v1204 = vmul.u32.u64.compose %v1203, %v1202
    %v1205 = vextract.low.u32 %v1204
    %v1206 = vextract.high.u32 %v1204
    %v1207 = vmul.u32.u64.compose %v1203, %v1198
    %v1208 = vextract.low.u32 %v1207
    %v1209 = vextract.high.u32 %v1207
    %v1210 = vmul.u32 %v1203, %v1194
    %v1211 = vadd.s32 %v1206, %v1208
    %vm1212 = vc.u32 %v1206, %v1208
    %v1213 = vadd.s32 %v1209, 1
    %v1214 = vsel %vm1212, %v1213, %v1209
    %v1215 = vadd.s32 %v1210, %v1214
    %v1216 = vadd.s32 %v1215, 536870912
    %v1217 = vshrl.u32 %v1216, 30
    %v1218 = vshll.u32 %v1217, 30
    %v1219 = vsub.s32 %v1215, %v1218
    %vm1220 = vcmp.lt.s32.totalorder %v1219, 0
    %v1221 = vsub.s32 0, %v1219
    %v1222 = vsel %vm1220, %v1221, %v1219
    %v1223 = vclz %v1222
    %v1224 = vsub.s32 %v1223, 2
    %vm1225 = vcmp.gt.s32.totalorder 0, %v1224
    %v1226 = vsel %vm1225, 0, %v1224
    %v1227 = vsub.s32 32, %v1226
    %v1228 = vshll.u32 %v1219, %v1226
    %v1229 = vshrl.u32 %v1211, %v1227
    %v1230 = vor.u32 %v1228, %v1229
    %v1231 = vsub.s32 4294967266, %v1226
    %v1232 = vadd.s32 %v1231, 127
    %v1233 = vshll.u32 %v1232, 23
    %v1234 = vor.u32 4788187, %v1233
    %v1235 = vand.u32 2147483647, %v1234
    %v1237 = vcvt.s32.f32 %v1230
    %v1238 = vmul.f32 %v1237, %v1235
    %v1239 = vxor.u32 %v1238, 2147483648
    %v1240 = vsel %vm1157, %v1239, %v1238
    %v1241 = vsub.s32 4, %v1217
    %v1242 = vsel %vm1157, %v1241, %v1217
    %v1243 = vsel %vm1156, %v1147, %v1240
    %v1244 = vsel %vm1156, 0, %v1242
    %v1245 = vcosq.f32.pop %v1243
    %v1246 = vsinq.f32.pop %v1243
    %vm1247 = vweird.f32 %v1147
    %v1248 = vadd.s32 %v1244, 3
    %v1249 = vand.u32 %v1248, 3
    %vm1250 = vcmp.lt.s32.totalorder %v1249, 2
    %vm1251 = vcmp.eq.s32.totalorder %v1249, 0
    %v1252 = vxor.u32 %v1246, 2147483648
    %v1253 = vsel %vm1251, %v1245, %v1252
    %vm1254 = vcmp.eq.s32.totalorder %v1249, 2
    %v1255 = vxor.u32 %v1245, 2147483648
    %v1256 = vsel %vm1254, %v1255, %v1246
    %v1257 = vsel %vm1250, %v1253, %v1256
    %v1258 = vsel %vm1247, nan, %v1257
    %v1259 = vand.u32 2147483647, %v1148
    %vm1260 = vcmp.le.f32.partialorder %v1259, 0.7853982
    %vm1261 = vcmp.lt.s32.totalorder %v1148, 0
    %v1262 = vand.u32 %v1148, 2139095040
    %v1263 = vshrl.u32 %v1262, 23
    %v1264 = vsub.s32 %v1263, 127
    %v1265 = vand.u32 2147483647, %v1148
    %v1266 = vand.u32 %v1265, 8388607
    %v1267 = vor.u32 %v1266, 8388608
    %v1268 = vsub.s32 0, %v1267
    %v1269 = vadd.s32 %v1264, 1
    %vm1270 = vcmp.gt.s32.totalorder %v1269, 0
    %v1271 = vsel %vm1270, %v1269, 0
    %v1272 = vshrl.u32 %v1271, 5
    %v1273 = vand.u32 %v1271, 31
    %v1274 = vsub.s32 32, %v1273
    %v1275 = vshrl.u32 683565275, %v1274
    %v1276 = vshll.u32 683565275, %v1273
    %v1277 = vshrl.u32 2475754826, %v1274
    %v1278 = vor.u32 %v1276, %v1277
    %v1279 = vshll.u32 2475754826, %v1273
    %v1280 = vshrl.u32 2131351028, %v1274
    %v1281 = vor.u32 %v1279, %v1280
    %v1282 = vshll.u32 2131351028, %v1273
    %v1283 = vshrl.u32 2102212464, %v1274
    %v1284 = vor.u32 %v1282, %v1283
    %v1285 = vshll.u32 2102212464, %v1273
    %v1286 = vshrl.u32 920167782, %v1274
    %v1287 = vor.u32 %v1285, %v1286
    %v1288 = vshll.u32 920167782, %v1273
    %v1289 = vshrl.u32 1326507024, %v1274
    %v1290 = vor.u32 %v1288, %v1289
    %vm1291 = vcmp.lt.s32.totalorder %v1272, 1
    %vm1292 = vcmp.lt.s32.totalorder %v1272, 2
    %vm1293 = vcmp.lt.s32.totalorder %v1272, 3
    %vm1294 = vcmp.lt.s32.totalorder %v1272, 4
    %v1295 = vsel %vm1291, %v1275, %v1278
    %v1296 = vsel %vm1294, %v1284, 2102212464
    %v1297 = vsel %vm1293, %v1281, %v1296
    %v1298 = vsel %vm1292, %v1295, %v1297
    %v1299 = vsel %vm1291, %v1278, %v1281
    %v1300 = vsel %vm1294, %v1287, 920167782
    %v1301 = vsel %vm1293, %v1284, %v1300
    %v1302 = vsel %vm1292, %v1299, %v1301
    %v1303 = vsel %vm1291, %v1281, %v1284
    %v1304 = vsel %vm1294, %v1290, 1326507024
    %v1305 = vsel %vm1293, %v1287, %v1304
    %v1306 = vsel %vm1292, %v1303, %v1305
    %v1307 = vshll.u32 %v1267, 8
    %v1308 = vmul.u32.u64.compose %v1307, %v1306
    %v1309 = vextract.low.u32 %v1308
    %v1310 = vextract.high.u32 %v1308
    %v1311 = vmul.u32.u64.compose %v1307, %v1302
    %v1312 = vextract.low.u32 %v1311
    %v1313 = vextract.high.u32 %v1311
    %v1314 = vmul.u32 %v1307, %v1298
    %v1315 = vadd.s32 %v1310, %v1312
    %vm1316 = vc.u32 %v1310, %v1312
    %v1317 = vadd.s32 %v1313, 1
    %v1318 = vsel %vm1316, %v1317, %v1313
    %v1319 = vadd.s32 %v1314, %v1318
    %v1320 = vadd.s32 %v1319, 536870912
    %v1321 = vshrl.u32 %v1320, 30
    %v1322 = vshll.u32 %v1321, 30
    %v1323 = vsub.s32 %v1319, %v1322
    %vm1324 = vcmp.lt.s32.totalorder %v1323, 0
    %v1325 = vsub.s32 0, %v1323
    %v1326 = vsel %vm1324, %v1325, %v1323
    %v1327 = vclz %v1326
    %v1328 = vsub.s32 %v1327, 2
    %vm1329 = vcmp.gt.s32.totalorder 0, %v1328
    %v1330 = vsel %vm1329, 0, %v1328
    %v1331 = vsub.s32 32, %v1330
    %v1332 = vshll.u32 %v1323, %v1330
    %v1333 = vshrl.u32 %v1315, %v1331
    %v1334 = vor.u32 %v1332, %v1333
    %v1335 = vsub.s32 4294967266, %v1330
    %v1336 = vadd.s32 %v1335, 127
    %v1337 = vshll.u32 %v1336, 23
    %v1338 = vor.u32 4788187, %v1337
    %v1339 = vand.u32 2147483647, %v1338
    %v1341 = vcvt.s32.f32 %v1334
    %v1342 = vmul.f32 %v1341, %v1339
    %v1343 = vxor.u32 %v1342, 2147483648
    %v1344 = vsel %vm1261, %v1343, %v1342
    %v1345 = vsub.s32 4, %v1321
    %v1346 = vsel %vm1261, %v1345, %v1321
    %v1347 = vsel %vm1260, %v1148, %v1344
    %v1348 = vsel %vm1260, 0, %v1346
    %v1349 = vcosq.f32.pop %v1347
    %v1350 = vsinq.f32.pop %v1347
    %vm1351 = vweird.f32 %v1148
    %v1352 = vadd.s32 %v1348, 3
    %v1353 = vand.u32 %v1352, 3
    %vm1354 = vcmp.lt.s32.totalorder %v1353, 2
    %vm1355 = vcmp.eq.s32.totalorder %v1353, 0
    %v1356 = vxor.u32 %v1350, 2147483648
    %v1357 = vsel %vm1355, %v1349, %v1356
    %vm1358 = vcmp.eq.s32.totalorder %v1353, 2
    %v1359 = vxor.u32 %v1349, 2147483648
    %v1360 = vsel %vm1358, %v1359, %v1350
    %v1361 = vsel %vm1354, %v1357, %v1360
    %v1362 = vsel %vm1351, nan, %v1361
    %v1363 = vand.u32 2147483647, %v1149
    %vm1364 = vcmp.le.f32.partialorder %v1363, 0.7853982
    %vm1365 = vcmp.lt.s32.totalorder %v1149, 0
    %v1366 = vand.u32 %v1149, 2139095040
    %v1367 = vshrl.u32 %v1366, 23
    %v1368 = vsub.s32 %v1367, 127
    %v1369 = vand.u32 2147483647, %v1149
    %v1370 = vand.u32 %v1369, 8388607
    %v1371 = vor.u32 %v1370, 8388608
    %v1372 = vsub.s32 0, %v1371
    %v1373 = vadd.s32 %v1368, 1
    %vm1374 = vcmp.gt.s32.totalorder %v1373, 0
    %v1375 = vsel %vm1374, %v1373, 0
    %v1376 = vshrl.u32 %v1375, 5
    %v1377 = vand.u32 %v1375, 31
    %v1378 = vsub.s32 32, %v1377
    %v1379 = vshrl.u32 683565275, %v1378
    %v1380 = vshll.u32 683565275, %v1377
    %v1381 = vshrl.u32 2475754826, %v1378
    %v1382 = vor.u32 %v1380, %v1381
    %v1383 = vshll.u32 2475754826, %v1377
    %v1384 = vshrl.u32 2131351028, %v1378
    %v1385 = vor.u32 %v1383, %v1384
    %v1386 = vshll.u32 2131351028, %v1377
    %v1387 = vshrl.u32 2102212464, %v1378
    %v1388 = vor.u32 %v1386, %v1387
    %v1389 = vshll.u32 2102212464, %v1377
    %v1390 = vshrl.u32 920167782, %v1378
    %v1391 = vor.u32 %v1389, %v1390
    %v1392 = vshll.u32 920167782, %v1377
    %v1393 = vshrl.u32 1326507024, %v1378
    %v1394 = vor.u32 %v1392, %v1393
    %vm1395 = vcmp.lt.s32.totalorder %v1376, 1
    %vm1396 = vcmp.lt.s32.totalorder %v1376, 2
    %vm1397 = vcmp.lt.s32.totalorder %v1376, 3
    %vm1398 = vcmp.lt.s32.totalorder %v1376, 4
    %v1399 = vsel %vm1395, %v1379, %v1382
    %v1400 = vsel %vm1398, %v1388, 2102212464
    %v1401 = vsel %vm1397, %v1385, %v1400
    %v1402 = vsel %vm1396, %v1399, %v1401
    %v1403 = vsel %vm1395, %v1382, %v1385
    %v1404 = vsel %vm1398, %v1391, 920167782
    %v1405 = vsel %vm1397, %v1388, %v1404
    %v1406 = vsel %vm1396, %v1403, %v1405
    %v1407 = vsel %vm1395, %v1385, %v1388
    %v1408 = vsel %vm1398, %v1394, 1326507024
    %v1409 = vsel %vm1397, %v1391, %v1408
    %v1410 = vsel %vm1396, %v1407, %v1409
    %v1411 = vshll.u32 %v1371, 8
    %v1412 = vmul.u32.u64.compose %v1411, %v1410
    %v1413 = vextract.low.u32 %v1412
    %v1414 = vextract.high.u32 %v1412
    %v1415 = vmul.u32.u64.compose %v1411, %v1406
    %v1416 = vextract.low.u32 %v1415
    %v1417 = vextract.high.u32 %v1415
    %v1418 = vmul.u32 %v1411, %v1402
    %v1419 = vadd.s32 %v1414, %v1416
    %vm1420 = vc.u32 %v1414, %v1416
    %v1421 = vadd.s32 %v1417, 1
    %v1422 = vsel %vm1420, %v1421, %v1417
    %v1423 = vadd.s32 %v1418, %v1422
    %v1424 = vadd.s32 %v1423, 536870912
    %v1425 = vshrl.u32 %v1424, 30
    %v1426 = vshll.u32 %v1425, 30
    %v1427 = vsub.s32 %v1423, %v1426
    %vm1428 = vcmp.lt.s32.totalorder %v1427, 0
    %v1429 = vsub.s32 0, %v1427
    %v1430 = vsel %vm1428, %v1429, %v1427
    %v1431 = vclz %v1430
    %v1432 = vsub.s32 %v1431, 2
    %vm1433 = vcmp.gt.s32.totalorder 0, %v1432
    %v1434 = vsel %vm1433, 0, %v1432
    %v1435 = vsub.s32 32, %v1434
    %v1436 = vshll.u32 %v1427, %v1434
    %v1437 = vshrl.u32 %v1419, %v1435
    %v1438 = vor.u32 %v1436, %v1437
    %v1439 = vsub.s32 4294967266, %v1434
    %v1440 = vadd.s32 %v1439, 127
    %v1441 = vshll.u32 %v1440, 23
    %v1442 = vor.u32 4788187, %v1441
    %v1443 = vand.u32 2147483647, %v1442
    %v1445 = vcvt.s32.f32 %v1438
    %v1446 = vmul.f32 %v1445, %v1443
    %v1447 = vxor.u32 %v1446, 2147483648
    %v1448 = vsel %vm1365, %v1447, %v1446
    %v1449 = vsub.s32 4, %v1425
    %v1450 = vsel %vm1365, %v1449, %v1425
    %v1451 = vsel %vm1364, %v1149, %v1448
    %v1452 = vsel %vm1364, 0, %v1450
    %v1453 = vcosq.f32.pop %v1451
    %v1454 = vsinq.f32.pop %v1451
    %vm1455 = vweird.f32 %v1149
    %v1456 = vadd.s32 %v1452, 3
    %v1457 = vand.u32 %v1456, 3
    %vm1458 = vcmp.lt.s32.totalorder %v1457, 2
    %vm1459 = vcmp.eq.s32.totalorder %v1457, 0
    %v1460 = vxor.u32 %v1454, 2147483648
    %v1461 = vsel %vm1459, %v1453, %v1460
    %vm1462 = vcmp.eq.s32.totalorder %v1457, 2
    %v1463 = vxor.u32 %v1453, 2147483648
    %v1464 = vsel %vm1462, %v1463, %v1454
    %v1465 = vsel %vm1458, %v1461, %v1464
    %v1466 = vsel %vm1455, nan, %v1465
    %v1467 = vand.u32 2147483647, %v1150
    %vm1468 = vcmp.le.f32.partialorder %v1467, 0.7853982
    %vm1469 = vcmp.lt.s32.totalorder %v1150, 0
    %v1470 = vand.u32 %v1150, 2139095040
    %v1471 = vshrl.u32 %v1470, 23
    %v1472 = vsub.s32 %v1471, 127
    %v1473 = vand.u32 2147483647, %v1150
    %v1474 = vand.u32 %v1473, 8388607
    %v1475 = vor.u32 %v1474, 8388608
    %v1476 = vsub.s32 0, %v1475
    %v1477 = vadd.s32 %v1472, 1
    %vm1478 = vcmp.gt.s32.totalorder %v1477, 0
    %v1479 = vsel %vm1478, %v1477, 0
    %v1480 = vshrl.u32 %v1479, 5
    %v1481 = vand.u32 %v1479, 31
    %v1482 = vsub.s32 32, %v1481
    %v1483 = vshrl.u32 683565275, %v1482
    %v1484 = vshll.u32 683565275, %v1481
    %v1485 = vshrl.u32 2475754826, %v1482
    %v1486 = vor.u32 %v1484, %v1485
    %v1487 = vshll.u32 2475754826, %v1481
    %v1488 = vshrl.u32 2131351028, %v1482
    %v1489 = vor.u32 %v1487, %v1488
    %v1490 = vshll.u32 2131351028, %v1481
    %v1491 = vshrl.u32 2102212464, %v1482
    %v1492 = vor.u32 %v1490, %v1491
    %v1493 = vshll.u32 2102212464, %v1481
    %v1494 = vshrl.u32 920167782, %v1482
    %v1495 = vor.u32 %v1493, %v1494
    %v1496 = vshll.u32 920167782, %v1481
    %v1497 = vshrl.u32 1326507024, %v1482
    %v1498 = vor.u32 %v1496, %v1497
    %vm1499 = vcmp.lt.s32.totalorder %v1480, 1
    %vm1500 = vcmp.lt.s32.totalorder %v1480, 2
    %vm1501 = vcmp.lt.s32.totalorder %v1480, 3
    %vm1502 = vcmp.lt.s32.totalorder %v1480, 4
    %v1503 = vsel %vm1499, %v1483, %v1486
    %v1504 = vsel %vm1502, %v1492, 2102212464
    %v1505 = vsel %vm1501, %v1489, %v1504
    %v1506 = vsel %vm1500, %v1503, %v1505
    %v1507 = vsel %vm1499, %v1486, %v1489
    %v1508 = vsel %vm1502, %v1495, 920167782
    %v1509 = vsel %vm1501, %v1492, %v1508
    %v1510 = vsel %vm1500, %v1507, %v1509
    %v1511 = vsel %vm1499, %v1489, %v1492
    %v1512 = vsel %vm1502, %v1498, 1326507024
    %v1513 = vsel %vm1501, %v1495, %v1512
    %v1514 = vsel %vm1500, %v1511, %v1513
    %v1515 = vshll.u32 %v1475, 8
    %v1516 = vmul.u32.u64.compose %v1515, %v1514
    %v1517 = vextract.low.u32 %v1516
    %v1518 = vextract.high.u32 %v1516
    %v1519 = vmul.u32.u64.compose %v1515, %v1510
    %v1520 = vextract.low.u32 %v1519
    %v1521 = vextract.high.u32 %v1519
    %v1522 = vmul.u32 %v1515, %v1506
    %v1523 = vadd.s32 %v1518, %v1520
    %vm1524 = vc.u32 %v1518, %v1520
    %v1525 = vadd.s32 %v1521, 1
    %v1526 = vsel %vm1524, %v1525, %v1521
    %v1527 = vadd.s32 %v1522, %v1526
    %v1528 = vadd.s32 %v1527, 536870912
    %v1529 = vshrl.u32 %v1528, 30
    %v1530 = vshll.u32 %v1529, 30
    %v1531 = vsub.s32 %v1527, %v1530
    %vm1532 = vcmp.lt.s32.totalorder %v1531, 0
    %v1533 = vsub.s32 0, %v1531
    %v1534 = vsel %vm1532, %v1533, %v1531
    %v1535 = vclz %v1534
    %v1536 = vsub.s32 %v1535, 2
    %vm1537 = vcmp.gt.s32.totalorder 0, %v1536
    %v1538 = vsel %vm1537, 0, %v1536
    %v1539 = vsub.s32 32, %v1538
    %v1540 = vshll.u32 %v1531, %v1538
    %v1541 = vshrl.u32 %v1523, %v1539
    %v1542 = vor.u32 %v1540, %v1541
    %v1543 = vsub.s32 4294967266, %v1538
    %v1544 = vadd.s32 %v1543, 127
    %v1545 = vshll.u32 %v1544, 23
    %v1546 = vor.u32 4788187, %v1545
    %v1547 = vand.u32 2147483647, %v1546
    %v1549 = vcvt.s32.f32 %v1542
    %v1550 = vmul.f32 %v1549, %v1547
    %v1551 = vxor.u32 %v1550, 2147483648
    %v1552 = vsel %vm1469, %v1551, %v1550
    %v1553 = vsub.s32 4, %v1529
    %v1554 = vsel %vm1469, %v1553, %v1529
    %v1555 = vsel %vm1468, %v1150, %v1552
    %v1556 = vsel %vm1468, 0, %v1554
    %v1557 = vcosq.f32.pop %v1555
    %v1558 = vsinq.f32.pop %v1555
    %vm1559 = vweird.f32 %v1150
    %v1560 = vadd.s32 %v1556, 3
    %v1561 = vand.u32 %v1560, 3
    %vm1562 = vcmp.lt.s32.totalorder %v1561, 2
    %vm1563 = vcmp.eq.s32.totalorder %v1561, 0
    %v1564 = vxor.u32 %v1558, 2147483648
    %v1565 = vsel %vm1563, %v1557, %v1564
    %vm1566 = vcmp.eq.s32.totalorder %v1561, 2
    %v1567 = vxor.u32 %v1557, 2147483648
    %v1568 = vsel %vm1566, %v1567, %v1558
    %v1569 = vsel %vm1562, %v1565, %v1568
    %v1570 = vsel %vm1559, nan, %v1569
    %v1571 = vand.u32 2147483647, %v1151
    %vm1572 = vcmp.le.f32.partialorder %v1571, 0.7853982
    %vm1573 = vcmp.lt.s32.totalorder %v1151, 0
    %v1574 = vand.u32 %v1151, 2139095040
    %v1575 = vshrl.u32 %v1574, 23
    %v1576 = vsub.s32 %v1575, 127
    %v1577 = vand.u32 2147483647, %v1151
    %v1578 = vand.u32 %v1577, 8388607
    %v1579 = vor.u32 %v1578, 8388608
    %v1580 = vsub.s32 0, %v1579
    %v1581 = vadd.s32 %v1576, 1
    %vm1582 = vcmp.gt.s32.totalorder %v1581, 0
    %v1583 = vsel %vm1582, %v1581, 0
    %v1584 = vshrl.u32 %v1583, 5
    %v1585 = vand.u32 %v1583, 31
    %v1586 = vsub.s32 32, %v1585
    %v1587 = vshrl.u32 683565275, %v1586
    %v1588 = vshll.u32 683565275, %v1585
    %v1589 = vshrl.u32 2475754826, %v1586
    %v1590 = vor.u32 %v1588, %v1589
    %v1591 = vshll.u32 2475754826, %v1585
    %v1592 = vshrl.u32 2131351028, %v1586
    %v1593 = vor.u32 %v1591, %v1592
    %v1594 = vshll.u32 2131351028, %v1585
    %v1595 = vshrl.u32 2102212464, %v1586
    %v1596 = vor.u32 %v1594, %v1595
    %v1597 = vshll.u32 2102212464, %v1585
    %v1598 = vshrl.u32 920167782, %v1586
    %v1599 = vor.u32 %v1597, %v1598
    %v1600 = vshll.u32 920167782, %v1585
    %v1601 = vshrl.u32 1326507024, %v1586
    %v1602 = vor.u32 %v1600, %v1601
    %vm1603 = vcmp.lt.s32.totalorder %v1584, 1
    %vm1604 = vcmp.lt.s32.totalorder %v1584, 2
    %vm1605 = vcmp.lt.s32.totalorder %v1584, 3
    %vm1606 = vcmp.lt.s32.totalorder %v1584, 4
    %v1607 = vsel %vm1603, %v1587, %v1590
    %v1608 = vsel %vm1606, %v1596, 2102212464
    %v1609 = vsel %vm1605, %v1593, %v1608
    %v1610 = vsel %vm1604, %v1607, %v1609
    %v1611 = vsel %vm1603, %v1590, %v1593
    %v1612 = vsel %vm1606, %v1599, 920167782
    %v1613 = vsel %vm1605, %v1596, %v1612
    %v1614 = vsel %vm1604, %v1611, %v1613
    %v1615 = vsel %vm1603, %v1593, %v1596
    %v1616 = vsel %vm1606, %v1602, 1326507024
    %v1617 = vsel %vm1605, %v1599, %v1616
    %v1618 = vsel %vm1604, %v1615, %v1617
    %v1619 = vshll.u32 %v1579, 8
    %v1620 = vmul.u32.u64.compose %v1619, %v1618
    %v1621 = vextract.low.u32 %v1620
    %v1622 = vextract.high.u32 %v1620
    %v1623 = vmul.u32.u64.compose %v1619, %v1614
    %v1624 = vextract.low.u32 %v1623
    %v1625 = vextract.high.u32 %v1623
    %v1626 = vmul.u32 %v1619, %v1610
    %v1627 = vadd.s32 %v1622, %v1624
    %vm1628 = vc.u32 %v1622, %v1624
    %v1629 = vadd.s32 %v1625, 1
    %v1630 = vsel %vm1628, %v1629, %v1625
    %v1631 = vadd.s32 %v1626, %v1630
    %v1632 = vadd.s32 %v1631, 536870912
    %v1633 = vshrl.u32 %v1632, 30
    %v1634 = vshll.u32 %v1633, 30
    %v1635 = vsub.s32 %v1631, %v1634
    %vm1636 = vcmp.lt.s32.totalorder %v1635, 0
    %v1637 = vsub.s32 0, %v1635
    %v1638 = vsel %vm1636, %v1637, %v1635
    %v1639 = vclz %v1638
    %v1640 = vsub.s32 %v1639, 2
    %vm1641 = vcmp.gt.s32.totalorder 0, %v1640
    %v1642 = vsel %vm1641, 0, %v1640
    %v1643 = vsub.s32 32, %v1642
    %v1644 = vshll.u32 %v1635, %v1642
    %v1645 = vshrl.u32 %v1627, %v1643
    %v1646 = vor.u32 %v1644, %v1645
    %v1647 = vsub.s32 4294967266, %v1642
    %v1648 = vadd.s32 %v1647, 127
    %v1649 = vshll.u32 %v1648, 23
    %v1650 = vor.u32 4788187, %v1649
    %v1651 = vand.u32 2147483647, %v1650
    %v1653 = vcvt.s32.f32 %v1646
    %v1654 = vmul.f32 %v1653, %v1651
    %v1655 = vxor.u32 %v1654, 2147483648
    %v1656 = vsel %vm1573, %v1655, %v1654
    %v1657 = vsub.s32 4, %v1633
    %v1658 = vsel %vm1573, %v1657, %v1633
    %v1659 = vsel %vm1572, %v1151, %v1656
    %v1660 = vsel %vm1572, 0, %v1658
    %v1661 = vcosq.f32.pop %v1659
    %v1662 = vsinq.f32.pop %v1659
    %vm1663 = vweird.f32 %v1151
    %v1664 = vadd.s32 %v1660, 3
    %v1665 = vand.u32 %v1664, 3
    %vm1666 = vcmp.lt.s32.totalorder %v1665, 2
    %vm1667 = vcmp.eq.s32.totalorder %v1665, 0
    %v1668 = vxor.u32 %v1662, 2147483648
    %v1669 = vsel %vm1667, %v1661, %v1668
    %vm1670 = vcmp.eq.s32.totalorder %v1665, 2
    %v1671 = vxor.u32 %v1661, 2147483648
    %v1672 = vsel %vm1670, %v1671, %v1662
    %v1673 = vsel %vm1666, %v1669, %v1672
    %v1674 = vsel %vm1663, nan, %v1673
    %v1675 = vand.u32 2147483647, %v1152
    %vm1676 = vcmp.le.f32.partialorder %v1675, 0.7853982
    %vm1677 = vcmp.lt.s32.totalorder %v1152, 0
    %v1678 = vand.u32 %v1152, 2139095040
    %v1679 = vshrl.u32 %v1678, 23
    %v1680 = vsub.s32 %v1679, 127
    %v1681 = vand.u32 2147483647, %v1152
    %v1682 = vand.u32 %v1681, 8388607
    %v1683 = vor.u32 %v1682, 8388608
    %v1684 = vsub.s32 0, %v1683
    %v1685 = vadd.s32 %v1680, 1
    %vm1686 = vcmp.gt.s32.totalorder %v1685, 0
    %v1687 = vsel %vm1686, %v1685, 0
    %v1688 = vshrl.u32 %v1687, 5
    %v1689 = vand.u32 %v1687, 31
    %v1690 = vsub.s32 32, %v1689
    %v1691 = vshrl.u32 683565275, %v1690
    %v1692 = vshll.u32 683565275, %v1689
    %v1693 = vshrl.u32 2475754826, %v1690
    %v1694 = vor.u32 %v1692, %v1693
    %v1695 = vshll.u32 2475754826, %v1689
    %v1696 = vshrl.u32 2131351028, %v1690
    %v1697 = vor.u32 %v1695, %v1696
    %v1698 = vshll.u32 2131351028, %v1689
    %v1699 = vshrl.u32 2102212464, %v1690
    %v1700 = vor.u32 %v1698, %v1699
    %v1701 = vshll.u32 2102212464, %v1689
    %v1702 = vshrl.u32 920167782, %v1690
    %v1703 = vor.u32 %v1701, %v1702
    %v1704 = vshll.u32 920167782, %v1689
    %v1705 = vshrl.u32 1326507024, %v1690
    %v1706 = vor.u32 %v1704, %v1705
    %vm1707 = vcmp.lt.s32.totalorder %v1688, 1
    %vm1708 = vcmp.lt.s32.totalorder %v1688, 2
    %vm1709 = vcmp.lt.s32.totalorder %v1688, 3
    %vm1710 = vcmp.lt.s32.totalorder %v1688, 4
    %v1711 = vsel %vm1707, %v1691, %v1694
    %v1712 = vsel %vm1710, %v1700, 2102212464
    %v1713 = vsel %vm1709, %v1697, %v1712
    %v1714 = vsel %vm1708, %v1711, %v1713
    %v1715 = vsel %vm1707, %v1694, %v1697
    %v1716 = vsel %vm1710, %v1703, 920167782
    %v1717 = vsel %vm1709, %v1700, %v1716
    %v1718 = vsel %vm1708, %v1715, %v1717
    %v1719 = vsel %vm1707, %v1697, %v1700
    %v1720 = vsel %vm1710, %v1706, 1326507024
    %v1721 = vsel %vm1709, %v1703, %v1720
    %v1722 = vsel %vm1708, %v1719, %v1721
    %v1723 = vshll.u32 %v1683, 8
    %v1724 = vmul.u32.u64.compose %v1723, %v1722
    %v1725 = vextract.low.u32 %v1724
    %v1726 = vextract.high.u32 %v1724
    %v1727 = vmul.u32.u64.compose %v1723, %v1718
    %v1728 = vextract.low.u32 %v1727
    %v1729 = vextract.high.u32 %v1727
    %v1730 = vmul.u32 %v1723, %v1714
    %v1731 = vadd.s32 %v1726, %v1728
    %vm1732 = vc.u32 %v1726, %v1728
    %v1733 = vadd.s32 %v1729, 1
    %v1734 = vsel %vm1732, %v1733, %v1729
    %v1735 = vadd.s32 %v1730, %v1734
    %v1736 = vadd.s32 %v1735, 536870912
    %v1737 = vshrl.u32 %v1736, 30
    %v1738 = vshll.u32 %v1737, 30
    %v1739 = vsub.s32 %v1735, %v1738
    %vm1740 = vcmp.lt.s32.totalorder %v1739, 0
    %v1741 = vsub.s32 0, %v1739
    %v1742 = vsel %vm1740, %v1741, %v1739
    %v1743 = vclz %v1742
    %v1744 = vsub.s32 %v1743, 2
    %vm1745 = vcmp.gt.s32.totalorder 0, %v1744
    %v1746 = vsel %vm1745, 0, %v1744
    %v1747 = vsub.s32 32, %v1746
    %v1748 = vshll.u32 %v1739, %v1746
    %v1749 = vshrl.u32 %v1731, %v1747
    %v1750 = vor.u32 %v1748, %v1749
    %v1751 = vsub.s32 4294967266, %v1746
    %v1752 = vadd.s32 %v1751, 127
    %v1753 = vshll.u32 %v1752, 23
    %v1754 = vor.u32 4788187, %v1753
    %v1755 = vand.u32 2147483647, %v1754
    %v1757 = vcvt.s32.f32 %v1750
    %v1758 = vmul.f32 %v1757, %v1755
    %v1759 = vxor.u32 %v1758, 2147483648
    %v1760 = vsel %vm1677, %v1759, %v1758
    %v1761 = vsub.s32 4, %v1737
    %v1762 = vsel %vm1677, %v1761, %v1737
    %v1763 = vsel %vm1676, %v1152, %v1760
    %v1764 = vsel %vm1676, 0, %v1762
    %v1765 = vcosq.f32.pop %v1763
    %v1766 = vsinq.f32.pop %v1763
    %vm1767 = vweird.f32 %v1152
    %v1768 = vadd.s32 %v1764, 3
    %v1769 = vand.u32 %v1768, 3
    %vm1770 = vcmp.lt.s32.totalorder %v1769, 2
    %vm1771 = vcmp.eq.s32.totalorder %v1769, 0
    %v1772 = vxor.u32 %v1766, 2147483648
    %v1773 = vsel %vm1771, %v1765, %v1772
    %vm1774 = vcmp.eq.s32.totalorder %v1769, 2
    %v1775 = vxor.u32 %v1765, 2147483648
    %v1776 = vsel %vm1774, %v1775, %v1766
    %v1777 = vsel %vm1770, %v1773, %v1776
    %v1778 = vsel %vm1767, nan, %v1777
    %v1779 = vand.u32 2147483647, %v1153
    %vm1780 = vcmp.le.f32.partialorder %v1779, 0.7853982
    %vm1781 = vcmp.lt.s32.totalorder %v1153, 0
    %v1782 = vand.u32 %v1153, 2139095040
    %v1783 = vshrl.u32 %v1782, 23
    %v1784 = vsub.s32 %v1783, 127
    %v1785 = vand.u32 2147483647, %v1153
    %v1786 = vand.u32 %v1785, 8388607
    %v1787 = vor.u32 %v1786, 8388608
    %v1788 = vsub.s32 0, %v1787
    %v1789 = vadd.s32 %v1784, 1
    %vm1790 = vcmp.gt.s32.totalorder %v1789, 0
    %v1791 = vsel %vm1790, %v1789, 0
    %v1792 = vshrl.u32 %v1791, 5
    %v1793 = vand.u32 %v1791, 31
    %v1794 = vsub.s32 32, %v1793
    %v1795 = vshrl.u32 683565275, %v1794
    %v1796 = vshll.u32 683565275, %v1793
    %v1797 = vshrl.u32 2475754826, %v1794
    %v1798 = vor.u32 %v1796, %v1797
    %v1799 = vshll.u32 2475754826, %v1793
    %v1800 = vshrl.u32 2131351028, %v1794
    %v1801 = vor.u32 %v1799, %v1800
    %v1802 = vshll.u32 2131351028, %v1793
    %v1803 = vshrl.u32 2102212464, %v1794
    %v1804 = vor.u32 %v1802, %v1803
    %v1805 = vshll.u32 2102212464, %v1793
    %v1806 = vshrl.u32 920167782, %v1794
    %v1807 = vor.u32 %v1805, %v1806
    %v1808 = vshll.u32 920167782, %v1793
    %v1809 = vshrl.u32 1326507024, %v1794
    %v1810 = vor.u32 %v1808, %v1809
    %vm1811 = vcmp.lt.s32.totalorder %v1792, 1
    %vm1812 = vcmp.lt.s32.totalorder %v1792, 2
    %vm1813 = vcmp.lt.s32.totalorder %v1792, 3
    %vm1814 = vcmp.lt.s32.totalorder %v1792, 4
    %v1815 = vsel %vm1811, %v1795, %v1798
    %v1816 = vsel %vm1814, %v1804, 2102212464
    %v1817 = vsel %vm1813, %v1801, %v1816
    %v1818 = vsel %vm1812, %v1815, %v1817
    %v1819 = vsel %vm1811, %v1798, %v1801
    %v1820 = vsel %vm1814, %v1807, 920167782
    %v1821 = vsel %vm1813, %v1804, %v1820
    %v1822 = vsel %vm1812, %v1819, %v1821
    %v1823 = vsel %vm1811, %v1801, %v1804
    %v1824 = vsel %vm1814, %v1810, 1326507024
    %v1825 = vsel %vm1813, %v1807, %v1824
    %v1826 = vsel %vm1812, %v1823, %v1825
    %v1827 = vshll.u32 %v1787, 8
    %v1828 = vmul.u32.u64.compose %v1827, %v1826
    %v1829 = vextract.low.u32 %v1828
    %v1830 = vextract.high.u32 %v1828
    %v1831 = vmul.u32.u64.compose %v1827, %v1822
    %v1832 = vextract.low.u32 %v1831
    %v1833 = vextract.high.u32 %v1831
    %v1834 = vmul.u32 %v1827, %v1818
    %v1835 = vadd.s32 %v1830, %v1832
    %vm1836 = vc.u32 %v1830, %v1832
    %v1837 = vadd.s32 %v1833, 1
    %v1838 = vsel %vm1836, %v1837, %v1833
    %v1839 = vadd.s32 %v1834, %v1838
    %v1840 = vadd.s32 %v1839, 536870912
    %v1841 = vshrl.u32 %v1840, 30
    %v1842 = vshll.u32 %v1841, 30
    %v1843 = vsub.s32 %v1839, %v1842
    %vm1844 = vcmp.lt.s32.totalorder %v1843, 0
    %v1845 = vsub.s32 0, %v1843
    %v1846 = vsel %vm1844, %v1845, %v1843
    %v1847 = vclz %v1846
    %v1848 = vsub.s32 %v1847, 2
    %vm1849 = vcmp.gt.s32.totalorder 0, %v1848
    %v1850 = vsel %vm1849, 0, %v1848
    %v1851 = vsub.s32 32, %v1850
    %v1852 = vshll.u32 %v1843, %v1850
    %v1853 = vshrl.u32 %v1835, %v1851
    %v1854 = vor.u32 %v1852, %v1853
    %v1855 = vsub.s32 4294967266, %v1850
    %v1856 = vadd.s32 %v1855, 127
    %v1857 = vshll.u32 %v1856, 23
    %v1858 = vor.u32 4788187, %v1857
    %v1859 = vand.u32 2147483647, %v1858
    %v1861 = vcvt.s32.f32 %v1854
    %v1862 = vmul.f32 %v1861, %v1859
    %v1863 = vxor.u32 %v1862, 2147483648
    %v1864 = vsel %vm1781, %v1863, %v1862
    %v1865 = vsub.s32 4, %v1841
    %v1866 = vsel %vm1781, %v1865, %v1841
    %v1867 = vsel %vm1780, %v1153, %v1864
    %v1868 = vsel %vm1780, 0, %v1866
    %v1869 = vcosq.f32.pop %v1867
    %v1870 = vsinq.f32.pop %v1867
    %vm1871 = vweird.f32 %v1153
    %v1872 = vadd.s32 %v1868, 3
    %v1873 = vand.u32 %v1872, 3
    %vm1874 = vcmp.lt.s32.totalorder %v1873, 2
    %vm1875 = vcmp.eq.s32.totalorder %v1873, 0
    %v1876 = vxor.u32 %v1870, 2147483648
    %v1877 = vsel %vm1875, %v1869, %v1876
    %vm1878 = vcmp.eq.s32.totalorder %v1873, 2
    %v1879 = vxor.u32 %v1869, 2147483648
    %v1880 = vsel %vm1878, %v1879, %v1870
    %v1881 = vsel %vm1874, %v1877, %v1880
    %v1882 = vsel %vm1871, nan, %v1881
    %v1883 = vand.u32 2147483647, %v1154
    %vm1884 = vcmp.le.f32.partialorder %v1883, 0.7853982
    %vm1885 = vcmp.lt.s32.totalorder %v1154, 0
    %v1886 = vand.u32 %v1154, 2139095040
    %v1887 = vshrl.u32 %v1886, 23
    %v1888 = vsub.s32 %v1887, 127
    %v1889 = vand.u32 2147483647, %v1154
    %v1890 = vand.u32 %v1889, 8388607
    %v1891 = vor.u32 %v1890, 8388608
    %v1892 = vsub.s32 0, %v1891
    %v1893 = vadd.s32 %v1888, 1
    %vm1894 = vcmp.gt.s32.totalorder %v1893, 0
    %v1895 = vsel %vm1894, %v1893, 0
    %v1896 = vshrl.u32 %v1895, 5
    %v1897 = vand.u32 %v1895, 31
    %v1898 = vsub.s32 32, %v1897
    %v1899 = vshrl.u32 683565275, %v1898
    %v1900 = vshll.u32 683565275, %v1897
    %v1901 = vshrl.u32 2475754826, %v1898
    %v1902 = vor.u32 %v1900, %v1901
    %v1903 = vshll.u32 2475754826, %v1897
    %v1904 = vshrl.u32 2131351028, %v1898
    %v1905 = vor.u32 %v1903, %v1904
    %v1906 = vshll.u32 2131351028, %v1897
    %v1907 = vshrl.u32 2102212464, %v1898
    %v1908 = vor.u32 %v1906, %v1907
    %v1909 = vshll.u32 2102212464, %v1897
    %v1910 = vshrl.u32 920167782, %v1898
    %v1911 = vor.u32 %v1909, %v1910
    %v1912 = vshll.u32 920167782, %v1897
    %v1913 = vshrl.u32 1326507024, %v1898
    %v1914 = vor.u32 %v1912, %v1913
    %vm1915 = vcmp.lt.s32.totalorder %v1896, 1
    %vm1916 = vcmp.lt.s32.totalorder %v1896, 2
    %vm1917 = vcmp.lt.s32.totalorder %v1896, 3
    %vm1918 = vcmp.lt.s32.totalorder %v1896, 4
    %v1919 = vsel %vm1915, %v1899, %v1902
    %v1920 = vsel %vm1918, %v1908, 2102212464
    %v1921 = vsel %vm1917, %v1905, %v1920
    %v1922 = vsel %vm1916, %v1919, %v1921
    %v1923 = vsel %vm1915, %v1902, %v1905
    %v1924 = vsel %vm1918, %v1911, 920167782
    %v1925 = vsel %vm1917, %v1908, %v1924
    %v1926 = vsel %vm1916, %v1923, %v1925
    %v1927 = vsel %vm1915, %v1905, %v1908
    %v1928 = vsel %vm1918, %v1914, 1326507024
    %v1929 = vsel %vm1917, %v1911, %v1928
    %v1930 = vsel %vm1916, %v1927, %v1929
    %v1931 = vshll.u32 %v1891, 8
    %v1932 = vmul.u32.u64.compose %v1931, %v1930
    %v1933 = vextract.low.u32 %v1932
    %v1934 = vextract.high.u32 %v1932
    %v1935 = vmul.u32.u64.compose %v1931, %v1926
    %v1936 = vextract.low.u32 %v1935
    %v1937 = vextract.high.u32 %v1935
    %v1938 = vmul.u32 %v1931, %v1922
    %v1939 = vadd.s32 %v1934, %v1936
    %vm1940 = vc.u32 %v1934, %v1936
    %v1941 = vadd.s32 %v1937, 1
    %v1942 = vsel %vm1940, %v1941, %v1937
    %v1943 = vadd.s32 %v1938, %v1942
    %v1944 = vadd.s32 %v1943, 536870912
    %v1945 = vshrl.u32 %v1944, 30
    %v1946 = vshll.u32 %v1945, 30
    %v1947 = vsub.s32 %v1943, %v1946
    %vm1948 = vcmp.lt.s32.totalorder %v1947, 0
    %v1949 = vsub.s32 0, %v1947
    %v1950 = vsel %vm1948, %v1949, %v1947
    %v1951 = vclz %v1950
    %v1952 = vsub.s32 %v1951, 2
    %vm1953 = vcmp.gt.s32.totalorder 0, %v1952
    %v1954 = vsel %vm1953, 0, %v1952
    %v1955 = vsub.s32 32, %v1954
    %v1956 = vshll.u32 %v1947, %v1954
    %v1957 = vshrl.u32 %v1939, %v1955
    %v1958 = vor.u32 %v1956, %v1957
    %v1959 = vsub.s32 4294967266, %v1954
    %v1960 = vadd.s32 %v1959, 127
    %v1961 = vshll.u32 %v1960, 23
    %v1962 = vor.u32 4788187, %v1961
    %v1963 = vand.u32 2147483647, %v1962
    %v1965 = vcvt.s32.f32 %v1958
    %v1966 = vmul.f32 %v1965, %v1963
    %v1967 = vxor.u32 %v1966, 2147483648
    %v1968 = vsel %vm1885, %v1967, %v1966
    %v1969 = vsub.s32 4, %v1945
    %v1970 = vsel %vm1885, %v1969, %v1945
    %v1971 = vsel %vm1884, %v1154, %v1968
    %v1972 = vsel %vm1884, 0, %v1970
    %v1973 = vcosq.f32.pop %v1971
    %v1974 = vsinq.f32.pop %v1971
    %vm1975 = vweird.f32 %v1154
    %v1976 = vadd.s32 %v1972, 3
    %v1977 = vand.u32 %v1976, 3
    %vm1978 = vcmp.lt.s32.totalorder %v1977, 2
    %vm1979 = vcmp.eq.s32.totalorder %v1977, 0
    %v1980 = vxor.u32 %v1974, 2147483648
    %v1981 = vsel %vm1979, %v1973, %v1980
    %vm1982 = vcmp.eq.s32.totalorder %v1977, 2
    %v1983 = vxor.u32 %v1973, 2147483648
    %v1984 = vsel %vm1982, %v1983, %v1974
    %v1985 = vsel %vm1978, %v1981, %v1984
    %v1986 = vsel %vm1975, nan, %v1985
    %v1987 = vmul.f32 %v1258, 1.4142135
    %v1988 = vmul.f32 %v1362, 1.4142135
    %v1989 = vmul.f32 %v1466, 1.4142135
    %v1990 = vmul.f32 %v1570, 1.4142135
    %v1991 = vmul.f32 %v1674, 1.4142135
    %v1992 = vmul.f32 %v1778, 1.4142135
    %v1993 = vmul.f32 %v1882, 1.4142135
    %v1994 = vmul.f32 %v1986, 1.4142135
    %v1995 = vld [vmem:[%s5] sm:$0xff]
    %v1996 = vld [vmem:[%s5 + $0x8] sm:$0xff]
    %v1997 = vld [vmem:[%s5 + $0x10] sm:$0xff]
    %v1998 = vld [vmem:[%s5 + $0x18] sm:$0xff]
    %v1999 = vld [vmem:[%s6] sm:$0xff]
    %v2000 = vld [vmem:[%s6 + $0x8] sm:$0xff]
    %v2001 = vld [vmem:[%s6 + $0x10] sm:$0xff]
    %v2002 = vld [vmem:[%s6 + $0x18] sm:$0xff]
    %2004 = vset.pattern.permute.xlu0 0
    %2005 = vperm.xlu0 %2004, %v1999
    %v2006 = vpop.permute.xlu0 %2005
    %2009 = vset.pattern.permute.xlu0 0
    %2010 = vperm.xlu0 %2009, %v2000
    %v2011 = vpop.permute.xlu0 %2010
    %2014 = vset.pattern.permute.xlu0 0
    %2015 = vperm.xlu0 %2014, %v2001
    %v2016 = vpop.permute.xlu0 %2015
    %2019 = vset.pattern.permute.xlu0 0
    %2020 = vperm.xlu0 %2019, %v2002
    %v2021 = vpop.permute.xlu0 %2020
    %v2024 = vsel %vm1045, %v1995, 0
    %v2027 = vsel %vm1045, %v1996, 0
    %v2030 = vsel %vm1045, %v1997, 0
    %v2033 = vsel %vm1045, %v1998, 0
    %2035 = vmatprep.subr.mxu0 0.0
    %2036 = vmatpush1.msra.mxu0 0.0
    %2037 = vmatprep.subr.mxu0 0.0
    %2038 = vmatpush1.msra.mxu0 0.0
    %2039 = vmatprep.subr.mxu0 0.0
    %2040 = vmatpush1.msra.mxu0 0.0
    %2041 = vmatprep.subr.mxu0 0.0
    %2042 = vmatpush1.msra.mxu0 0.0
    %2043 = vmatprep.subr.mxu0 0.0
    %2044 = vmatpush1.msra.mxu0 0.0
    %2045 = vmatprep.subr.mxu0 0.0
    %2046 = vmatpush1.msra.mxu0 0.0
    %2047 = vmatprep.subr.mxu0 0.0
    %2048 = vmatpush1.msra.mxu0 0.0
    %2049 = vmatprep.subr.mxu0 0.0
    %2050 = vmatpush1.msra.mxu0 0.0
    %2051 = vmatprep.subr.mxu0 0.0
    %2052 = vmatpush1.msra.mxu0 0.0
    %2053 = vmatprep.subr.mxu0 0.0
    %2054 = vmatpush1.msra.mxu0 0.0
    %2055 = vmatprep.subr.mxu0 0.0
    %2056 = vmatpush1.msra.mxu0 0.0
    %2057 = vmatprep.subr.mxu0 0.0
    %2058 = vmatpush1.msra.mxu0 0.0
    %2059 = vmatprep.subr.mxu0 %v1994
    %2060 = vmatpush1.msra.mxu0 %v1993
    %2061 = vmatprep.subr.mxu0 %v1992
    %2062 = vmatpush1.msra.mxu0 %v1991
    %2063 = vmatprep.subr.mxu0 %v1990
    %2064 = vmatpush1.msra.mxu0 %v1989
    %2065 = vmatprep.subr.mxu0 %v1988
    %2066 = vmatpush1.msra.mxu0 %v1987
    %2067 = vmatprep.subr.mxu0 0.0
    %2068 = vmatpush2.msra.mxu0 0.0
    %2069 = vmatprep.subr.mxu0 0.0
    %2070 = vmatpush2.msra.mxu0 0.0
    %2071 = vmatprep.subr.mxu0 0.0
    %2072 = vmatpush2.msra.mxu0 0.0
    %2073 = vmatprep.subr.mxu0 0.0
    %2074 = vmatpush2.msra.mxu0 0.0
    %2075 = vmatprep.subr.mxu0 0.0
    %2076 = vmatpush2.msra.mxu0 0.0
    %2077 = vmatprep.subr.mxu0 0.0
    %2078 = vmatpush2.msra.mxu0 0.0
    %2079 = vmatprep.subr.mxu0 0.0
    %2080 = vmatpush2.msra.mxu0 0.0
    %2081 = vmatprep.subr.mxu0 0.0
    %2082 = vmatpush2.msra.mxu0 0.0
    %2083 = vmatprep.subr.mxu0 0.0
    %2084 = vmatpush2.msra.mxu0 0.0
    %2085 = vmatprep.subr.mxu0 0.0
    %2086 = vmatpush2.msra.mxu0 0.0
    %2087 = vmatprep.subr.mxu0 0.0
    %2088 = vmatpush2.msra.mxu0 0.0
    %2089 = vmatprep.subr.mxu0 0.0
    %2090 = vmatpush2.msra.mxu0 0.0
    %2091 = vmatprep.subr.mxu0 0.0
    %2092 = vmatpush2.msra.mxu0 0.0
    %2093 = vmatprep.subr.mxu0 0.0
    %2094 = vmatpush2.msra.mxu0 0.0
    %2095 = vmatprep.subr.mxu0 0.0
    %2096 = vmatpush2.msra.mxu0 0.0
    %2097 = vmatprep.subr.mxu0 0.0
    %2098 = vmatpush2.msra.mxu0 0.0
    %2099 = vmatprep.mubr.f32.mxu0 0.0
    %2100 = vmatmul.mubr.f32.gmra.mxu0 %v2024
    %v2101 = vpop.f32.mrf.mxu0
    %v2102 = vadd.f32 %v2006, %v2101
    %v2103 = vpop.f32.mrf.mxu0
    %v2104 = vadd.f32 %v2006, %v2103
    %2105 = vmatprep.mubr.f32.mxu0 0.0
    %2106 = vmatmul.mubr.f32.gmra.mxu0 %v2027
    %v2107 = vpop.f32.mrf.mxu0
    %v2108 = vadd.f32 %v2011, %v2107
    %v2109 = vpop.f32.mrf.mxu0
    %v2110 = vadd.f32 %v2011, %v2109
    %2111 = vmatprep.mubr.f32.mxu0 0.0
    %2112 = vmatmul.mubr.f32.gmra.mxu0 %v2030
    %v2113 = vpop.f32.mrf.mxu0
    %v2114 = vadd.f32 %v2016, %v2113
    %v2115 = vpop.f32.mrf.mxu0
    %v2116 = vadd.f32 %v2016, %v2115
    %2117 = vmatprep.mubr.f32.mxu0 0.0
    %2118 = vmatmul.mubr.f32.gmra.mxu0 %v2033
    %v2119 = vpop.f32.mrf.mxu0
    %v2120 = vadd.f32 %v2021, %v2119
    %v2121 = vpop.f32.mrf.mxu0
    %v2122 = vadd.f32 %v2021, %v2121
    %2123 = vdwg.mxu0
    %v2124 = vadd.f32 %v2102, 0.7853982
    %v2125 = vadd.f32 %v2104, 0.7853982
    %v2126 = vadd.f32 %v2108, 0.7853982
    %v2127 = vadd.f32 %v2110, 0.7853982
    %v2128 = vadd.f32 %v2114, 0.7853982
    %v2129 = vadd.f32 %v2116, 0.7853982
    %v2130 = vadd.f32 %v2120, 0.7853982
    %v2131 = vadd.f32 %v2122, 0.7853982
    %v2132 = vand.u32 2147483647, %v2124
    %vm2133 = vcmp.le.f32.partialorder %v2132, 0.7853982
    %vm2134 = vcmp.lt.s32.totalorder %v2124, 0
    %v2135 = vand.u32 %v2124, 2139095040
    %v2136 = vshrl.u32 %v2135, 23
    %v2137 = vsub.s32 %v2136, 127
    %v2138 = vand.u32 2147483647, %v2124
    %v2139 = vand.u32 %v2138, 8388607
    %v2140 = vor.u32 %v2139, 8388608
    %v2141 = vsub.s32 0, %v2140
    %v2142 = vadd.s32 %v2137, 1
    %vm2143 = vcmp.gt.s32.totalorder %v2142, 0
    %v2144 = vsel %vm2143, %v2142, 0
    %v2145 = vshrl.u32 %v2144, 5
    %v2146 = vand.u32 %v2144, 31
    %v2147 = vsub.s32 32, %v2146
    %v2148 = vshrl.u32 683565275, %v2147
    %v2149 = vshll.u32 683565275, %v2146
    %v2150 = vshrl.u32 2475754826, %v2147
    %v2151 = vor.u32 %v2149, %v2150
    %v2152 = vshll.u32 2475754826, %v2146
    %v2153 = vshrl.u32 2131351028, %v2147
    %v2154 = vor.u32 %v2152, %v2153
    %v2155 = vshll.u32 2131351028, %v2146
    %v2156 = vshrl.u32 2102212464, %v2147
    %v2157 = vor.u32 %v2155, %v2156
    %v2158 = vshll.u32 2102212464, %v2146
    %v2159 = vshrl.u32 920167782, %v2147
    %v2160 = vor.u32 %v2158, %v2159
    %v2161 = vshll.u32 920167782, %v2146
    %v2162 = vshrl.u32 1326507024, %v2147
    %v2163 = vor.u32 %v2161, %v2162
    %vm2164 = vcmp.lt.s32.totalorder %v2145, 1
    %vm2165 = vcmp.lt.s32.totalorder %v2145, 2
    %vm2166 = vcmp.lt.s32.totalorder %v2145, 3
    %vm2167 = vcmp.lt.s32.totalorder %v2145, 4
    %v2168 = vsel %vm2164, %v2148, %v2151
    %v2169 = vsel %vm2167, %v2157, 2102212464
    %v2170 = vsel %vm2166, %v2154, %v2169
    %v2171 = vsel %vm2165, %v2168, %v2170
    %v2172 = vsel %vm2164, %v2151, %v2154
    %v2173 = vsel %vm2167, %v2160, 920167782
    %v2174 = vsel %vm2166, %v2157, %v2173
    %v2175 = vsel %vm2165, %v2172, %v2174
    %v2176 = vsel %vm2164, %v2154, %v2157
    %v2177 = vsel %vm2167, %v2163, 1326507024
    %v2178 = vsel %vm2166, %v2160, %v2177
    %v2179 = vsel %vm2165, %v2176, %v2178
    %v2180 = vshll.u32 %v2140, 8
    %v2181 = vmul.u32.u64.compose %v2180, %v2179
    %v2182 = vextract.low.u32 %v2181
    %v2183 = vextract.high.u32 %v2181
    %v2184 = vmul.u32.u64.compose %v2180, %v2175
    %v2185 = vextract.low.u32 %v2184
    %v2186 = vextract.high.u32 %v2184
    %v2187 = vmul.u32 %v2180, %v2171
    %v2188 = vadd.s32 %v2183, %v2185
    %vm2189 = vc.u32 %v2183, %v2185
    %v2190 = vadd.s32 %v2186, 1
    %v2191 = vsel %vm2189, %v2190, %v2186
    %v2192 = vadd.s32 %v2187, %v2191
    %v2193 = vadd.s32 %v2192, 536870912
    %v2194 = vshrl.u32 %v2193, 30
    %v2195 = vshll.u32 %v2194, 30
    %v2196 = vsub.s32 %v2192, %v2195
    %vm2197 = vcmp.lt.s32.totalorder %v2196, 0
    %v2198 = vsub.s32 0, %v2196
    %v2199 = vsel %vm2197, %v2198, %v2196
    %v2200 = vclz %v2199
    %v2201 = vsub.s32 %v2200, 2
    %vm2202 = vcmp.gt.s32.totalorder 0, %v2201
    %v2203 = vsel %vm2202, 0, %v2201
    %v2204 = vsub.s32 32, %v2203
    %v2205 = vshll.u32 %v2196, %v2203
    %v2206 = vshrl.u32 %v2188, %v2204
    %v2207 = vor.u32 %v2205, %v2206
    %v2208 = vsub.s32 4294967266, %v2203
    %v2209 = vadd.s32 %v2208, 127
    %v2210 = vshll.u32 %v2209, 23
    %v2211 = vor.u32 4788187, %v2210
    %v2212 = vand.u32 2147483647, %v2211
    %v2214 = vcvt.s32.f32 %v2207
    %v2215 = vmul.f32 %v2214, %v2212
    %v2216 = vxor.u32 %v2215, 2147483648
    %v2217 = vsel %vm2134, %v2216, %v2215
    %v2218 = vsub.s32 4, %v2194
    %v2219 = vsel %vm2134, %v2218, %v2194
    %v2220 = vsel %vm2133, %v2124, %v2217
    %v2221 = vsel %vm2133, 0, %v2219
    %v2222 = vcosq.f32.pop %v2220
    %v2223 = vsinq.f32.pop %v2220
    %vm2224 = vweird.f32 %v2124
    %v2225 = vadd.s32 %v2221, 3
    %v2226 = vand.u32 %v2225, 3
    %vm2227 = vcmp.lt.s32.totalorder %v2226, 2
    %vm2228 = vcmp.eq.s32.totalorder %v2226, 0
    %v2229 = vxor.u32 %v2223, 2147483648
    %v2230 = vsel %vm2228, %v2222, %v2229
    %vm2231 = vcmp.eq.s32.totalorder %v2226, 2
    %v2232 = vxor.u32 %v2222, 2147483648
    %v2233 = vsel %vm2231, %v2232, %v2223
    %v2234 = vsel %vm2227, %v2230, %v2233
    %v2235 = vsel %vm2224, nan, %v2234
    %v2236 = vand.u32 2147483647, %v2125
    %vm2237 = vcmp.le.f32.partialorder %v2236, 0.7853982
    %vm2238 = vcmp.lt.s32.totalorder %v2125, 0
    %v2239 = vand.u32 %v2125, 2139095040
    %v2240 = vshrl.u32 %v2239, 23
    %v2241 = vsub.s32 %v2240, 127
    %v2242 = vand.u32 2147483647, %v2125
    %v2243 = vand.u32 %v2242, 8388607
    %v2244 = vor.u32 %v2243, 8388608
    %v2245 = vsub.s32 0, %v2244
    %v2246 = vadd.s32 %v2241, 1
    %vm2247 = vcmp.gt.s32.totalorder %v2246, 0
    %v2248 = vsel %vm2247, %v2246, 0
    %v2249 = vshrl.u32 %v2248, 5
    %v2250 = vand.u32 %v2248, 31
    %v2251 = vsub.s32 32, %v2250
    %v2252 = vshrl.u32 683565275, %v2251
    %v2253 = vshll.u32 683565275, %v2250
    %v2254 = vshrl.u32 2475754826, %v2251
    %v2255 = vor.u32 %v2253, %v2254
    %v2256 = vshll.u32 2475754826, %v2250
    %v2257 = vshrl.u32 2131351028, %v2251
    %v2258 = vor.u32 %v2256, %v2257
    %v2259 = vshll.u32 2131351028, %v2250
    %v2260 = vshrl.u32 2102212464, %v2251
    %v2261 = vor.u32 %v2259, %v2260
    %v2262 = vshll.u32 2102212464, %v2250
    %v2263 = vshrl.u32 920167782, %v2251
    %v2264 = vor.u32 %v2262, %v2263
    %v2265 = vshll.u32 920167782, %v2250
    %v2266 = vshrl.u32 1326507024, %v2251
    %v2267 = vor.u32 %v2265, %v2266
    %vm2268 = vcmp.lt.s32.totalorder %v2249, 1
    %vm2269 = vcmp.lt.s32.totalorder %v2249, 2
    %vm2270 = vcmp.lt.s32.totalorder %v2249, 3
    %vm2271 = vcmp.lt.s32.totalorder %v2249, 4
    %v2272 = vsel %vm2268, %v2252, %v2255
    %v2273 = vsel %vm2271, %v2261, 2102212464
    %v2274 = vsel %vm2270, %v2258, %v2273
    %v2275 = vsel %vm2269, %v2272, %v2274
    %v2276 = vsel %vm2268, %v2255, %v2258
    %v2277 = vsel %vm2271, %v2264, 920167782
    %v2278 = vsel %vm2270, %v2261, %v2277
    %v2279 = vsel %vm2269, %v2276, %v2278
    %v2280 = vsel %vm2268, %v2258, %v2261
    %v2281 = vsel %vm2271, %v2267, 1326507024
    %v2282 = vsel %vm2270, %v2264, %v2281
    %v2283 = vsel %vm2269, %v2280, %v2282
    %v2284 = vshll.u32 %v2244, 8
    %v2285 = vmul.u32.u64.compose %v2284, %v2283
    %v2286 = vextract.low.u32 %v2285
    %v2287 = vextract.high.u32 %v2285
    %v2288 = vmul.u32.u64.compose %v2284, %v2279
    %v2289 = vextract.low.u32 %v2288
    %v2290 = vextract.high.u32 %v2288
    %v2291 = vmul.u32 %v2284, %v2275
    %v2292 = vadd.s32 %v2287, %v2289
    %vm2293 = vc.u32 %v2287, %v2289
    %v2294 = vadd.s32 %v2290, 1
    %v2295 = vsel %vm2293, %v2294, %v2290
    %v2296 = vadd.s32 %v2291, %v2295
    %v2297 = vadd.s32 %v2296, 536870912
    %v2298 = vshrl.u32 %v2297, 30
    %v2299 = vshll.u32 %v2298, 30
    %v2300 = vsub.s32 %v2296, %v2299
    %vm2301 = vcmp.lt.s32.totalorder %v2300, 0
    %v2302 = vsub.s32 0, %v2300
    %v2303 = vsel %vm2301, %v2302, %v2300
    %v2304 = vclz %v2303
    %v2305 = vsub.s32 %v2304, 2
    %vm2306 = vcmp.gt.s32.totalorder 0, %v2305
    %v2307 = vsel %vm2306, 0, %v2305
    %v2308 = vsub.s32 32, %v2307
    %v2309 = vshll.u32 %v2300, %v2307
    %v2310 = vshrl.u32 %v2292, %v2308
    %v2311 = vor.u32 %v2309, %v2310
    %v2312 = vsub.s32 4294967266, %v2307
    %v2313 = vadd.s32 %v2312, 127
    %v2314 = vshll.u32 %v2313, 23
    %v2315 = vor.u32 4788187, %v2314
    %v2316 = vand.u32 2147483647, %v2315
    %v2318 = vcvt.s32.f32 %v2311
    %v2319 = vmul.f32 %v2318, %v2316
    %v2320 = vxor.u32 %v2319, 2147483648
    %v2321 = vsel %vm2238, %v2320, %v2319
    %v2322 = vsub.s32 4, %v2298
    %v2323 = vsel %vm2238, %v2322, %v2298
    %v2324 = vsel %vm2237, %v2125, %v2321
    %v2325 = vsel %vm2237, 0, %v2323
    %v2326 = vcosq.f32.pop %v2324
    %v2327 = vsinq.f32.pop %v2324
    %vm2328 = vweird.f32 %v2125
    %v2329 = vadd.s32 %v2325, 3
    %v2330 = vand.u32 %v2329, 3
    %vm2331 = vcmp.lt.s32.totalorder %v2330, 2
    %vm2332 = vcmp.eq.s32.totalorder %v2330, 0
    %v2333 = vxor.u32 %v2327, 2147483648
    %v2334 = vsel %vm2332, %v2326, %v2333
    %vm2335 = vcmp.eq.s32.totalorder %v2330, 2
    %v2336 = vxor.u32 %v2326, 2147483648
    %v2337 = vsel %vm2335, %v2336, %v2327
    %v2338 = vsel %vm2331, %v2334, %v2337
    %v2339 = vsel %vm2328, nan, %v2338
    %v2340 = vand.u32 2147483647, %v2126
    %vm2341 = vcmp.le.f32.partialorder %v2340, 0.7853982
    %vm2342 = vcmp.lt.s32.totalorder %v2126, 0
    %v2343 = vand.u32 %v2126, 2139095040
    %v2344 = vshrl.u32 %v2343, 23
    %v2345 = vsub.s32 %v2344, 127
    %v2346 = vand.u32 2147483647, %v2126
    %v2347 = vand.u32 %v2346, 8388607
    %v2348 = vor.u32 %v2347, 8388608
    %v2349 = vsub.s32 0, %v2348
    %v2350 = vadd.s32 %v2345, 1
    %vm2351 = vcmp.gt.s32.totalorder %v2350, 0
    %v2352 = vsel %vm2351, %v2350, 0
    %v2353 = vshrl.u32 %v2352, 5
    %v2354 = vand.u32 %v2352, 31
    %v2355 = vsub.s32 32, %v2354
    %v2356 = vshrl.u32 683565275, %v2355
    %v2357 = vshll.u32 683565275, %v2354
    %v2358 = vshrl.u32 2475754826, %v2355
    %v2359 = vor.u32 %v2357, %v2358
    %v2360 = vshll.u32 2475754826, %v2354
    %v2361 = vshrl.u32 2131351028, %v2355
    %v2362 = vor.u32 %v2360, %v2361
    %v2363 = vshll.u32 2131351028, %v2354
    %v2364 = vshrl.u32 2102212464, %v2355
    %v2365 = vor.u32 %v2363, %v2364
    %v2366 = vshll.u32 2102212464, %v2354
    %v2367 = vshrl.u32 920167782, %v2355
    %v2368 = vor.u32 %v2366, %v2367
    %v2369 = vshll.u32 920167782, %v2354
    %v2370 = vshrl.u32 1326507024, %v2355
    %v2371 = vor.u32 %v2369, %v2370
    %vm2372 = vcmp.lt.s32.totalorder %v2353, 1
    %vm2373 = vcmp.lt.s32.totalorder %v2353, 2
    %vm2374 = vcmp.lt.s32.totalorder %v2353, 3
    %vm2375 = vcmp.lt.s32.totalorder %v2353, 4
    %v2376 = vsel %vm2372, %v2356, %v2359
    %v2377 = vsel %vm2375, %v2365, 2102212464
    %v2378 = vsel %vm2374, %v2362, %v2377
    %v2379 = vsel %vm2373, %v2376, %v2378
    %v2380 = vsel %vm2372, %v2359, %v2362
    %v2381 = vsel %vm2375, %v2368, 920167782
    %v2382 = vsel %vm2374, %v2365, %v2381
    %v2383 = vsel %vm2373, %v2380, %v2382
    %v2384 = vsel %vm2372, %v2362, %v2365
    %v2385 = vsel %vm2375, %v2371, 1326507024
    %v2386 = vsel %vm2374, %v2368, %v2385
    %v2387 = vsel %vm2373, %v2384, %v2386
    %v2388 = vshll.u32 %v2348, 8
    %v2389 = vmul.u32.u64.compose %v2388, %v2387
    %v2390 = vextract.low.u32 %v2389
    %v2391 = vextract.high.u32 %v2389
    %v2392 = vmul.u32.u64.compose %v2388, %v2383
    %v2393 = vextract.low.u32 %v2392
    %v2394 = vextract.high.u32 %v2392
    %v2395 = vmul.u32 %v2388, %v2379
    %v2396 = vadd.s32 %v2391, %v2393
    %vm2397 = vc.u32 %v2391, %v2393
    %v2398 = vadd.s32 %v2394, 1
    %v2399 = vsel %vm2397, %v2398, %v2394
    %v2400 = vadd.s32 %v2395, %v2399
    %v2401 = vadd.s32 %v2400, 536870912
    %v2402 = vshrl.u32 %v2401, 30
    %v2403 = vshll.u32 %v2402, 30
    %v2404 = vsub.s32 %v2400, %v2403
    %vm2405 = vcmp.lt.s32.totalorder %v2404, 0
    %v2406 = vsub.s32 0, %v2404
    %v2407 = vsel %vm2405, %v2406, %v2404
    %v2408 = vclz %v2407
    %v2409 = vsub.s32 %v2408, 2
    %vm2410 = vcmp.gt.s32.totalorder 0, %v2409
    %v2411 = vsel %vm2410, 0, %v2409
    %v2412 = vsub.s32 32, %v2411
    %v2413 = vshll.u32 %v2404, %v2411
    %v2414 = vshrl.u32 %v2396, %v2412
    %v2415 = vor.u32 %v2413, %v2414
    %v2416 = vsub.s32 4294967266, %v2411
    %v2417 = vadd.s32 %v2416, 127
    %v2418 = vshll.u32 %v2417, 23
    %v2419 = vor.u32 4788187, %v2418
    %v2420 = vand.u32 2147483647, %v2419
    %v2422 = vcvt.s32.f32 %v2415
    %v2423 = vmul.f32 %v2422, %v2420
    %v2424 = vxor.u32 %v2423, 2147483648
    %v2425 = vsel %vm2342, %v2424, %v2423
    %v2426 = vsub.s32 4, %v2402
    %v2427 = vsel %vm2342, %v2426, %v2402
    %v2428 = vsel %vm2341, %v2126, %v2425
    %v2429 = vsel %vm2341, 0, %v2427
    %v2430 = vcosq.f32.pop %v2428
    %v2431 = vsinq.f32.pop %v2428
    %vm2432 = vweird.f32 %v2126
    %v2433 = vadd.s32 %v2429, 3
    %v2434 = vand.u32 %v2433, 3
    %vm2435 = vcmp.lt.s32.totalorder %v2434, 2
    %vm2436 = vcmp.eq.s32.totalorder %v2434, 0
    %v2437 = vxor.u32 %v2431, 2147483648
    %v2438 = vsel %vm2436, %v2430, %v2437
    %vm2439 = vcmp.eq.s32.totalorder %v2434, 2
    %v2440 = vxor.u32 %v2430, 2147483648
    %v2441 = vsel %vm2439, %v2440, %v2431
    %v2442 = vsel %vm2435, %v2438, %v2441
    %v2443 = vsel %vm2432, nan, %v2442
    %v2444 = vand.u32 2147483647, %v2127
    %vm2445 = vcmp.le.f32.partialorder %v2444, 0.7853982
    %vm2446 = vcmp.lt.s32.totalorder %v2127, 0
    %v2447 = vand.u32 %v2127, 2139095040
    %v2448 = vshrl.u32 %v2447, 23
    %v2449 = vsub.s32 %v2448, 127
    %v2450 = vand.u32 2147483647, %v2127
    %v2451 = vand.u32 %v2450, 8388607
    %v2452 = vor.u32 %v2451, 8388608
    %v2453 = vsub.s32 0, %v2452
    %v2454 = vadd.s32 %v2449, 1
    %vm2455 = vcmp.gt.s32.totalorder %v2454, 0
    %v2456 = vsel %vm2455, %v2454, 0
    %v2457 = vshrl.u32 %v2456, 5
    %v2458 = vand.u32 %v2456, 31
    %v2459 = vsub.s32 32, %v2458
    %v2460 = vshrl.u32 683565275, %v2459
    %v2461 = vshll.u32 683565275, %v2458
    %v2462 = vshrl.u32 2475754826, %v2459
    %v2463 = vor.u32 %v2461, %v2462
    %v2464 = vshll.u32 2475754826, %v2458
    %v2465 = vshrl.u32 2131351028, %v2459
    %v2466 = vor.u32 %v2464, %v2465
    %v2467 = vshll.u32 2131351028, %v2458
    %v2468 = vshrl.u32 2102212464, %v2459
    %v2469 = vor.u32 %v2467, %v2468
    %v2470 = vshll.u32 2102212464, %v2458
    %v2471 = vshrl.u32 920167782, %v2459
    %v2472 = vor.u32 %v2470, %v2471
    %v2473 = vshll.u32 920167782, %v2458
    %v2474 = vshrl.u32 1326507024, %v2459
    %v2475 = vor.u32 %v2473, %v2474
    %vm2476 = vcmp.lt.s32.totalorder %v2457, 1
    %vm2477 = vcmp.lt.s32.totalorder %v2457, 2
    %vm2478 = vcmp.lt.s32.totalorder %v2457, 3
    %vm2479 = vcmp.lt.s32.totalorder %v2457, 4
    %v2480 = vsel %vm2476, %v2460, %v2463
    %v2481 = vsel %vm2479, %v2469, 2102212464
    %v2482 = vsel %vm2478, %v2466, %v2481
    %v2483 = vsel %vm2477, %v2480, %v2482
    %v2484 = vsel %vm2476, %v2463, %v2466
    %v2485 = vsel %vm2479, %v2472, 920167782
    %v2486 = vsel %vm2478, %v2469, %v2485
    %v2487 = vsel %vm2477, %v2484, %v2486
    %v2488 = vsel %vm2476, %v2466, %v2469
    %v2489 = vsel %vm2479, %v2475, 1326507024
    %v2490 = vsel %vm2478, %v2472, %v2489
    %v2491 = vsel %vm2477, %v2488, %v2490
    %v2492 = vshll.u32 %v2452, 8
    %v2493 = vmul.u32.u64.compose %v2492, %v2491
    %v2494 = vextract.low.u32 %v2493
    %v2495 = vextract.high.u32 %v2493
    %v2496 = vmul.u32.u64.compose %v2492, %v2487
    %v2497 = vextract.low.u32 %v2496
    %v2498 = vextract.high.u32 %v2496
    %v2499 = vmul.u32 %v2492, %v2483
    %v2500 = vadd.s32 %v2495, %v2497
    %vm2501 = vc.u32 %v2495, %v2497
    %v2502 = vadd.s32 %v2498, 1
    %v2503 = vsel %vm2501, %v2502, %v2498
    %v2504 = vadd.s32 %v2499, %v2503
    %v2505 = vadd.s32 %v2504, 536870912
    %v2506 = vshrl.u32 %v2505, 30
    %v2507 = vshll.u32 %v2506, 30
    %v2508 = vsub.s32 %v2504, %v2507
    %vm2509 = vcmp.lt.s32.totalorder %v2508, 0
    %v2510 = vsub.s32 0, %v2508
    %v2511 = vsel %vm2509, %v2510, %v2508
    %v2512 = vclz %v2511
    %v2513 = vsub.s32 %v2512, 2
    %vm2514 = vcmp.gt.s32.totalorder 0, %v2513
    %v2515 = vsel %vm2514, 0, %v2513
    %v2516 = vsub.s32 32, %v2515
    %v2517 = vshll.u32 %v2508, %v2515
    %v2518 = vshrl.u32 %v2500, %v2516
    %v2519 = vor.u32 %v2517, %v2518
    %v2520 = vsub.s32 4294967266, %v2515
    %v2521 = vadd.s32 %v2520, 127
    %v2522 = vshll.u32 %v2521, 23
    %v2523 = vor.u32 4788187, %v2522
    %v2524 = vand.u32 2147483647, %v2523
    %v2526 = vcvt.s32.f32 %v2519
    %v2527 = vmul.f32 %v2526, %v2524
    %v2528 = vxor.u32 %v2527, 2147483648
    %v2529 = vsel %vm2446, %v2528, %v2527
    %v2530 = vsub.s32 4, %v2506
    %v2531 = vsel %vm2446, %v2530, %v2506
    %v2532 = vsel %vm2445, %v2127, %v2529
    %v2533 = vsel %vm2445, 0, %v2531
    %v2534 = vcosq.f32.pop %v2532
    %v2535 = vsinq.f32.pop %v2532
    %vm2536 = vweird.f32 %v2127
    %v2537 = vadd.s32 %v2533, 3
    %v2538 = vand.u32 %v2537, 3
    %vm2539 = vcmp.lt.s32.totalorder %v2538, 2
    %vm2540 = vcmp.eq.s32.totalorder %v2538, 0
    %v2541 = vxor.u32 %v2535, 2147483648
    %v2542 = vsel %vm2540, %v2534, %v2541
    %vm2543 = vcmp.eq.s32.totalorder %v2538, 2
    %v2544 = vxor.u32 %v2534, 2147483648
    %v2545 = vsel %vm2543, %v2544, %v2535
    %v2546 = vsel %vm2539, %v2542, %v2545
    %v2547 = vsel %vm2536, nan, %v2546
    %v2548 = vand.u32 2147483647, %v2128
    %vm2549 = vcmp.le.f32.partialorder %v2548, 0.7853982
    %vm2550 = vcmp.lt.s32.totalorder %v2128, 0
    %v2551 = vand.u32 %v2128, 2139095040
    %v2552 = vshrl.u32 %v2551, 23
    %v2553 = vsub.s32 %v2552, 127
    %v2554 = vand.u32 2147483647, %v2128
    %v2555 = vand.u32 %v2554, 8388607
    %v2556 = vor.u32 %v2555, 8388608
    %v2557 = vsub.s32 0, %v2556
    %v2558 = vadd.s32 %v2553, 1
    %vm2559 = vcmp.gt.s32.totalorder %v2558, 0
    %v2560 = vsel %vm2559, %v2558, 0
    %v2561 = vshrl.u32 %v2560, 5
    %v2562 = vand.u32 %v2560, 31
    %v2563 = vsub.s32 32, %v2562
    %v2564 = vshrl.u32 683565275, %v2563
    %v2565 = vshll.u32 683565275, %v2562
    %v2566 = vshrl.u32 2475754826, %v2563
    %v2567 = vor.u32 %v2565, %v2566
    %v2568 = vshll.u32 2475754826, %v2562
    %v2569 = vshrl.u32 2131351028, %v2563
    %v2570 = vor.u32 %v2568, %v2569
    %v2571 = vshll.u32 2131351028, %v2562
    %v2572 = vshrl.u32 2102212464, %v2563
    %v2573 = vor.u32 %v2571, %v2572
    %v2574 = vshll.u32 2102212464, %v2562
    %v2575 = vshrl.u32 920167782, %v2563
    %v2576 = vor.u32 %v2574, %v2575
    %v2577 = vshll.u32 920167782, %v2562
    %v2578 = vshrl.u32 1326507024, %v2563
    %v2579 = vor.u32 %v2577, %v2578
    %vm2580 = vcmp.lt.s32.totalorder %v2561, 1
    %vm2581 = vcmp.lt.s32.totalorder %v2561, 2
    %vm2582 = vcmp.lt.s32.totalorder %v2561, 3
    %vm2583 = vcmp.lt.s32.totalorder %v2561, 4
    %v2584 = vsel %vm2580, %v2564, %v2567
    %v2585 = vsel %vm2583, %v2573, 2102212464
    %v2586 = vsel %vm2582, %v2570, %v2585
    %v2587 = vsel %vm2581, %v2584, %v2586
    %v2588 = vsel %vm2580, %v2567, %v2570
    %v2589 = vsel %vm2583, %v2576, 920167782
    %v2590 = vsel %vm2582, %v2573, %v2589
    %v2591 = vsel %vm2581, %v2588, %v2590
    %v2592 = vsel %vm2580, %v2570, %v2573
    %v2593 = vsel %vm2583, %v2579, 1326507024
    %v2594 = vsel %vm2582, %v2576, %v2593
    %v2595 = vsel %vm2581, %v2592, %v2594
    %v2596 = vshll.u32 %v2556, 8
    %v2597 = vmul.u32.u64.compose %v2596, %v2595
    %v2598 = vextract.low.u32 %v2597
    %v2599 = vextract.high.u32 %v2597
    %v2600 = vmul.u32.u64.compose %v2596, %v2591
    %v2601 = vextract.low.u32 %v2600
    %v2602 = vextract.high.u32 %v2600
    %v2603 = vmul.u32 %v2596, %v2587
    %v2604 = vadd.s32 %v2599, %v2601
    %vm2605 = vc.u32 %v2599, %v2601
    %v2606 = vadd.s32 %v2602, 1
    %v2607 = vsel %vm2605, %v2606, %v2602
    %v2608 = vadd.s32 %v2603, %v2607
    %v2609 = vadd.s32 %v2608, 536870912
    %v2610 = vshrl.u32 %v2609, 30
    %v2611 = vshll.u32 %v2610, 30
    %v2612 = vsub.s32 %v2608, %v2611
    %vm2613 = vcmp.lt.s32.totalorder %v2612, 0
    %v2614 = vsub.s32 0, %v2612
    %v2615 = vsel %vm2613, %v2614, %v2612
    %v2616 = vclz %v2615
    %v2617 = vsub.s32 %v2616, 2
    %vm2618 = vcmp.gt.s32.totalorder 0, %v2617
    %v2619 = vsel %vm2618, 0, %v2617
    %v2620 = vsub.s32 32, %v2619
    %v2621 = vshll.u32 %v2612, %v2619
    %v2622 = vshrl.u32 %v2604, %v2620
    %v2623 = vor.u32 %v2621, %v2622
    %v2624 = vsub.s32 4294967266, %v2619
    %v2625 = vadd.s32 %v2624, 127
    %v2626 = vshll.u32 %v2625, 23
    %v2627 = vor.u32 4788187, %v2626
    %v2628 = vand.u32 2147483647, %v2627
    %v2630 = vcvt.s32.f32 %v2623
    %v2631 = vmul.f32 %v2630, %v2628
    %v2632 = vxor.u32 %v2631, 2147483648
    %v2633 = vsel %vm2550, %v2632, %v2631
    %v2634 = vsub.s32 4, %v2610
    %v2635 = vsel %vm2550, %v2634, %v2610
    %v2636 = vsel %vm2549, %v2128, %v2633
    %v2637 = vsel %vm2549, 0, %v2635
    %v2638 = vcosq.f32.pop %v2636
    %v2639 = vsinq.f32.pop %v2636
    %vm2640 = vweird.f32 %v2128
    %v2641 = vadd.s32 %v2637, 3
    %v2642 = vand.u32 %v2641, 3
    %vm2643 = vcmp.lt.s32.totalorder %v2642, 2
    %vm2644 = vcmp.eq.s32.totalorder %v2642, 0
    %v2645 = vxor.u32 %v2639, 2147483648
    %v2646 = vsel %vm2644, %v2638, %v2645
    %vm2647 = vcmp.eq.s32.totalorder %v2642, 2
    %v2648 = vxor.u32 %v2638, 2147483648
    %v2649 = vsel %vm2647, %v2648, %v2639
    %v2650 = vsel %vm2643, %v2646, %v2649
    %v2651 = vsel %vm2640, nan, %v2650
    %v2652 = vand.u32 2147483647, %v2129
    %vm2653 = vcmp.le.f32.partialorder %v2652, 0.7853982
    %vm2654 = vcmp.lt.s32.totalorder %v2129, 0
    %v2655 = vand.u32 %v2129, 2139095040
    %v2656 = vshrl.u32 %v2655, 23
    %v2657 = vsub.s32 %v2656, 127
    %v2658 = vand.u32 2147483647, %v2129
    %v2659 = vand.u32 %v2658, 8388607
    %v2660 = vor.u32 %v2659, 8388608
    %v2661 = vsub.s32 0, %v2660
    %v2662 = vadd.s32 %v2657, 1
    %vm2663 = vcmp.gt.s32.totalorder %v2662, 0
    %v2664 = vsel %vm2663, %v2662, 0
    %v2665 = vshrl.u32 %v2664, 5
    %v2666 = vand.u32 %v2664, 31
    %v2667 = vsub.s32 32, %v2666
    %v2668 = vshrl.u32 683565275, %v2667
    %v2669 = vshll.u32 683565275, %v2666
    %v2670 = vshrl.u32 2475754826, %v2667
    %v2671 = vor.u32 %v2669, %v2670
    %v2672 = vshll.u32 2475754826, %v2666
    %v2673 = vshrl.u32 2131351028, %v2667
    %v2674 = vor.u32 %v2672, %v2673
    %v2675 = vshll.u32 2131351028, %v2666
    %v2676 = vshrl.u32 2102212464, %v2667
    %v2677 = vor.u32 %v2675, %v2676
    %v2678 = vshll.u32 2102212464, %v2666
    %v2679 = vshrl.u32 920167782, %v2667
    %v2680 = vor.u32 %v2678, %v2679
    %v2681 = vshll.u32 920167782, %v2666
    %v2682 = vshrl.u32 1326507024, %v2667
    %v2683 = vor.u32 %v2681, %v2682
    %vm2684 = vcmp.lt.s32.totalorder %v2665, 1
    %vm2685 = vcmp.lt.s32.totalorder %v2665, 2
    %vm2686 = vcmp.lt.s32.totalorder %v2665, 3
    %vm2687 = vcmp.lt.s32.totalorder %v2665, 4
    %v2688 = vsel %vm2684, %v2668, %v2671
    %v2689 = vsel %vm2687, %v2677, 2102212464
    %v2690 = vsel %vm2686, %v2674, %v2689
    %v2691 = vsel %vm2685, %v2688, %v2690
    %v2692 = vsel %vm2684, %v2671, %v2674
    %v2693 = vsel %vm2687, %v2680, 920167782
    %v2694 = vsel %vm2686, %v2677, %v2693
    %v2695 = vsel %vm2685, %v2692, %v2694
    %v2696 = vsel %vm2684, %v2674, %v2677
    %v2697 = vsel %vm2687, %v2683, 1326507024
    %v2698 = vsel %vm2686, %v2680, %v2697
    %v2699 = vsel %vm2685, %v2696, %v2698
    %v2700 = vshll.u32 %v2660, 8
    %v2701 = vmul.u32.u64.compose %v2700, %v2699
    %v2702 = vextract.low.u32 %v2701
    %v2703 = vextract.high.u32 %v2701
    %v2704 = vmul.u32.u64.compose %v2700, %v2695
    %v2705 = vextract.low.u32 %v2704
    %v2706 = vextract.high.u32 %v2704
    %v2707 = vmul.u32 %v2700, %v2691
    %v2708 = vadd.s32 %v2703, %v2705
    %vm2709 = vc.u32 %v2703, %v2705
    %v2710 = vadd.s32 %v2706, 1
    %v2711 = vsel %vm2709, %v2710, %v2706
    %v2712 = vadd.s32 %v2707, %v2711
    %v2713 = vadd.s32 %v2712, 536870912
    %v2714 = vshrl.u32 %v2713, 30
    %v2715 = vshll.u32 %v2714, 30
    %v2716 = vsub.s32 %v2712, %v2715
    %vm2717 = vcmp.lt.s32.totalorder %v2716, 0
    %v2718 = vsub.s32 0, %v2716
    %v2719 = vsel %vm2717, %v2718, %v2716
    %v2720 = vclz %v2719
    %v2721 = vsub.s32 %v2720, 2
    %vm2722 = vcmp.gt.s32.totalorder 0, %v2721
    %v2723 = vsel %vm2722, 0, %v2721
    %v2724 = vsub.s32 32, %v2723
    %v2725 = vshll.u32 %v2716, %v2723
    %v2726 = vshrl.u32 %v2708, %v2724
    %v2727 = vor.u32 %v2725, %v2726
    %v2728 = vsub.s32 4294967266, %v2723
    %v2729 = vadd.s32 %v2728, 127
    %v2730 = vshll.u32 %v2729, 23
    %v2731 = vor.u32 4788187, %v2730
    %v2732 = vand.u32 2147483647, %v2731
    %v2734 = vcvt.s32.f32 %v2727
    %v2735 = vmul.f32 %v2734, %v2732
    %v2736 = vxor.u32 %v2735, 2147483648
    %v2737 = vsel %vm2654, %v2736, %v2735
    %v2738 = vsub.s32 4, %v2714
    %v2739 = vsel %vm2654, %v2738, %v2714
    %v2740 = vsel %vm2653, %v2129, %v2737
    %v2741 = vsel %vm2653, 0, %v2739
    %v2742 = vcosq.f32.pop %v2740
    %v2743 = vsinq.f32.pop %v2740
    %vm2744 = vweird.f32 %v2129
    %v2745 = vadd.s32 %v2741, 3
    %v2746 = vand.u32 %v2745, 3
    %vm2747 = vcmp.lt.s32.totalorder %v2746, 2
    %vm2748 = vcmp.eq.s32.totalorder %v2746, 0
    %v2749 = vxor.u32 %v2743, 2147483648
    %v2750 = vsel %vm2748, %v2742, %v2749
    %vm2751 = vcmp.eq.s32.totalorder %v2746, 2
    %v2752 = vxor.u32 %v2742, 2147483648
    %v2753 = vsel %vm2751, %v2752, %v2743
    %v2754 = vsel %vm2747, %v2750, %v2753
    %v2755 = vsel %vm2744, nan, %v2754
    %v2756 = vand.u32 2147483647, %v2130
    %vm2757 = vcmp.le.f32.partialorder %v2756, 0.7853982
    %vm2758 = vcmp.lt.s32.totalorder %v2130, 0
    %v2759 = vand.u32 %v2130, 2139095040
    %v2760 = vshrl.u32 %v2759, 23
    %v2761 = vsub.s32 %v2760, 127
    %v2762 = vand.u32 2147483647, %v2130
    %v2763 = vand.u32 %v2762, 8388607
    %v2764 = vor.u32 %v2763, 8388608
    %v2765 = vsub.s32 0, %v2764
    %v2766 = vadd.s32 %v2761, 1
    %vm2767 = vcmp.gt.s32.totalorder %v2766, 0
    %v2768 = vsel %vm2767, %v2766, 0
    %v2769 = vshrl.u32 %v2768, 5
    %v2770 = vand.u32 %v2768, 31
    %v2771 = vsub.s32 32, %v2770
    %v2772 = vshrl.u32 683565275, %v2771
    %v2773 = vshll.u32 683565275, %v2770
    %v2774 = vshrl.u32 2475754826, %v2771
    %v2775 = vor.u32 %v2773, %v2774
    %v2776 = vshll.u32 2475754826, %v2770
    %v2777 = vshrl.u32 2131351028, %v2771
    %v2778 = vor.u32 %v2776, %v2777
    %v2779 = vshll.u32 2131351028, %v2770
    %v2780 = vshrl.u32 2102212464, %v2771
    %v2781 = vor.u32 %v2779, %v2780
    %v2782 = vshll.u32 2102212464, %v2770
    %v2783 = vshrl.u32 920167782, %v2771
    %v2784 = vor.u32 %v2782, %v2783
    %v2785 = vshll.u32 920167782, %v2770
    %v2786 = vshrl.u32 1326507024, %v2771
    %v2787 = vor.u32 %v2785, %v2786
    %vm2788 = vcmp.lt.s32.totalorder %v2769, 1
    %vm2789 = vcmp.lt.s32.totalorder %v2769, 2
    %vm2790 = vcmp.lt.s32.totalorder %v2769, 3
    %vm2791 = vcmp.lt.s32.totalorder %v2769, 4
    %v2792 = vsel %vm2788, %v2772, %v2775
    %v2793 = vsel %vm2791, %v2781, 2102212464
    %v2794 = vsel %vm2790, %v2778, %v2793
    %v2795 = vsel %vm2789, %v2792, %v2794
    %v2796 = vsel %vm2788, %v2775, %v2778
    %v2797 = vsel %vm2791, %v2784, 920167782
    %v2798 = vsel %vm2790, %v2781, %v2797
    %v2799 = vsel %vm2789, %v2796, %v2798
    %v2800 = vsel %vm2788, %v2778, %v2781
    %v2801 = vsel %vm2791, %v2787, 1326507024
    %v2802 = vsel %vm2790, %v2784, %v2801
    %v2803 = vsel %vm2789, %v2800, %v2802
    %v2804 = vshll.u32 %v2764, 8
    %v2805 = vmul.u32.u64.compose %v2804, %v2803
    %v2806 = vextract.low.u32 %v2805
    %v2807 = vextract.high.u32 %v2805
    %v2808 = vmul.u32.u64.compose %v2804, %v2799
    %v2809 = vextract.low.u32 %v2808
    %v2810 = vextract.high.u32 %v2808
    %v2811 = vmul.u32 %v2804, %v2795
    %v2812 = vadd.s32 %v2807, %v2809
    %vm2813 = vc.u32 %v2807, %v2809
    %v2814 = vadd.s32 %v2810, 1
    %v2815 = vsel %vm2813, %v2814, %v2810
    %v2816 = vadd.s32 %v2811, %v2815
    %v2817 = vadd.s32 %v2816, 536870912
    %v2818 = vshrl.u32 %v2817, 30
    %v2819 = vshll.u32 %v2818, 30
    %v2820 = vsub.s32 %v2816, %v2819
    %vm2821 = vcmp.lt.s32.totalorder %v2820, 0
    %v2822 = vsub.s32 0, %v2820
    %v2823 = vsel %vm2821, %v2822, %v2820
    %v2824 = vclz %v2823
    %v2825 = vsub.s32 %v2824, 2
    %vm2826 = vcmp.gt.s32.totalorder 0, %v2825
    %v2827 = vsel %vm2826, 0, %v2825
    %v2828 = vsub.s32 32, %v2827
    %v2829 = vshll.u32 %v2820, %v2827
    %v2830 = vshrl.u32 %v2812, %v2828
    %v2831 = vor.u32 %v2829, %v2830
    %v2832 = vsub.s32 4294967266, %v2827
    %v2833 = vadd.s32 %v2832, 127
    %v2834 = vshll.u32 %v2833, 23
    %v2835 = vor.u32 4788187, %v2834
    %v2836 = vand.u32 2147483647, %v2835
    %v2838 = vcvt.s32.f32 %v2831
    %v2839 = vmul.f32 %v2838, %v2836
    %v2840 = vxor.u32 %v2839, 2147483648
    %v2841 = vsel %vm2758, %v2840, %v2839
    %v2842 = vsub.s32 4, %v2818
    %v2843 = vsel %vm2758, %v2842, %v2818
    %v2844 = vsel %vm2757, %v2130, %v2841
    %v2845 = vsel %vm2757, 0, %v2843
    %v2846 = vcosq.f32.pop %v2844
    %v2847 = vsinq.f32.pop %v2844
    %vm2848 = vweird.f32 %v2130
    %v2849 = vadd.s32 %v2845, 3
    %v2850 = vand.u32 %v2849, 3
    %vm2851 = vcmp.lt.s32.totalorder %v2850, 2
    %vm2852 = vcmp.eq.s32.totalorder %v2850, 0
    %v2853 = vxor.u32 %v2847, 2147483648
    %v2854 = vsel %vm2852, %v2846, %v2853
    %vm2855 = vcmp.eq.s32.totalorder %v2850, 2
    %v2856 = vxor.u32 %v2846, 2147483648
    %v2857 = vsel %vm2855, %v2856, %v2847
    %v2858 = vsel %vm2851, %v2854, %v2857
    %v2859 = vsel %vm2848, nan, %v2858
    %v2860 = vand.u32 2147483647, %v2131
    %vm2861 = vcmp.le.f32.partialorder %v2860, 0.7853982
    %vm2862 = vcmp.lt.s32.totalorder %v2131, 0
    %v2863 = vand.u32 %v2131, 2139095040
    %v2864 = vshrl.u32 %v2863, 23
    %v2865 = vsub.s32 %v2864, 127
    %v2866 = vand.u32 2147483647, %v2131
    %v2867 = vand.u32 %v2866, 8388607
    %v2868 = vor.u32 %v2867, 8388608
    %v2869 = vsub.s32 0, %v2868
    %v2870 = vadd.s32 %v2865, 1
    %vm2871 = vcmp.gt.s32.totalorder %v2870, 0
    %v2872 = vsel %vm2871, %v2870, 0
    %v2873 = vshrl.u32 %v2872, 5
    %v2874 = vand.u32 %v2872, 31
    %v2875 = vsub.s32 32, %v2874
    %v2876 = vshrl.u32 683565275, %v2875
    %v2877 = vshll.u32 683565275, %v2874
    %v2878 = vshrl.u32 2475754826, %v2875
    %v2879 = vor.u32 %v2877, %v2878
    %v2880 = vshll.u32 2475754826, %v2874
    %v2881 = vshrl.u32 2131351028, %v2875
    %v2882 = vor.u32 %v2880, %v2881
    %v2883 = vshll.u32 2131351028, %v2874
    %v2884 = vshrl.u32 2102212464, %v2875
    %v2885 = vor.u32 %v2883, %v2884
    %v2886 = vshll.u32 2102212464, %v2874
    %v2887 = vshrl.u32 920167782, %v2875
    %v2888 = vor.u32 %v2886, %v2887
    %v2889 = vshll.u32 920167782, %v2874
    %v2890 = vshrl.u32 1326507024, %v2875
    %v2891 = vor.u32 %v2889, %v2890
    %vm2892 = vcmp.lt.s32.totalorder %v2873, 1
    %vm2893 = vcmp.lt.s32.totalorder %v2873, 2
    %vm2894 = vcmp.lt.s32.totalorder %v2873, 3
    %vm2895 = vcmp.lt.s32.totalorder %v2873, 4
    %v2896 = vsel %vm2892, %v2876, %v2879
    %v2897 = vsel %vm2895, %v2885, 2102212464
    %v2898 = vsel %vm2894, %v2882, %v2897
    %v2899 = vsel %vm2893, %v2896, %v2898
    %v2900 = vsel %vm2892, %v2879, %v2882
    %v2901 = vsel %vm2895, %v2888, 920167782
    %v2902 = vsel %vm2894, %v2885, %v2901
    %v2903 = vsel %vm2893, %v2900, %v2902
    %v2904 = vsel %vm2892, %v2882, %v2885
    %v2905 = vsel %vm2895, %v2891, 1326507024
    %v2906 = vsel %vm2894, %v2888, %v2905
    %v2907 = vsel %vm2893, %v2904, %v2906
    %v2908 = vshll.u32 %v2868, 8
    %v2909 = vmul.u32.u64.compose %v2908, %v2907
    %v2910 = vextract.low.u32 %v2909
    %v2911 = vextract.high.u32 %v2909
    %v2912 = vmul.u32.u64.compose %v2908, %v2903
    %v2913 = vextract.low.u32 %v2912
    %v2914 = vextract.high.u32 %v2912
    %v2915 = vmul.u32 %v2908, %v2899
    %v2916 = vadd.s32 %v2911, %v2913
    %vm2917 = vc.u32 %v2911, %v2913
    %v2918 = vadd.s32 %v2914, 1
    %v2919 = vsel %vm2917, %v2918, %v2914
    %v2920 = vadd.s32 %v2915, %v2919
    %v2921 = vadd.s32 %v2920, 536870912
    %v2922 = vshrl.u32 %v2921, 30
    %v2923 = vshll.u32 %v2922, 30
    %v2924 = vsub.s32 %v2920, %v2923
    %vm2925 = vcmp.lt.s32.totalorder %v2924, 0
    %v2926 = vsub.s32 0, %v2924
    %v2927 = vsel %vm2925, %v2926, %v2924
    %v2928 = vclz %v2927
    %v2929 = vsub.s32 %v2928, 2
    %vm2930 = vcmp.gt.s32.totalorder 0, %v2929
    %v2931 = vsel %vm2930, 0, %v2929
    %v2932 = vsub.s32 32, %v2931
    %v2933 = vshll.u32 %v2924, %v2931
    %v2934 = vshrl.u32 %v2916, %v2932
    %v2935 = vor.u32 %v2933, %v2934
    %v2936 = vsub.s32 4294967266, %v2931
    %v2937 = vadd.s32 %v2936, 127
    %v2938 = vshll.u32 %v2937, 23
    %v2939 = vor.u32 4788187, %v2938
    %v2940 = vand.u32 2147483647, %v2939
    %v2942 = vcvt.s32.f32 %v2935
    %v2943 = vmul.f32 %v2942, %v2940
    %v2944 = vxor.u32 %v2943, 2147483648
    %v2945 = vsel %vm2862, %v2944, %v2943
    %v2946 = vsub.s32 4, %v2922
    %v2947 = vsel %vm2862, %v2946, %v2922
    %v2948 = vsel %vm2861, %v2131, %v2945
    %v2949 = vsel %vm2861, 0, %v2947
    %v2950 = vcosq.f32.pop %v2948
    %v2951 = vsinq.f32.pop %v2948
    %vm2952 = vweird.f32 %v2131
    %v2953 = vadd.s32 %v2949, 3
    %v2954 = vand.u32 %v2953, 3
    %vm2955 = vcmp.lt.s32.totalorder %v2954, 2
    %vm2956 = vcmp.eq.s32.totalorder %v2954, 0
    %v2957 = vxor.u32 %v2951, 2147483648
    %v2958 = vsel %vm2956, %v2950, %v2957
    %vm2959 = vcmp.eq.s32.totalorder %v2954, 2
    %v2960 = vxor.u32 %v2950, 2147483648
    %v2961 = vsel %vm2959, %v2960, %v2951
    %v2962 = vsel %vm2955, %v2958, %v2961
    %v2963 = vsel %vm2952, nan, %v2962
    %v2964 = vmul.f32 %v2235, 1.4142135
    %v2965 = vmul.f32 %v2339, 1.4142135
    %v2966 = vmul.f32 %v2443, 1.4142135
    %v2967 = vmul.f32 %v2547, 1.4142135
    %v2968 = vmul.f32 %v2651, 1.4142135
    %v2969 = vmul.f32 %v2755, 1.4142135
    %v2970 = vmul.f32 %v2859, 1.4142135
    %v2971 = vmul.f32 %v2963, 1.4142135
    %v2972 = vld [vmem:[%s7] sm:$0xff]
    %v2973 = vld [vmem:[%s7 + $0x8] sm:$0xff]
    %v2974 = vld [vmem:[%s7 + $0x10] sm:$0xff]
    %v2975 = vld [vmem:[%s7 + $0x18] sm:$0xff]
    %v2976 = vld [vmem:[#allocation2] sm:$0x1]
    %2978 = vset.pattern.permute.xlu0 0
    %2979 = vperm.xlu0 %2978, %v2972
    %v2980 = vpop.permute.xlu0 %2979
    %2983 = vset.pattern.permute.xlu0 0
    %2984 = vperm.xlu0 %2983, %v2973
    %v2985 = vpop.permute.xlu0 %2984
    %2988 = vset.pattern.permute.xlu0 0
    %2989 = vperm.xlu0 %2988, %v2974
    %v2990 = vpop.permute.xlu0 %2989
    %2993 = vset.pattern.permute.xlu0 0
    %2994 = vperm.xlu0 %2993, %v2975
    %v2995 = vpop.permute.xlu0 %2994
    %v2997 = vmul.f32 %v2980, %v2964
    %v2998 = vmul.f32 %v2980, %v2965
    %v2999 = vmul.f32 %v2985, %v2966
    %v3000 = vmul.f32 %v2985, %v2967
    %v3001 = vmul.f32 %v2990, %v2968
    %v3002 = vmul.f32 %v2990, %v2969
    %v3003 = vmul.f32 %v2995, %v2970
    %v3004 = vmul.f32 %v2995, %v2971
    %v3005 = vadd.f32 %v2997, %v2999
    %v3006 = vadd.f32 %v3005, %v3001
    %v3007 = vadd.f32 %v3006, %v3003
    %v3008 = vrot.slane %v3007, 4
    %v3009 = vadd.f32 %v3007, %v3008
    %v3010 = vrot.slane %v3009, 2
    %v3011 = vadd.f32 %v3009, %v3010
    %v3012 = vrot.slane %v3011, 1
    %v3013 = vadd.f32 %v3011, %v3012
    %v3014 = vadd.f32 %v2998, %v3000
    %v3015 = vadd.f32 %v3014, %v3002
    %v3016 = vadd.f32 %v3015, %v3004
    %v3017 = vrot.slane %v3016, 4
    %v3018 = vadd.f32 %v3016, %v3017
    %v3019 = vrot.slane %v3018, 2
    %v3020 = vadd.f32 %v3018, %v3019
    %v3021 = vrot.slane %v3020, 1
    %v3022 = vadd.f32 %v3020, %v3021
    %3024 = vset.pattern.permute.xlu0 0
    %3025 = vperm.xlu0 %3024, %v2976
    %v3026 = vpop.permute.xlu0 %3025
    %v3028 = vlaneseq
    %v3029 = vshrl.u32 %v3028, 7
    %v3030 = vsub.s32 0, %v3029
    %v3031 = vrot.slane %v3026, %v3030
    %v3032 = vadd.f32 %v3013, %v3031
    %v3033 = vadd.f32 %v3022, %v3031
    %v3036 = vcombine.low %v3032, %v3033
    %v3038 = vunpack.c.l.s4 1966171168
    %v3039 = vunpack.c.0.s8 %v3038
    %v3040 = vlaneseq
    %v3041 = vshrl.u32 %v3040, 7
    %v3042 = vsub.s32 %v3039, %v3041
    %v3043 = vrot.slane %v3036, %v3042
    %v3045 = vunpack.c.l.s4 1966171168
    %v3046 = vunpack.c.0.s8 %v3045
    %v3047 = vlaneseq
    %v3048 = vshrl.u32 %v3047, 7
    %v3049 = vsub.s32 %v3046, %v3048
    %v3050 = vrot.slane %v3043, %v3049
    %v3052 = vlaneseq
    %vm3053 = vcmp.ge.s32.totalorder %v3052, 0
    %vm3054 = vcmp.lt.s32.totalorder %v3052, 256
    %vm3055 = vmand %vm3053, %vm3054
    %3056 = vst.msk [vmem:[#allocation3] sm:$0x3] %vm3055, %v3050
    // Predicated region
    $region38: #{tpu_custom_call.1} parent=1 // pred_check
      _
    $region39: #{tpu_custom_call.1} parent=1 // pred_check_branch
      %3058 = sbr.rel (0) target = $region41
    $region40: #{tpu_custom_call.1} parent=1 // pred_region
      %s3060 = ssub.s32 32, 32
      %3061 = vsyncadd [#allocation4], %s3060
      %s3063 = sshll.u32 [#allocation3], 4
      %s3064 = int_to_ptr.vmem [resolvable:$true] %s3063
      %3066 = dma.vmem_to_hbm [thread:$0]  %s3064, 32, %s9, [#allocation4]
    $region41: #{tpu_custom_call.1} parent=1 // pred_fallthru
      _
    // Predicated region
    $region42: #{tpu_custom_call.1} parent=1 // pred_check
      _
    $region43: #{tpu_custom_call.1} parent=1 // pred_check_branch
      %3068 = sbr.rel (0) target = $region45
    $region44: #{tpu_custom_call.1} parent=1 // pred_region
      %3069 = dma.done [#allocation4], 32
    $region45: #{tpu_custom_call.1} parent=1 // pred_fallthru
      _
    %3070 = vsyncpa [#allocation4], 1

// kernel: tpu_custom_call.1
$region0: #{tpu_custom_call.1}
  #allocation0 [shape = 'u32[]', space=smem, size = 0x4, offset = 0x4, fixed_abs, tag = 'smem constant byte address 0x4 - core index']
  #allocation1 [shape = 'u32[144,128]{1,0:T(1,128)}', space=vmem, size = 0x12000, scoped, tag = 'internal scratch']
  #allocation2 [shape = 'f32[1,1]{1,0:T(1,128)S(1)}', space=vmem, size = 0x200, scoped, tag = 'scoped memory for tpu_custom_call.1']
  %s0 = inlined_call_operand.vmem [shape: f32[2,256], index: 0, kind: input, shape index: {}]
  %s1 = inlined_call_operand.vmem [shape: f32[32,2], index: 1, kind: input, shape index: {}]
  %s2 = inlined_call_operand.vmem [shape: f32[32,1], index: 2, kind: input, shape index: {}]
  %s3 = inlined_call_operand.vmem [shape: f32[32,32], index: 3, kind: input, shape index: {}]
  %s4 = inlined_call_operand.vmem [shape: f32[32,1], index: 4, kind: input, shape index: {}]
  %s5 = inlined_call_operand.vmem [shape: f32[32,32], index: 5, kind: input, shape index: {}]
  %s6 = inlined_call_operand.vmem [shape: f32[32,1], index: 6, kind: input, shape index: {}]
  %s7 = inlined_call_operand.vmem [shape: f32[32,1], index: 7, kind: input, shape index: {}]
  %s8 = inlined_call_operand.<no memory space> [shape: f32[1,1], index: 8, kind: input, shape index: {}]
  %s9 = inlined_call_operand.hbm [shape: f32[1,256], index: 9, kind: output, shape index: {}]
  %s10 = sld [smem:[#allocation0]]
  $region46: #{tpu_custom_call.1} parent=0
    _
  %s12 = ssub.s32 1, %s10
  %s13 = scalar_select 0, %s12, %s10
  %v14 = vstv %s8
  %15 = vst [vmem:[#allocation2] sm:$0x1] %v14
  $region1: #{tpu_custom_call.1} parent=0
    #allocation3 [shape = 'u8[1024]{0}', space=vmem, size = 0x400, scoped, tag = 'output window, operand 0, single buffered']
    #allocation4 [shape = 's32[1]{0}', space=sflag, size = 0x4, scoped, tag = 'scoped memory for tpu_custom_call.1']
    %16 = vsyncpa [#allocation4], 0
    // Predicated region
    $region2: #{tpu_custom_call.1} parent=1 // pred_check
      _
    $region3: #{tpu_custom_call.1} parent=1 // pred_check_branch
      %18 = sbr.rel (0) target = $region5
    $region4: #{tpu_custom_call.1} parent=1 // pred_region
      _
    $region5: #{tpu_custom_call.1} parent=1 // pred_fallthru
      _
    // Predicated region
    $region6: #{tpu_custom_call.1} parent=1 // pred_check
      _
    $region7: #{tpu_custom_call.1} parent=1 // pred_check_branch
      %20 = sbr.rel (0) target = $region9
    $region8: #{tpu_custom_call.1} parent=1 // pred_region
      _
    $region9: #{tpu_custom_call.1} parent=1 // pred_fallthru
      _
    // Predicated region
    $region10: #{tpu_custom_call.1} parent=1 // pred_check
      _
    $region11: #{tpu_custom_call.1} parent=1 // pred_check_branch
      %22 = sbr.rel (0) target = $region13
    $region12: #{tpu_custom_call.1} parent=1 // pred_region
      _
    $region13: #{tpu_custom_call.1} parent=1 // pred_fallthru
      _
    // Predicated region
    $region14: #{tpu_custom_call.1} parent=1 // pred_check
      _
    $region15: #{tpu_custom_call.1} parent=1 // pred_check_branch
      %24 = sbr.rel (0) target = $region17
    $region16: #{tpu_custom_call.1} parent=1 // pred_region
      _
    $region17: #{tpu_custom_call.1} parent=1 // pred_fallthru
      _
    // Predicated region
    $region18: #{tpu_custom_call.1} parent=1 // pred_check
      _
    $region19: #{tpu_custom_call.1} parent=1 // pred_check_branch
      %26 = sbr.rel (0) target = $region21
    $region20: #{tpu_custom_call.1} parent=1 // pred_region
      _
    $region21: #{tpu_custom_call.1} parent=1 // pred_fallthru
      _
    // Predicated region
    $region22: #{tpu_custom_call.1} parent=1 // pred_check
      _
    $region23: #{tpu_custom_call.1} parent=1 // pred_check_branch
      %28 = sbr.rel (0) target = $region25
    $region24: #{tpu_custom_call.1} parent=1 // pred_region
      _
    $region25: #{tpu_custom_call.1} parent=1 // pred_fallthru
      _
    // Predicated region
    $region26: #{tpu_custom_call.1} parent=1 // pred_check
      _
    $region27: #{tpu_custom_call.1} parent=1 // pred_check_branch
      %30 = sbr.rel (0) target = $region29
    $region28: #{tpu_custom_call.1} parent=1 // pred_region
      _
    $region29: #{tpu_custom_call.1} parent=1 // pred_fallthru
      _
    // Predicated region
    $region30: #{tpu_custom_call.1} parent=1 // pred_check
      _
    $region31: #{tpu_custom_call.1} parent=1 // pred_check_branch
      %32 = sbr.rel (0) target = $region33
    $region32: #{tpu_custom_call.1} parent=1 // pred_region
      _
    $region33: #{tpu_custom_call.1} parent=1 // pred_fallthru
      _
    // Predicated region
    $region34: #{tpu_custom_call.1} parent=1 // pred_check
      _
    $region35: #{tpu_custom_call.1} parent=1 // pred_check_branch
      %34 = sbr.rel (0) target = $region37
    $region36: #{tpu_custom_call.1} parent=1 // pred_region
      _
    $region37: #{tpu_custom_call.1} parent=1 // pred_fallthru
      _
    %v35 = vld [vmem:[%s0] sm:$0xf]
    %v36 = vld [vmem:[%s1] sm:$0xff]
    %v37 = vld [vmem:[%s1 + $0x8] sm:$0xff]
    %v38 = vld [vmem:[%s1 + $0x10] sm:$0xff]
    %v39 = vld [vmem:[%s1 + $0x18] sm:$0xff]
    %v40 = vld [vmem:[%s2] sm:$0xff]
    %v41 = vld [vmem:[%s2 + $0x8] sm:$0xff]
    %v42 = vld [vmem:[%s2 + $0x10] sm:$0xff]
    %v43 = vld [vmem:[%s2 + $0x18] sm:$0xff]
    %45 = vset.pattern.permute.xlu0 0
    %46 = vperm.xlu0 %45, %v36
    %v47 = vpop.permute.xlu0 %46
    %50 = vset.pattern.permute.xlu0 0
    %51 = vperm.xlu0 %50, %v37
    %v52 = vpop.permute.xlu0 %51
    %55 = vset.pattern.permute.xlu0 0
    %56 = vperm.xlu0 %55, %v38
    %v57 = vpop.permute.xlu0 %56
    %60 = vset.pattern.permute.xlu0 0
    %61 = vperm.xlu0 %60, %v39
    %v62 = vpop.permute.xlu0 %61
    %v65 = vlaneseq
    %v66 = vshrl.u32 %v65, 7
    %v67 = vsub.s32 0, %v66
    %v68 = vrot.slane %v35, %v67
    %v69 = vlaneseq
    %v70 = vshrl.u32 %v69, 7
    %v71 = vsub.s32 2, %v70
    %v72 = vrot.slane %v35, %v71
    %v75 = vlaneseq
    %v76 = vshrl.u32 %v75, 7
    %v77 = vsub.s32 0, %v76
    %v78 = vrot.slane %v68, %v77
    %v79 = vlaneseq
    %v80 = vshrl.u32 %v79, 7
    %v81 = vsub.s32 0, %v80
    %v82 = vrot.slane %v72, %v81
    %v83 = vmul.f32 %v47, %v78
    %v84 = vmul.f32 %v47, %v82
    %v85 = vmul.f32 %v52, %v78
    %v86 = vmul.f32 %v52, %v82
    %v87 = vmul.f32 %v57, %v78
    %v88 = vmul.f32 %v57, %v82
    %v89 = vmul.f32 %v62, %v78
    %v90 = vmul.f32 %v62, %v82
    %91 = vset.pattern.permute.xlu0 1
    %92 = vperm.xlu0 %91, %v36
    %v93 = vpop.permute.xlu0 %92
    %95 = vset.pattern.permute.xlu0 1
    %96 = vperm.xlu0 %95, %v37
    %v97 = vpop.permute.xlu0 %96
    %99 = vset.pattern.permute.xlu0 1
    %100 = vperm.xlu0 %99, %v38
    %v101 = vpop.permute.xlu0 %100
    %103 = vset.pattern.permute.xlu0 1
    %104 = vperm.xlu0 %103, %v39
    %v105 = vpop.permute.xlu0 %104
    %v107 = vlaneseq
    %v108 = vshrl.u32 %v107, 7
    %v109 = vsub.s32 1, %v108
    %v110 = vrot.slane %v35, %v109
    %v111 = vlaneseq
    %v112 = vshrl.u32 %v111, 7
    %v113 = vsub.s32 3, %v112
    %v114 = vrot.slane %v35, %v113
    %v117 = vlaneseq
    %v118 = vshrl.u32 %v117, 7
    %v119 = vsub.s32 1, %v118
    %v120 = vrot.slane %v110, %v119
    %v121 = vlaneseq
    %v122 = vshrl.u32 %v121, 7
    %v123 = vsub.s32 1, %v122
    %v124 = vrot.slane %v114, %v123
    %v125 = vmul.f32 %v93, %v120
    %v126 = vmul.f32 %v93, %v124
    %v127 = vmul.f32 %v97, %v120
    %v128 = vmul.f32 %v97, %v124
    %v129 = vmul.f32 %v101, %v120
    %v130 = vmul.f32 %v101, %v124
    %v131 = vmul.f32 %v105, %v120
    %v132 = vmul.f32 %v105, %v124
    %v133 = vadd.f32 %v83, %v125
    %v134 = vadd.f32 %v84, %v126
    %v135 = vadd.f32 %v85, %v127
    %v136 = vadd.f32 %v86, %v128
    %v137 = vadd.f32 %v87, %v129
    %v138 = vadd.f32 %v88, %v130
    %v139 = vadd.f32 %v89, %v131
    %v140 = vadd.f32 %v90, %v132
    %142 = vset.pattern.permute.xlu0 0
    %143 = vperm.xlu0 %142, %v40
    %v144 = vpop.permute.xlu0 %143
    %147 = vset.pattern.permute.xlu0 0
    %148 = vperm.xlu0 %147, %v41
    %v149 = vpop.permute.xlu0 %148
    %152 = vset.pattern.permute.xlu0 0
    %153 = vperm.xlu0 %152, %v42
    %v154 = vpop.permute.xlu0 %153
    %157 = vset.pattern.permute.xlu0 0
    %158 = vperm.xlu0 %157, %v43
    %v159 = vpop.permute.xlu0 %158
    %v161 = vadd.f32 %v133, %v144
    %v162 = vadd.f32 %v134, %v144
    %v163 = vadd.f32 %v135, %v149
    %v164 = vadd.f32 %v136, %v149
    %v165 = vadd.f32 %v137, %v154
    %v166 = vadd.f32 %v138, %v154
    %v167 = vadd.f32 %v139, %v159
    %v168 = vadd.f32 %v140, %v159
    %v169 = vadd.f32 %v161, 0.7853982
    %v170 = vadd.f32 %v162, 0.7853982
    %v171 = vadd.f32 %v163, 0.7853982
    %v172 = vadd.f32 %v164, 0.7853982
    %v173 = vadd.f32 %v165, 0.7853982
    %v174 = vadd.f32 %v166, 0.7853982
    %v175 = vadd.f32 %v167, 0.7853982
    %v176 = vadd.f32 %v168, 0.7853982
    %v177 = vand.u32 2147483647, %v169
    %vm178 = vcmp.le.f32.partialorder %v177, 0.7853982
    %vm179 = vcmp.lt.s32.totalorder %v169, 0
    %v180 = vand.u32 %v169, 2139095040
    %v181 = vshrl.u32 %v180, 23
    %v182 = vsub.s32 %v181, 127
    %v183 = vand.u32 2147483647, %v169
    %v184 = vand.u32 %v183, 8388607
    %v185 = vor.u32 %v184, 8388608
    %v186 = vsub.s32 0, %v185
    %v187 = vadd.s32 %v182, 1
    %vm188 = vcmp.gt.s32.totalorder %v187, 0
    %v189 = vsel %vm188, %v187, 0
    %v190 = vshrl.u32 %v189, 5
    %v191 = vand.u32 %v189, 31
    %v192 = vsub.s32 32, %v191
    %v193 = vshrl.u32 683565275, %v192
    %v194 = vshll.u32 683565275, %v191
    %v195 = vshrl.u32 2475754826, %v192
    %v196 = vor.u32 %v194, %v195
    %v197 = vshll.u32 2475754826, %v191
    %v198 = vshrl.u32 2131351028, %v192
    %v199 = vor.u32 %v197, %v198
    %v200 = vshll.u32 2131351028, %v191
    %v201 = vshrl.u32 2102212464, %v192
    %v202 = vor.u32 %v200, %v201
    %v203 = vshll.u32 2102212464, %v191
    %v204 = vshrl.u32 920167782, %v192
    %v205 = vor.u32 %v203, %v204
    %v206 = vshll.u32 920167782, %v191
    %v207 = vshrl.u32 1326507024, %v192
    %v208 = vor.u32 %v206, %v207
    %vm209 = vcmp.lt.s32.totalorder %v190, 1
    %vm210 = vcmp.lt.s32.totalorder %v190, 2
    %vm211 = vcmp.lt.s32.totalorder %v190, 3
    %vm212 = vcmp.lt.s32.totalorder %v190, 4
    %v213 = vsel %vm209, %v193, %v196
    %v214 = vsel %vm212, %v202, 2102212464
    %v215 = vsel %vm211, %v199, %v214
    %v216 = vsel %vm210, %v213, %v215
    %v217 = vsel %vm209, %v196, %v199
    %v218 = vsel %vm212, %v205, 920167782
    %v219 = vsel %vm211, %v202, %v218
    %v220 = vsel %vm210, %v217, %v219
    %v221 = vsel %vm209, %v199, %v202
    %v222 = vsel %vm212, %v208, 1326507024
    %v223 = vsel %vm211, %v205, %v222
    %v224 = vsel %vm210, %v221, %v223
    %v225 = vshll.u32 %v185, 8
    %v226 = vmul.u32.u64.compose %v225, %v224
    %v227 = vextract.low.u32 %v226
    %v228 = vextract.high.u32 %v226
    %v229 = vmul.u32.u64.compose %v225, %v220
    %v230 = vextract.low.u32 %v229
    %v231 = vextract.high.u32 %v229
    %v232 = vmul.u32 %v225, %v216
    %v233 = vadd.s32 %v228, %v230
    %vm234 = vc.u32 %v228, %v230
    %v235 = vadd.s32 %v231, 1
    %v236 = vsel %vm234, %v235, %v231
    %v237 = vadd.s32 %v232, %v236
    %v238 = vadd.s32 %v237, 536870912
    %v239 = vshrl.u32 %v238, 30
    %v240 = vshll.u32 %v239, 30
    %v241 = vsub.s32 %v237, %v240
    %vm242 = vcmp.lt.s32.totalorder %v241, 0
    %v243 = vsub.s32 0, %v241
    %v244 = vsel %vm242, %v243, %v241
    %v245 = vclz %v244
    %v246 = vsub.s32 %v245, 2
    %vm247 = vcmp.gt.s32.totalorder 0, %v246
    %v248 = vsel %vm247, 0, %v246
    %v249 = vsub.s32 32, %v248
    %v250 = vshll.u32 %v241, %v248
    %v251 = vshrl.u32 %v233, %v249
    %v252 = vor.u32 %v250, %v251
    %v253 = vsub.s32 4294967266, %v248
    %v254 = vadd.s32 %v253, 127
    %v255 = vshll.u32 %v254, 23
    %v256 = vor.u32 4788187, %v255
    %v257 = vand.u32 2147483647, %v256
    %v259 = vcvt.s32.f32 %v252
    %v260 = vmul.f32 %v259, %v257
    %v261 = vxor.u32 %v260, 2147483648
    %v262 = vsel %vm179, %v261, %v260
    %v263 = vsub.s32 4, %v239
    %v264 = vsel %vm179, %v263, %v239
    %v265 = vsel %vm178, %v169, %v262
    %v266 = vsel %vm178, 0, %v264
    %v267 = vcosq.f32.pop %v265
    %v268 = vsinq.f32.pop %v265
    %vm269 = vweird.f32 %v169
    %v270 = vadd.s32 %v266, 3
    %v271 = vand.u32 %v270, 3
    %vm272 = vcmp.lt.s32.totalorder %v271, 2
    %vm273 = vcmp.eq.s32.totalorder %v271, 0
    %v274 = vxor.u32 %v268, 2147483648
    %v275 = vsel %vm273, %v267, %v274
    %vm276 = vcmp.eq.s32.totalorder %v271, 2
    %v277 = vxor.u32 %v267, 2147483648
    %v278 = vsel %vm276, %v277, %v268
    %v279 = vsel %vm272, %v275, %v278
    %v280 = vsel %vm269, nan, %v279
    %v281 = vand.u32 2147483647, %v170
    %vm282 = vcmp.le.f32.partialorder %v281, 0.7853982
    %vm283 = vcmp.lt.s32.totalorder %v170, 0
    %v284 = vand.u32 %v170, 2139095040
    %v285 = vshrl.u32 %v284, 23
    %v286 = vsub.s32 %v285, 127
    %v287 = vand.u32 2147483647, %v170
    %v288 = vand.u32 %v287, 8388607
    %v289 = vor.u32 %v288, 8388608
    %v290 = vsub.s32 0, %v289
    %v291 = vadd.s32 %v286, 1
    %vm292 = vcmp.gt.s32.totalorder %v291, 0
    %v293 = vsel %vm292, %v291, 0
    %v294 = vshrl.u32 %v293, 5
    %v295 = vand.u32 %v293, 31
    %v296 = vsub.s32 32, %v295
    %v297 = vshrl.u32 683565275, %v296
    %v298 = vshll.u32 683565275, %v295
    %v299 = vshrl.u32 2475754826, %v296
    %v300 = vor.u32 %v298, %v299
    %v301 = vshll.u32 2475754826, %v295
    %v302 = vshrl.u32 2131351028, %v296
    %v303 = vor.u32 %v301, %v302
    %v304 = vshll.u32 2131351028, %v295
    %v305 = vshrl.u32 2102212464, %v296
    %v306 = vor.u32 %v304, %v305
    %v307 = vshll.u32 2102212464, %v295
    %v308 = vshrl.u32 920167782, %v296
    %v309 = vor.u32 %v307, %v308
    %v310 = vshll.u32 920167782, %v295
    %v311 = vshrl.u32 1326507024, %v296
    %v312 = vor.u32 %v310, %v311
    %vm313 = vcmp.lt.s32.totalorder %v294, 1
    %vm314 = vcmp.lt.s32.totalorder %v294, 2
    %vm315 = vcmp.lt.s32.totalorder %v294, 3
    %vm316 = vcmp.lt.s32.totalorder %v294, 4
    %v317 = vsel %vm313, %v297, %v300
    %v318 = vsel %vm316, %v306, 2102212464
    %v319 = vsel %vm315, %v303, %v318
    %v320 = vsel %vm314, %v317, %v319
    %v321 = vsel %vm313, %v300, %v303
    %v322 = vsel %vm316, %v309, 920167782
    %v323 = vsel %vm315, %v306, %v322
    %v324 = vsel %vm314, %v321, %v323
    %v325 = vsel %vm313, %v303, %v306
    %v326 = vsel %vm316, %v312, 1326507024
    %v327 = vsel %vm315, %v309, %v326
    %v328 = vsel %vm314, %v325, %v327
    %v329 = vshll.u32 %v289, 8
    %v330 = vmul.u32.u64.compose %v329, %v328
    %v331 = vextract.low.u32 %v330
    %v332 = vextract.high.u32 %v330
    %v333 = vmul.u32.u64.compose %v329, %v324
    %v334 = vextract.low.u32 %v333
    %v335 = vextract.high.u32 %v333
    %v336 = vmul.u32 %v329, %v320
    %v337 = vadd.s32 %v332, %v334
    %vm338 = vc.u32 %v332, %v334
    %v339 = vadd.s32 %v335, 1
    %v340 = vsel %vm338, %v339, %v335
    %v341 = vadd.s32 %v336, %v340
    %v342 = vadd.s32 %v341, 536870912
    %v343 = vshrl.u32 %v342, 30
    %v344 = vshll.u32 %v343, 30
    %v345 = vsub.s32 %v341, %v344
    %vm346 = vcmp.lt.s32.totalorder %v345, 0
    %v347 = vsub.s32 0, %v345
    %v348 = vsel %vm346, %v347, %v345
    %v349 = vclz %v348
    %v350 = vsub.s32 %v349, 2
    %vm351 = vcmp.gt.s32.totalorder 0, %v350
    %v352 = vsel %vm351, 0, %v350
    %v353 = vsub.s32 32, %v352
    %v354 = vshll.u32 %v345, %v352
    %v355 = vshrl.u32 %v337, %v353
    %v356 = vor.u32 %v354, %v355
    %v357 = vsub.s32 4294967266, %v352
    %v358 = vadd.s32 %v357, 127
    %v359 = vshll.u32 %v358, 23
    %v360 = vor.u32 4788187, %v359
    %v361 = vand.u32 2147483647, %v360
    %v363 = vcvt.s32.f32 %v356
    %v364 = vmul.f32 %v363, %v361
    %v365 = vxor.u32 %v364, 2147483648
    %v366 = vsel %vm283, %v365, %v364
    %v367 = vsub.s32 4, %v343
    %v368 = vsel %vm283, %v367, %v343
    %v369 = vsel %vm282, %v170, %v366
    %v370 = vsel %vm282, 0, %v368
    %v371 = vcosq.f32.pop %v369
    %v372 = vsinq.f32.pop %v369
    %vm373 = vweird.f32 %v170
    %v374 = vadd.s32 %v370, 3
    %v375 = vand.u32 %v374, 3
    %vm376 = vcmp.lt.s32.totalorder %v375, 2
    %vm377 = vcmp.eq.s32.totalorder %v375, 0
    %v378 = vxor.u32 %v372, 2147483648
    %v379 = vsel %vm377, %v371, %v378
    %vm380 = vcmp.eq.s32.totalorder %v375, 2
    %v381 = vxor.u32 %v371, 2147483648
    %v382 = vsel %vm380, %v381, %v372
    %v383 = vsel %vm376, %v379, %v382
    %v384 = vsel %vm373, nan, %v383
    %v385 = vand.u32 2147483647, %v171
    %vm386 = vcmp.le.f32.partialorder %v385, 0.7853982
    %vm387 = vcmp.lt.s32.totalorder %v171, 0
    %v388 = vand.u32 %v171, 2139095040
    %v389 = vshrl.u32 %v388, 23
    %v390 = vsub.s32 %v389, 127
    %v391 = vand.u32 2147483647, %v171
    %v392 = vand.u32 %v391, 8388607
    %v393 = vor.u32 %v392, 8388608
    %v394 = vsub.s32 0, %v393
    %v395 = vadd.s32 %v390, 1
    %vm396 = vcmp.gt.s32.totalorder %v395, 0
    %v397 = vsel %vm396, %v395, 0
    %v398 = vshrl.u32 %v397, 5
    %v399 = vand.u32 %v397, 31
    %v400 = vsub.s32 32, %v399
    %v401 = vshrl.u32 683565275, %v400
    %v402 = vshll.u32 683565275, %v399
    %v403 = vshrl.u32 2475754826, %v400
    %v404 = vor.u32 %v402, %v403
    %v405 = vshll.u32 2475754826, %v399
    %v406 = vshrl.u32 2131351028, %v400
    %v407 = vor.u32 %v405, %v406
    %v408 = vshll.u32 2131351028, %v399
    %v409 = vshrl.u32 2102212464, %v400
    %v410 = vor.u32 %v408, %v409
    %v411 = vshll.u32 2102212464, %v399
    %v412 = vshrl.u32 920167782, %v400
    %v413 = vor.u32 %v411, %v412
    %v414 = vshll.u32 920167782, %v399
    %v415 = vshrl.u32 1326507024, %v400
    %v416 = vor.u32 %v414, %v415
    %vm417 = vcmp.lt.s32.totalorder %v398, 1
    %vm418 = vcmp.lt.s32.totalorder %v398, 2
    %vm419 = vcmp.lt.s32.totalorder %v398, 3
    %vm420 = vcmp.lt.s32.totalorder %v398, 4
    %v421 = vsel %vm417, %v401, %v404
    %v422 = vsel %vm420, %v410, 2102212464
    %v423 = vsel %vm419, %v407, %v422
    %v424 = vsel %vm418, %v421, %v423
    %v425 = vsel %vm417, %v404, %v407
    %v426 = vsel %vm420, %v413, 920167782
    %v427 = vsel %vm419, %v410, %v426
    %v428 = vsel %vm418, %v425, %v427
    %v429 = vsel %vm417, %v407, %v410
    %v430 = vsel %vm420, %v416, 1326507024
    %v431 = vsel %vm419, %v413, %v430
    %v432 = vsel %vm418, %v429, %v431
    %v433 = vshll.u32 %v393, 8
    %v434 = vmul.u32.u64.compose %v433, %v432
    %v435 = vextract.low.u32 %v434
    %v436 = vextract.high.u32 %v434
    %v437 = vmul.u32.u64.compose %v433, %v428
    %v438 = vextract.low.u32 %v437
    %v439 = vextract.high.u32 %v437
    %v440 = vmul.u32 %v433, %v424
    %v441 = vadd.s32 %v436, %v438
    %vm442 = vc.u32 %v436, %v438
    %v443 = vadd.s32 %v439, 1
    %v444 = vsel %vm442, %v443, %v439
    %v445 = vadd.s32 %v440, %v444
    %v446 = vadd.s32 %v445, 536870912
    %v447 = vshrl.u32 %v446, 30
    %v448 = vshll.u32 %v447, 30
    %v449 = vsub.s32 %v445, %v448
    %vm450 = vcmp.lt.s32.totalorder %v449, 0
    %v451 = vsub.s32 0, %v449
    %v452 = vsel %vm450, %v451, %v449
    %v453 = vclz %v452
    %v454 = vsub.s32 %v453, 2
    %vm455 = vcmp.gt.s32.totalorder 0, %v454
    %v456 = vsel %vm455, 0, %v454
    %v457 = vsub.s32 32, %v456
    %v458 = vshll.u32 %v449, %v456
    %v459 = vshrl.u32 %v441, %v457
    %v460 = vor.u32 %v458, %v459
    %v461 = vsub.s32 4294967266, %v456
    %v462 = vadd.s32 %v461, 127
    %v463 = vshll.u32 %v462, 23
    %v464 = vor.u32 4788187, %v463
    %v465 = vand.u32 2147483647, %v464
    %v467 = vcvt.s32.f32 %v460
    %v468 = vmul.f32 %v467, %v465
    %v469 = vxor.u32 %v468, 2147483648
    %v470 = vsel %vm387, %v469, %v468
    %v471 = vsub.s32 4, %v447
    %v472 = vsel %vm387, %v471, %v447
    %v473 = vsel %vm386, %v171, %v470
    %v474 = vsel %vm386, 0, %v472
    %v475 = vcosq.f32.pop %v473
    %v476 = vsinq.f32.pop %v473
    %vm477 = vweird.f32 %v171
    %v478 = vadd.s32 %v474, 3
    %v479 = vand.u32 %v478, 3
    %vm480 = vcmp.lt.s32.totalorder %v479, 2
    %vm481 = vcmp.eq.s32.totalorder %v479, 0
    %v482 = vxor.u32 %v476, 2147483648
    %v483 = vsel %vm481, %v475, %v482
    %vm484 = vcmp.eq.s32.totalorder %v479, 2
    %v485 = vxor.u32 %v475, 2147483648
    %v486 = vsel %vm484, %v485, %v476
    %v487 = vsel %vm480, %v483, %v486
    %v488 = vsel %vm477, nan, %v487
    %v489 = vand.u32 2147483647, %v172
    %vm490 = vcmp.le.f32.partialorder %v489, 0.7853982
    %vm491 = vcmp.lt.s32.totalorder %v172, 0
    %v492 = vand.u32 %v172, 2139095040
    %v493 = vshrl.u32 %v492, 23
    %v494 = vsub.s32 %v493, 127
    %v495 = vand.u32 2147483647, %v172
    %v496 = vand.u32 %v495, 8388607
    %v497 = vor.u32 %v496, 8388608
    %v498 = vsub.s32 0, %v497
    %v499 = vadd.s32 %v494, 1
    %vm500 = vcmp.gt.s32.totalorder %v499, 0
    %v501 = vsel %vm500, %v499, 0
    %v502 = vshrl.u32 %v501, 5
    %v503 = vand.u32 %v501, 31
    %v504 = vsub.s32 32, %v503
    %v505 = vshrl.u32 683565275, %v504
    %v506 = vshll.u32 683565275, %v503
    %v507 = vshrl.u32 2475754826, %v504
    %v508 = vor.u32 %v506, %v507
    %v509 = vshll.u32 2475754826, %v503
    %v510 = vshrl.u32 2131351028, %v504
    %v511 = vor.u32 %v509, %v510
    %v512 = vshll.u32 2131351028, %v503
    %v513 = vshrl.u32 2102212464, %v504
    %v514 = vor.u32 %v512, %v513
    %v515 = vshll.u32 2102212464, %v503
    %v516 = vshrl.u32 920167782, %v504
    %v517 = vor.u32 %v515, %v516
    %v518 = vshll.u32 920167782, %v503
    %v519 = vshrl.u32 1326507024, %v504
    %v520 = vor.u32 %v518, %v519
    %vm521 = vcmp.lt.s32.totalorder %v502, 1
    %vm522 = vcmp.lt.s32.totalorder %v502, 2
    %vm523 = vcmp.lt.s32.totalorder %v502, 3
    %vm524 = vcmp.lt.s32.totalorder %v502, 4
    %v525 = vsel %vm521, %v505, %v508
    %v526 = vsel %vm524, %v514, 2102212464
    %v527 = vsel %vm523, %v511, %v526
    %v528 = vsel %vm522, %v525, %v527
    %v529 = vsel %vm521, %v508, %v511
    %v530 = vsel %vm524, %v517, 920167782
    %v531 = vsel %vm523, %v514, %v530
    %v532 = vsel %vm522, %v529, %v531
    %v533 = vsel %vm521, %v511, %v514
    %v534 = vsel %vm524, %v520, 1326507024
    %v535 = vsel %vm523, %v517, %v534
    %v536 = vsel %vm522, %v533, %v535
    %v537 = vshll.u32 %v497, 8
    %v538 = vmul.u32.u64.compose %v537, %v536
    %v539 = vextract.low.u32 %v538
    %v540 = vextract.high.u32 %v538
    %v541 = vmul.u32.u64.compose %v537, %v532
    %v542 = vextract.low.u32 %v541
    %v543 = vextract.high.u32 %v541
    %v544 = vmul.u32 %v537, %v528
    %v545 = vadd.s32 %v540, %v542
    %vm546 = vc.u32 %v540, %v542
    %v547 = vadd.s32 %v543, 1
    %v548 = vsel %vm546, %v547, %v543
    %v549 = vadd.s32 %v544, %v548
    %v550 = vadd.s32 %v549, 536870912
    %v551 = vshrl.u32 %v550, 30
    %v552 = vshll.u32 %v551, 30
    %v553 = vsub.s32 %v549, %v552
    %vm554 = vcmp.lt.s32.totalorder %v553, 0
    %v555 = vsub.s32 0, %v553
    %v556 = vsel %vm554, %v555, %v553
    %v557 = vclz %v556
    %v558 = vsub.s32 %v557, 2
    %vm559 = vcmp.gt.s32.totalorder 0, %v558
    %v560 = vsel %vm559, 0, %v558
    %v561 = vsub.s32 32, %v560
    %v562 = vshll.u32 %v553, %v560
    %v563 = vshrl.u32 %v545, %v561
    %v564 = vor.u32 %v562, %v563
    %v565 = vsub.s32 4294967266, %v560
    %v566 = vadd.s32 %v565, 127
    %v567 = vshll.u32 %v566, 23
    %v568 = vor.u32 4788187, %v567
    %v569 = vand.u32 2147483647, %v568
    %v571 = vcvt.s32.f32 %v564
    %v572 = vmul.f32 %v571, %v569
    %v573 = vxor.u32 %v572, 2147483648
    %v574 = vsel %vm491, %v573, %v572
    %v575 = vsub.s32 4, %v551
    %v576 = vsel %vm491, %v575, %v551
    %v577 = vsel %vm490, %v172, %v574
    %v578 = vsel %vm490, 0, %v576
    %v579 = vcosq.f32.pop %v577
    %v580 = vsinq.f32.pop %v577
    %vm581 = vweird.f32 %v172
    %v582 = vadd.s32 %v578, 3
    %v583 = vand.u32 %v582, 3
    %vm584 = vcmp.lt.s32.totalorder %v583, 2
    %vm585 = vcmp.eq.s32.totalorder %v583, 0
    %v586 = vxor.u32 %v580, 2147483648
    %v587 = vsel %vm585, %v579, %v586
    %vm588 = vcmp.eq.s32.totalorder %v583, 2
    %v589 = vxor.u32 %v579, 2147483648
    %v590 = vsel %vm588, %v589, %v580
    %v591 = vsel %vm584, %v587, %v590
    %v592 = vsel %vm581, nan, %v591
    %v593 = vand.u32 2147483647, %v173
    %vm594 = vcmp.le.f32.partialorder %v593, 0.7853982
    %vm595 = vcmp.lt.s32.totalorder %v173, 0
    %v596 = vand.u32 %v173, 2139095040
    %v597 = vshrl.u32 %v596, 23
    %v598 = vsub.s32 %v597, 127
    %v599 = vand.u32 2147483647, %v173
    %v600 = vand.u32 %v599, 8388607
    %v601 = vor.u32 %v600, 8388608
    %v602 = vsub.s32 0, %v601
    %v603 = vadd.s32 %v598, 1
    %vm604 = vcmp.gt.s32.totalorder %v603, 0
    %v605 = vsel %vm604, %v603, 0
    %v606 = vshrl.u32 %v605, 5
    %v607 = vand.u32 %v605, 31
    %v608 = vsub.s32 32, %v607
    %v609 = vshrl.u32 683565275, %v608
    %v610 = vshll.u32 683565275, %v607
    %v611 = vshrl.u32 2475754826, %v608
    %v612 = vor.u32 %v610, %v611
    %v613 = vshll.u32 2475754826, %v607
    %v614 = vshrl.u32 2131351028, %v608
    %v615 = vor.u32 %v613, %v614
    %v616 = vshll.u32 2131351028, %v607
    %v617 = vshrl.u32 2102212464, %v608
    %v618 = vor.u32 %v616, %v617
    %v619 = vshll.u32 2102212464, %v607
    %v620 = vshrl.u32 920167782, %v608
    %v621 = vor.u32 %v619, %v620
    %v622 = vshll.u32 920167782, %v607
    %v623 = vshrl.u32 1326507024, %v608
    %v624 = vor.u32 %v622, %v623
    %vm625 = vcmp.lt.s32.totalorder %v606, 1
    %vm626 = vcmp.lt.s32.totalorder %v606, 2
    %vm627 = vcmp.lt.s32.totalorder %v606, 3
    %vm628 = vcmp.lt.s32.totalorder %v606, 4
    %v629 = vsel %vm625, %v609, %v612
    %v630 = vsel %vm628, %v618, 2102212464
    %v631 = vsel %vm627, %v615, %v630
    %v632 = vsel %vm626, %v629, %v631
    %v633 = vsel %vm625, %v612, %v615
    %v634 = vsel %vm628, %v621, 920167782
    %v635 = vsel %vm627, %v618, %v634
    %v636 = vsel %vm626, %v633, %v635
    %v637 = vsel %vm625, %v615, %v618
    %v638 = vsel %vm628, %v624, 1326507024
    %v639 = vsel %vm627, %v621, %v638
    %v640 = vsel %vm626, %v637, %v639
    %v641 = vshll.u32 %v601, 8
    %v642 = vmul.u32.u64.compose %v641, %v640
    %v643 = vextract.low.u32 %v642
    %v644 = vextract.high.u32 %v642
    %v645 = vmul.u32.u64.compose %v641, %v636
    %v646 = vextract.low.u32 %v645
    %v647 = vextract.high.u32 %v645
    %v648 = vmul.u32 %v641, %v632
    %v649 = vadd.s32 %v644, %v646
    %vm650 = vc.u32 %v644, %v646
    %v651 = vadd.s32 %v647, 1
    %v652 = vsel %vm650, %v651, %v647
    %v653 = vadd.s32 %v648, %v652
    %v654 = vadd.s32 %v653, 536870912
    %v655 = vshrl.u32 %v654, 30
    %v656 = vshll.u32 %v655, 30
    %v657 = vsub.s32 %v653, %v656
    %vm658 = vcmp.lt.s32.totalorder %v657, 0
    %v659 = vsub.s32 0, %v657
    %v660 = vsel %vm658, %v659, %v657
    %v661 = vclz %v660
    %v662 = vsub.s32 %v661, 2
    %vm663 = vcmp.gt.s32.totalorder 0, %v662
    %v664 = vsel %vm663, 0, %v662
    %v665 = vsub.s32 32, %v664
    %v666 = vshll.u32 %v657, %v664
    %v667 = vshrl.u32 %v649, %v665
    %v668 = vor.u32 %v666, %v667
    %v669 = vsub.s32 4294967266, %v664
    %v670 = vadd.s32 %v669, 127
    %v671 = vshll.u32 %v670, 23
    %v672 = vor.u32 4788187, %v671
    %v673 = vand.u32 2147483647, %v672
    %v675 = vcvt.s32.f32 %v668
    %v676 = vmul.f32 %v675, %v673
    %v677 = vxor.u32 %v676, 2147483648
    %v678 = vsel %vm595, %v677, %v676
    %v679 = vsub.s32 4, %v655
    %v680 = vsel %vm595, %v679, %v655
    %v681 = vsel %vm594, %v173, %v678
    %v682 = vsel %vm594, 0, %v680
    %v683 = vcosq.f32.pop %v681
    %v684 = vsinq.f32.pop %v681
    %vm685 = vweird.f32 %v173
    %v686 = vadd.s32 %v682, 3
    %v687 = vand.u32 %v686, 3
    %vm688 = vcmp.lt.s32.totalorder %v687, 2
    %vm689 = vcmp.eq.s32.totalorder %v687, 0
    %v690 = vxor.u32 %v684, 2147483648
    %v691 = vsel %vm689, %v683, %v690
    %vm692 = vcmp.eq.s32.totalorder %v687, 2
    %v693 = vxor.u32 %v683, 2147483648
    %v694 = vsel %vm692, %v693, %v684
    %v695 = vsel %vm688, %v691, %v694
    %v696 = vsel %vm685, nan, %v695
    %v697 = vand.u32 2147483647, %v174
    %vm698 = vcmp.le.f32.partialorder %v697, 0.7853982
    %vm699 = vcmp.lt.s32.totalorder %v174, 0
    %v700 = vand.u32 %v174, 2139095040
    %v701 = vshrl.u32 %v700, 23
    %v702 = vsub.s32 %v701, 127
    %v703 = vand.u32 2147483647, %v174
    %v704 = vand.u32 %v703, 8388607
    %v705 = vor.u32 %v704, 8388608
    %v706 = vsub.s32 0, %v705
    %v707 = vadd.s32 %v702, 1
    %vm708 = vcmp.gt.s32.totalorder %v707, 0
    %v709 = vsel %vm708, %v707, 0
    %v710 = vshrl.u32 %v709, 5
    %v711 = vand.u32 %v709, 31
    %v712 = vsub.s32 32, %v711
    %v713 = vshrl.u32 683565275, %v712
    %v714 = vshll.u32 683565275, %v711
    %v715 = vshrl.u32 2475754826, %v712
    %v716 = vor.u32 %v714, %v715
    %v717 = vshll.u32 2475754826, %v711
    %v718 = vshrl.u32 2131351028, %v712
    %v719 = vor.u32 %v717, %v718
    %v720 = vshll.u32 2131351028, %v711
    %v721 = vshrl.u32 2102212464, %v712
    %v722 = vor.u32 %v720, %v721
    %v723 = vshll.u32 2102212464, %v711
    %v724 = vshrl.u32 920167782, %v712
    %v725 = vor.u32 %v723, %v724
    %v726 = vshll.u32 920167782, %v711
    %v727 = vshrl.u32 1326507024, %v712
    %v728 = vor.u32 %v726, %v727
    %vm729 = vcmp.lt.s32.totalorder %v710, 1
    %vm730 = vcmp.lt.s32.totalorder %v710, 2
    %vm731 = vcmp.lt.s32.totalorder %v710, 3
    %vm732 = vcmp.lt.s32.totalorder %v710, 4
    %v733 = vsel %vm729, %v713, %v716
    %v734 = vsel %vm732, %v722, 2102212464
    %v735 = vsel %vm731, %v719, %v734
    %v736 = vsel %vm730, %v733, %v735
    %v737 = vsel %vm729, %v716, %v719
    %v738 = vsel %vm732, %v725, 920167782
    %v739 = vsel %vm731, %v722, %v738
    %v740 = vsel %vm730, %v737, %v739
    %v741 = vsel %vm729, %v719, %v722
    %v742 = vsel %vm732, %v728, 1326507024
    %v743 = vsel %vm731, %v725, %v742
    %v744 = vsel %vm730, %v741, %v743
    %v745 = vshll.u32 %v705, 8
    %v746 = vmul.u32.u64.compose %v745, %v744
    %v747 = vextract.low.u32 %v746
    %v748 = vextract.high.u32 %v746
    %v749 = vmul.u32.u64.compose %v745, %v740
    %v750 = vextract.low.u32 %v749
    %v751 = vextract.high.u32 %v749
    %v752 = vmul.u32 %v745, %v736
    %v753 = vadd.s32 %v748, %v750
    %vm754 = vc.u32 %v748, %v750
    %v755 = vadd.s32 %v751, 1
    %v756 = vsel %vm754, %v755, %v751
    %v757 = vadd.s32 %v752, %v756
    %v758 = vadd.s32 %v757, 536870912
    %v759 = vshrl.u32 %v758, 30
    %v760 = vshll.u32 %v759, 30
    %v761 = vsub.s32 %v757, %v760
    %vm762 = vcmp.lt.s32.totalorder %v761, 0
    %v763 = vsub.s32 0, %v761
    %v764 = vsel %vm762, %v763, %v761
    %v765 = vclz %v764
    %v766 = vsub.s32 %v765, 2
    %vm767 = vcmp.gt.s32.totalorder 0, %v766
    %v768 = vsel %vm767, 0, %v766
    %v769 = vsub.s32 32, %v768
    %v770 = vshll.u32 %v761, %v768
    %v771 = vshrl.u32 %v753, %v769
    %v772 = vor.u32 %v770, %v771
    %v773 = vsub.s32 4294967266, %v768
    %v774 = vadd.s32 %v773, 127
    %v775 = vshll.u32 %v774, 23
    %v776 = vor.u32 4788187, %v775
    %v777 = vand.u32 2147483647, %v776
    %v779 = vcvt.s32.f32 %v772
    %v780 = vmul.f32 %v779, %v777
    %v781 = vxor.u32 %v780, 2147483648
    %v782 = vsel %vm699, %v781, %v780
    %v783 = vsub.s32 4, %v759
    %v784 = vsel %vm699, %v783, %v759
    %v785 = vsel %vm698, %v174, %v782
    %v786 = vsel %vm698, 0, %v784
    %v787 = vcosq.f32.pop %v785
    %v788 = vsinq.f32.pop %v785
    %vm789 = vweird.f32 %v174
    %v790 = vadd.s32 %v786, 3
    %v791 = vand.u32 %v790, 3
    %vm792 = vcmp.lt.s32.totalorder %v791, 2
    %vm793 = vcmp.eq.s32.totalorder %v791, 0
    %v794 = vxor.u32 %v788, 2147483648
    %v795 = vsel %vm793, %v787, %v794
    %vm796 = vcmp.eq.s32.totalorder %v791, 2
    %v797 = vxor.u32 %v787, 2147483648
    %v798 = vsel %vm796, %v797, %v788
    %v799 = vsel %vm792, %v795, %v798
    %v800 = vsel %vm789, nan, %v799
    %v801 = vand.u32 2147483647, %v175
    %vm802 = vcmp.le.f32.partialorder %v801, 0.7853982
    %vm803 = vcmp.lt.s32.totalorder %v175, 0
    %v804 = vand.u32 %v175, 2139095040
    %v805 = vshrl.u32 %v804, 23
    %v806 = vsub.s32 %v805, 127
    %v807 = vand.u32 2147483647, %v175
    %v808 = vand.u32 %v807, 8388607
    %v809 = vor.u32 %v808, 8388608
    %v810 = vsub.s32 0, %v809
    %v811 = vadd.s32 %v806, 1
    %vm812 = vcmp.gt.s32.totalorder %v811, 0
    %v813 = vsel %vm812, %v811, 0
    %v814 = vshrl.u32 %v813, 5
    %v815 = vand.u32 %v813, 31
    %v816 = vsub.s32 32, %v815
    %v817 = vshrl.u32 683565275, %v816
    %v818 = vshll.u32 683565275, %v815
    %v819 = vshrl.u32 2475754826, %v816
    %v820 = vor.u32 %v818, %v819
    %v821 = vshll.u32 2475754826, %v815
    %v822 = vshrl.u32 2131351028, %v816
    %v823 = vor.u32 %v821, %v822
    %v824 = vshll.u32 2131351028, %v815
    %v825 = vshrl.u32 2102212464, %v816
    %v826 = vor.u32 %v824, %v825
    %v827 = vshll.u32 2102212464, %v815
    %v828 = vshrl.u32 920167782, %v816
    %v829 = vor.u32 %v827, %v828
    %v830 = vshll.u32 920167782, %v815
    %v831 = vshrl.u32 1326507024, %v816
    %v832 = vor.u32 %v830, %v831
    %vm833 = vcmp.lt.s32.totalorder %v814, 1
    %vm834 = vcmp.lt.s32.totalorder %v814, 2
    %vm835 = vcmp.lt.s32.totalorder %v814, 3
    %vm836 = vcmp.lt.s32.totalorder %v814, 4
    %v837 = vsel %vm833, %v817, %v820
    %v838 = vsel %vm836, %v826, 2102212464
    %v839 = vsel %vm835, %v823, %v838
    %v840 = vsel %vm834, %v837, %v839
    %v841 = vsel %vm833, %v820, %v823
    %v842 = vsel %vm836, %v829, 920167782
    %v843 = vsel %vm835, %v826, %v842
    %v844 = vsel %vm834, %v841, %v843
    %v845 = vsel %vm833, %v823, %v826
    %v846 = vsel %vm836, %v832, 1326507024
    %v847 = vsel %vm835, %v829, %v846
    %v848 = vsel %vm834, %v845, %v847
    %v849 = vshll.u32 %v809, 8
    %v850 = vmul.u32.u64.compose %v849, %v848
    %v851 = vextract.low.u32 %v850
    %v852 = vextract.high.u32 %v850
    %v853 = vmul.u32.u64.compose %v849, %v844
    %v854 = vextract.low.u32 %v853
    %v855 = vextract.high.u32 %v853
    %v856 = vmul.u32 %v849, %v840
    %v857 = vadd.s32 %v852, %v854
    %vm858 = vc.u32 %v852, %v854
    %v859 = vadd.s32 %v855, 1
    %v860 = vsel %vm858, %v859, %v855
    %v861 = vadd.s32 %v856, %v860
    %v862 = vadd.s32 %v861, 536870912
    %v863 = vshrl.u32 %v862, 30
    %v864 = vshll.u32 %v863, 30
    %v865 = vsub.s32 %v861, %v864
    %vm866 = vcmp.lt.s32.totalorder %v865, 0
    %v867 = vsub.s32 0, %v865
    %v868 = vsel %vm866, %v867, %v865
    %v869 = vclz %v868
    %v870 = vsub.s32 %v869, 2
    %vm871 = vcmp.gt.s32.totalorder 0, %v870
    %v872 = vsel %vm871, 0, %v870
    %v873 = vsub.s32 32, %v872
    %v874 = vshll.u32 %v865, %v872
    %v875 = vshrl.u32 %v857, %v873
    %v876 = vor.u32 %v874, %v875
    %v877 = vsub.s32 4294967266, %v872
    %v878 = vadd.s32 %v877, 127
    %v879 = vshll.u32 %v878, 23
    %v880 = vor.u32 4788187, %v879
    %v881 = vand.u32 2147483647, %v880
    %v883 = vcvt.s32.f32 %v876
    %v884 = vmul.f32 %v883, %v881
    %v885 = vxor.u32 %v884, 2147483648
    %v886 = vsel %vm803, %v885, %v884
    %v887 = vsub.s32 4, %v863
    %v888 = vsel %vm803, %v887, %v863
    %v889 = vsel %vm802, %v175, %v886
    %v890 = vsel %vm802, 0, %v888
    %v891 = vcosq.f32.pop %v889
    %v892 = vsinq.f32.pop %v889
    %vm893 = vweird.f32 %v175
    %v894 = vadd.s32 %v890, 3
    %v895 = vand.u32 %v894, 3
    %vm896 = vcmp.lt.s32.totalorder %v895, 2
    %vm897 = vcmp.eq.s32.totalorder %v895, 0
    %v898 = vxor.u32 %v892, 2147483648
    %v899 = vsel %vm897, %v891, %v898
    %vm900 = vcmp.eq.s32.totalorder %v895, 2
    %v901 = vxor.u32 %v891, 2147483648
    %v902 = vsel %vm900, %v901, %v892
    %v903 = vsel %vm896, %v899, %v902
    %v904 = vsel %vm893, nan, %v903
    %v905 = vand.u32 2147483647, %v176
    %vm906 = vcmp.le.f32.partialorder %v905, 0.7853982
    %vm907 = vcmp.lt.s32.totalorder %v176, 0
    %v908 = vand.u32 %v176, 2139095040
    %v909 = vshrl.u32 %v908, 23
    %v910 = vsub.s32 %v909, 127
    %v911 = vand.u32 2147483647, %v176
    %v912 = vand.u32 %v911, 8388607
    %v913 = vor.u32 %v912, 8388608
    %v914 = vsub.s32 0, %v913
    %v915 = vadd.s32 %v910, 1
    %vm916 = vcmp.gt.s32.totalorder %v915, 0
    %v917 = vsel %vm916, %v915, 0
    %v918 = vshrl.u32 %v917, 5
    %v919 = vand.u32 %v917, 31
    %v920 = vsub.s32 32, %v919
    %v921 = vshrl.u32 683565275, %v920
    %v922 = vshll.u32 683565275, %v919
    %v923 = vshrl.u32 2475754826, %v920
    %v924 = vor.u32 %v922, %v923
    %v925 = vshll.u32 2475754826, %v919
    %v926 = vshrl.u32 2131351028, %v920
    %v927 = vor.u32 %v925, %v926
    %v928 = vshll.u32 2131351028, %v919
    %v929 = vshrl.u32 2102212464, %v920
    %v930 = vor.u32 %v928, %v929
    %v931 = vshll.u32 2102212464, %v919
    %v932 = vshrl.u32 920167782, %v920
    %v933 = vor.u32 %v931, %v932
    %v934 = vshll.u32 920167782, %v919
    %v935 = vshrl.u32 1326507024, %v920
    %v936 = vor.u32 %v934, %v935
    %vm937 = vcmp.lt.s32.totalorder %v918, 1
    %vm938 = vcmp.lt.s32.totalorder %v918, 2
    %vm939 = vcmp.lt.s32.totalorder %v918, 3
    %vm940 = vcmp.lt.s32.totalorder %v918, 4
    %v941 = vsel %vm937, %v921, %v924
    %v942 = vsel %vm940, %v930, 2102212464
    %v943 = vsel %vm939, %v927, %v942
    %v944 = vsel %vm938, %v941, %v943
    %v945 = vsel %vm937, %v924, %v927
    %v946 = vsel %vm940, %v933, 920167782
    %v947 = vsel %vm939, %v930, %v946
    %v948 = vsel %vm938, %v945, %v947
    %v949 = vsel %vm937, %v927, %v930
    %v950 = vsel %vm940, %v936, 1326507024
    %v951 = vsel %vm939, %v933, %v950
    %v952 = vsel %vm938, %v949, %v951
    %v953 = vshll.u32 %v913, 8
    %v954 = vmul.u32.u64.compose %v953, %v952
    %v955 = vextract.low.u32 %v954
    %v956 = vextract.high.u32 %v954
    %v957 = vmul.u32.u64.compose %v953, %v948
    %v958 = vextract.low.u32 %v957
    %v959 = vextract.high.u32 %v957
    %v960 = vmul.u32 %v953, %v944
    %v961 = vadd.s32 %v956, %v958
    %vm962 = vc.u32 %v956, %v958
    %v963 = vadd.s32 %v959, 1
    %v964 = vsel %vm962, %v963, %v959
    %v965 = vadd.s32 %v960, %v964
    %v966 = vadd.s32 %v965, 536870912
    %v967 = vshrl.u32 %v966, 30
    %v968 = vshll.u32 %v967, 30
    %v969 = vsub.s32 %v965, %v968
    %vm970 = vcmp.lt.s32.totalorder %v969, 0
    %v971 = vsub.s32 0, %v969
    %v972 = vsel %vm970, %v971, %v969
    %v973 = vclz %v972
    %v974 = vsub.s32 %v973, 2
    %vm975 = vcmp.gt.s32.totalorder 0, %v974
    %v976 = vsel %vm975, 0, %v974
    %v977 = vsub.s32 32, %v976
    %v978 = vshll.u32 %v969, %v976
    %v979 = vshrl.u32 %v961, %v977
    %v980 = vor.u32 %v978, %v979
    %v981 = vsub.s32 4294967266, %v976
    %v982 = vadd.s32 %v981, 127
    %v983 = vshll.u32 %v982, 23
    %v984 = vor.u32 4788187, %v983
    %v985 = vand.u32 2147483647, %v984
    %v987 = vcvt.s32.f32 %v980
    %v988 = vmul.f32 %v987, %v985
    %v989 = vxor.u32 %v988, 2147483648
    %v990 = vsel %vm907, %v989, %v988
    %v991 = vsub.s32 4, %v967
    %v992 = vsel %vm907, %v991, %v967
    %v993 = vsel %vm906, %v176, %v990
    %v994 = vsel %vm906, 0, %v992
    %v995 = vcosq.f32.pop %v993
    %v996 = vsinq.f32.pop %v993
    %vm997 = vweird.f32 %v176
    %v998 = vadd.s32 %v994, 3
    %v999 = vand.u32 %v998, 3
    %vm1000 = vcmp.lt.s32.totalorder %v999, 2
    %vm1001 = vcmp.eq.s32.totalorder %v999, 0
    %v1002 = vxor.u32 %v996, 2147483648
    %v1003 = vsel %vm1001, %v995, %v1002
    %vm1004 = vcmp.eq.s32.totalorder %v999, 2
    %v1005 = vxor.u32 %v995, 2147483648
    %v1006 = vsel %vm1004, %v1005, %v996
    %v1007 = vsel %vm1000, %v1003, %v1006
    %v1008 = vsel %vm997, nan, %v1007
    %v1009 = vmul.f32 %v280, 1.4142135
    %v1010 = vmul.f32 %v384, 1.4142135
    %v1011 = vmul.f32 %v488, 1.4142135
    %v1012 = vmul.f32 %v592, 1.4142135
    %v1013 = vmul.f32 %v696, 1.4142135
    %v1014 = vmul.f32 %v800, 1.4142135
    %v1015 = vmul.f32 %v904, 1.4142135
    %v1016 = vmul.f32 %v1008, 1.4142135
    %v1017 = vld [vmem:[%s3] sm:$0xff]
    %v1018 = vld [vmem:[%s3 + $0x8] sm:$0xff]
    %v1019 = vld [vmem:[%s3 + $0x10] sm:$0xff]
    %v1020 = vld [vmem:[%s3 + $0x18] sm:$0xff]
    %v1021 = vld [vmem:[%s4] sm:$0xff]
    %v1022 = vld [vmem:[%s4 + $0x8] sm:$0xff]
    %v1023 = vld [vmem:[%s4 + $0x10] sm:$0xff]
    %v1024 = vld [vmem:[%s4 + $0x18] sm:$0xff]
    %1026 = vset.pattern.permute.xlu0 0
    %1027 = vperm.xlu0 %1026, %v1021
    %v1028 = vpop.permute.xlu0 %1027
    %1031 = vset.pattern.permute.xlu0 0
    %1032 = vperm.xlu0 %1031, %v1022
    %v1033 = vpop.permute.xlu0 %1032
    %1036 = vset.pattern.permute.xlu0 0
    %1037 = vperm.xlu0 %1036, %v1023
    %v1038 = vpop.permute.xlu0 %1037
    %1041 = vset.pattern.permute.xlu0 0
    %1042 = vperm.xlu0 %1041, %v1024
    %v1043 = vpop.permute.xlu0 %1042
    %vm1045 = vcmask 261120
    %v1047 = vsel %vm1045, %v1017, 0
    %v1050 = vsel %vm1045, %v1018, 0
    %v1053 = vsel %vm1045, %v1019, 0
    %v1056 = vsel %vm1045, %v1020, 0
    %1058 = vmatprep.subr.mxu0 0.0
    %1059 = vmatpush1.msra.mxu0 0.0
    %1060 = vmatprep.subr.mxu0 0.0
    %1061 = vmatpush1.msra.mxu0 0.0
    %1062 = vmatprep.subr.mxu0 0.0
    %1063 = vmatpush1.msra.mxu0 0.0
    %1064 = vmatprep.subr.mxu0 0.0
    %1065 = vmatpush1.msra.mxu0 0.0
    %1066 = vmatprep.subr.mxu0 0.0
    %1067 = vmatpush1.msra.mxu0 0.0
    %1068 = vmatprep.subr.mxu0 0.0
    %1069 = vmatpush1.msra.mxu0 0.0
    %1070 = vmatprep.subr.mxu0 0.0
    %1071 = vmatpush1.msra.mxu0 0.0
    %1072 = vmatprep.subr.mxu0 0.0
    %1073 = vmatpush1.msra.mxu0 0.0
    %1074 = vmatprep.subr.mxu0 0.0
    %1075 = vmatpush1.msra.mxu0 0.0
    %1076 = vmatprep.subr.mxu0 0.0
    %1077 = vmatpush1.msra.mxu0 0.0
    %1078 = vmatprep.subr.mxu0 0.0
    %1079 = vmatpush1.msra.mxu0 0.0
    %1080 = vmatprep.subr.mxu0 0.0
    %1081 = vmatpush1.msra.mxu0 0.0
    %1082 = vmatprep.subr.mxu0 %v1016
    %1083 = vmatpush1.msra.mxu0 %v1015
    %1084 = vmatprep.subr.mxu0 %v1014
    %1085 = vmatpush1.msra.mxu0 %v1013
    %1086 = vmatprep.subr.mxu0 %v1012
    %1087 = vmatpush1.msra.mxu0 %v1011
    %1088 = vmatprep.subr.mxu0 %v1010
    %1089 = vmatpush1.msra.mxu0 %v1009
    %1090 = vmatprep.subr.mxu0 0.0
    %1091 = vmatpush2.msra.mxu0 0.0
    %1092 = vmatprep.subr.mxu0 0.0
    %1093 = vmatpush2.msra.mxu0 0.0
    %1094 = vmatprep.subr.mxu0 0.0
    %1095 = vmatpush2.msra.mxu0 0.0
    %1096 = vmatprep.subr.mxu0 0.0
    %1097 = vmatpush2.msra.mxu0 0.0
    %1098 = vmatprep.subr.mxu0 0.0
    %1099 = vmatpush2.msra.mxu0 0.0
    %1100 = vmatprep.subr.mxu0 0.0
    %1101 = vmatpush2.msra.mxu0 0.0
    %1102 = vmatprep.subr.mxu0 0.0
    %1103 = vmatpush2.msra.mxu0 0.0
    %1104 = vmatprep.subr.mxu0 0.0
    %1105 = vmatpush2.msra.mxu0 0.0
    %1106 = vmatprep.subr.mxu0 0.0
    %1107 = vmatpush2.msra.mxu0 0.0
    %1108 = vmatprep.subr.mxu0 0.0
    %1109 = vmatpush2.msra.mxu0 0.0
    %1110 = vmatprep.subr.mxu0 0.0
    %1111 = vmatpush2.msra.mxu0 0.0
    %1112 = vmatprep.subr.mxu0 0.0
    %1113 = vmatpush2.msra.mxu0 0.0
    %1114 = vmatprep.subr.mxu0 0.0
    %1115 = vmatpush2.msra.mxu0 0.0
    %1116 = vmatprep.subr.mxu0 0.0
    %1117 = vmatpush2.msra.mxu0 0.0
    %1118 = vmatprep.subr.mxu0 0.0
    %1119 = vmatpush2.msra.mxu0 0.0
    %1120 = vmatprep.subr.mxu0 0.0
    %1121 = vmatpush2.msra.mxu0 0.0
    %1122 = vmatprep.mubr.f32.mxu0 0.0
    %1123 = vmatmul.mubr.f32.gmra.mxu0 %v1047
    %v1124 = vpop.f32.mrf.mxu0
    %v1125 = vadd.f32 %v1028, %v1124
    %v1126 = vpop.f32.mrf.mxu0
    %v1127 = vadd.f32 %v1028, %v1126
    %1128 = vmatprep.mubr.f32.mxu0 0.0
    %1129 = vmatmul.mubr.f32.gmra.mxu0 %v1050
    %v1130 = vpop.f32.mrf.mxu0
    %v1131 = vadd.f32 %v1033, %v1130
    %v1132 = vpop.f32.mrf.mxu0
    %v1133 = vadd.f32 %v1033, %v1132
    %1134 = vmatprep.mubr.f32.mxu0 0.0
    %1135 = vmatmul.mubr.f32.gmra.mxu0 %v1053
    %v1136 = vpop.f32.mrf.mxu0
    %v1137 = vadd.f32 %v1038, %v1136
    %v1138 = vpop.f32.mrf.mxu0
    %v1139 = vadd.f32 %v1038, %v1138
    %1140 = vmatprep.mubr.f32.mxu0 0.0
    %1141 = vmatmul.mubr.f32.gmra.mxu0 %v1056
    %v1142 = vpop.f32.mrf.mxu0
    %v1143 = vadd.f32 %v1043, %v1142
    %v1144 = vpop.f32.mrf.mxu0
    %v1145 = vadd.f32 %v1043, %v1144
    %1146 = vdwg.mxu0
    %v1147 = vadd.f32 %v1125, 0.7853982
    %v1148 = vadd.f32 %v1127, 0.7853982
    %v1149 = vadd.f32 %v1131, 0.7853982
    %v1150 = vadd.f32 %v1133, 0.7853982
    %v1151 = vadd.f32 %v1137, 0.7853982
    %v1152 = vadd.f32 %v1139, 0.7853982
    %v1153 = vadd.f32 %v1143, 0.7853982
    %v1154 = vadd.f32 %v1145, 0.7853982
    %v1155 = vand.u32 2147483647, %v1147
    %vm1156 = vcmp.le.f32.partialorder %v1155, 0.7853982
    %vm1157 = vcmp.lt.s32.totalorder %v1147, 0
    %v1158 = vand.u32 %v1147, 2139095040
    %v1159 = vshrl.u32 %v1158, 23
    %v1160 = vsub.s32 %v1159, 127
    %v1161 = vand.u32 2147483647, %v1147
    %v1162 = vand.u32 %v1161, 8388607
    %v1163 = vor.u32 %v1162, 8388608
    %v1164 = vsub.s32 0, %v1163
    %v1165 = vadd.s32 %v1160, 1
    %vm1166 = vcmp.gt.s32.totalorder %v1165, 0
    %v1167 = vsel %vm1166, %v1165, 0
    %v1168 = vshrl.u32 %v1167, 5
    %v1169 = vand.u32 %v1167, 31
    %v1170 = vsub.s32 32, %v1169
    %v1171 = vshrl.u32 683565275, %v1170
    %v1172 = vshll.u32 683565275, %v1169
    %v1173 = vshrl.u32 2475754826, %v1170
    %v1174 = vor.u32 %v1172, %v1173
    %v1175 = vshll.u32 2475754826, %v1169
    %v1176 = vshrl.u32 2131351028, %v1170
    %v1177 = vor.u32 %v1175, %v1176
    %v1178 = vshll.u32 2131351028, %v1169
    %v1179 = vshrl.u32 2102212464, %v1170
    %v1180 = vor.u32 %v1178, %v1179
    %v1181 = vshll.u32 2102212464, %v1169
    %v1182 = vshrl.u32 920167782, %v1170
    %v1183 = vor.u32 %v1181, %v1182
    %v1184 = vshll.u32 920167782, %v1169
    %v1185 = vshrl.u32 1326507024, %v1170
    %v1186 = vor.u32 %v1184, %v1185
    %vm1187 = vcmp.lt.s32.totalorder %v1168, 1
    %vm1188 = vcmp.lt.s32.totalorder %v1168, 2
    %vm1189 = vcmp.lt.s32.totalorder %v1168, 3
    %vm1190 = vcmp.lt.s32.totalorder %v1168, 4
    %v1191 = vsel %vm1187, %v1171, %v1174
    %v1192 = vsel %vm1190, %v1180, 2102212464
    %v1193 = vsel %vm1189, %v1177, %v1192
    %v1194 = vsel %vm1188, %v1191, %v1193
    %v1195 = vsel %vm1187, %v1174, %v1177
    %v1196 = vsel %vm1190, %v1183, 920167782
    %v1197 = vsel %vm1189, %v1180, %v1196
    %v1198 = vsel %vm1188, %v1195, %v1197
    %v1199 = vsel %vm1187, %v1177, %v1180
    %v1200 = vsel %vm1190, %v1186, 1326507024
    %v1201 = vsel %vm1189, %v1183, %v1200
    %v1202 = vsel %vm1188, %v1199, %v1201
    %v1203 = vshll.u32 %v1163, 8
    %v1204 = vmul.u32.u64.compose %v1203, %v1202
    %v1205 = vextract.low.u32 %v1204
    %v1206 = vextract.high.u32 %v1204
    %v1207 = vmul.u32.u64.compose %v1203, %v1198
    %v1208 = vextract.low.u32 %v1207
    %v1209 = vextract.high.u32 %v1207
    %v1210 = vmul.u32 %v1203, %v1194
    %v1211 = vadd.s32 %v1206, %v1208
    %vm1212 = vc.u32 %v1206, %v1208
    %v1213 = vadd.s32 %v1209, 1
    %v1214 = vsel %vm1212, %v1213, %v1209
    %v1215 = vadd.s32 %v1210, %v1214
    %v1216 = vadd.s32 %v1215, 536870912
    %v1217 = vshrl.u32 %v1216, 30
    %v1218 = vshll.u32 %v1217, 30
    %v1219 = vsub.s32 %v1215, %v1218
    %vm1220 = vcmp.lt.s32.totalorder %v1219, 0
    %v1221 = vsub.s32 0, %v1219
    %v1222 = vsel %vm1220, %v1221, %v1219
    %v1223 = vclz %v1222
    %v1224 = vsub.s32 %v1223, 2
    %vm1225 = vcmp.gt.s32.totalorder 0, %v1224
    %v1226 = vsel %vm1225, 0, %v1224
    %v1227 = vsub.s32 32, %v1226
    %v1228 = vshll.u32 %v1219, %v1226
    %v1229 = vshrl.u32 %v1211, %v1227
    %v1230 = vor.u32 %v1228, %v1229
    %v1231 = vsub.s32 4294967266, %v1226
    %v1232 = vadd.s32 %v1231, 127
    %v1233 = vshll.u32 %v1232, 23
    %v1234 = vor.u32 4788187, %v1233
    %v1235 = vand.u32 2147483647, %v1234
    %v1237 = vcvt.s32.f32 %v1230
    %v1238 = vmul.f32 %v1237, %v1235
    %v1239 = vxor.u32 %v1238, 2147483648
    %v1240 = vsel %vm1157, %v1239, %v1238
    %v1241 = vsub.s32 4, %v1217
    %v1242 = vsel %vm1157, %v1241, %v1217
    %v1243 = vsel %vm1156, %v1147, %v1240
    %v1244 = vsel %vm1156, 0, %v1242
    %v1245 = vcosq.f32.pop %v1243
    %v1246 = vsinq.f32.pop %v1243
    %vm1247 = vweird.f32 %v1147
    %v1248 = vadd.s32 %v1244, 3
    %v1249 = vand.u32 %v1248, 3
    %vm1250 = vcmp.lt.s32.totalorder %v1249, 2
    %vm1251 = vcmp.eq.s32.totalorder %v1249, 0
    %v1252 = vxor.u32 %v1246, 2147483648
    %v1253 = vsel %vm1251, %v1245, %v1252
    %vm1254 = vcmp.eq.s32.totalorder %v1249, 2
    %v1255 = vxor.u32 %v1245, 2147483648
    %v1256 = vsel %vm1254, %v1255, %v1246
    %v1257 = vsel %vm1250, %v1253, %v1256
    %v1258 = vsel %vm1247, nan, %v1257
    %v1259 = vand.u32 2147483647, %v1148
    %vm1260 = vcmp.le.f32.partialorder %v1259, 0.7853982
    %vm1261 = vcmp.lt.s32.totalorder %v1148, 0
    %v1262 = vand.u32 %v1148, 2139095040
    %v1263 = vshrl.u32 %v1262, 23
    %v1264 = vsub.s32 %v1263, 127
    %v1265 = vand.u32 2147483647, %v1148
    %v1266 = vand.u32 %v1265, 8388607
    %v1267 = vor.u32 %v1266, 8388608
    %v1268 = vsub.s32 0, %v1267
    %v1269 = vadd.s32 %v1264, 1
    %vm1270 = vcmp.gt.s32.totalorder %v1269, 0
    %v1271 = vsel %vm1270, %v1269, 0
    %v1272 = vshrl.u32 %v1271, 5
    %v1273 = vand.u32 %v1271, 31
    %v1274 = vsub.s32 32, %v1273
    %v1275 = vshrl.u32 683565275, %v1274
    %v1276 = vshll.u32 683565275, %v1273
    %v1277 = vshrl.u32 2475754826, %v1274
    %v1278 = vor.u32 %v1276, %v1277
    %v1279 = vshll.u32 2475754826, %v1273
    %v1280 = vshrl.u32 2131351028, %v1274
    %v1281 = vor.u32 %v1279, %v1280
    %v1282 = vshll.u32 2131351028, %v1273
    %v1283 = vshrl.u32 2102212464, %v1274
    %v1284 = vor.u32 %v1282, %v1283
    %v1285 = vshll.u32 2102212464, %v1273
    %v1286 = vshrl.u32 920167782, %v1274
    %v1287 = vor.u32 %v1285, %v1286
    %v1288 = vshll.u32 920167782, %v1273
    %v1289 = vshrl.u32 1326507024, %v1274
    %v1290 = vor.u32 %v1288, %v1289
    %vm1291 = vcmp.lt.s32.totalorder %v1272, 1
    %vm1292 = vcmp.lt.s32.totalorder %v1272, 2
    %vm1293 = vcmp.lt.s32.totalorder %v1272, 3
    %vm1294 = vcmp.lt.s32.totalorder %v1272, 4
    %v1295 = vsel %vm1291, %v1275, %v1278
    %v1296 = vsel %vm1294, %v1284, 2102212464
    %v1297 = vsel %vm1293, %v1281, %v1296
    %v1298 = vsel %vm1292, %v1295, %v1297
    %v1299 = vsel %vm1291, %v1278, %v1281
    %v1300 = vsel %vm1294, %v1287, 920167782
    %v1301 = vsel %vm1293, %v1284, %v1300
    %v1302 = vsel %vm1292, %v1299, %v1301
    %v1303 = vsel %vm1291, %v1281, %v1284
    %v1304 = vsel %vm1294, %v1290, 1326507024
    %v1305 = vsel %vm1293, %v1287, %v1304
    %v1306 = vsel %vm1292, %v1303, %v1305
    %v1307 = vshll.u32 %v1267, 8
    %v1308 = vmul.u32.u64.compose %v1307, %v1306
    %v1309 = vextract.low.u32 %v1308
    %v1310 = vextract.high.u32 %v1308
    %v1311 = vmul.u32.u64.compose %v1307, %v1302
    %v1312 = vextract.low.u32 %v1311
    %v1313 = vextract.high.u32 %v1311
    %v1314 = vmul.u32 %v1307, %v1298
    %v1315 = vadd.s32 %v1310, %v1312
    %vm1316 = vc.u32 %v1310, %v1312
    %v1317 = vadd.s32 %v1313, 1
    %v1318 = vsel %vm1316, %v1317, %v1313
    %v1319 = vadd.s32 %v1314, %v1318
    %v1320 = vadd.s32 %v1319, 536870912
    %v1321 = vshrl.u32 %v1320, 30
    %v1322 = vshll.u32 %v1321, 30
    %v1323 = vsub.s32 %v1319, %v1322
    %vm1324 = vcmp.lt.s32.totalorder %v1323, 0
    %v1325 = vsub.s32 0, %v1323
    %v1326 = vsel %vm1324, %v1325, %v1323
    %v1327 = vclz %v1326
    %v1328 = vsub.s32 %v1327, 2
    %vm1329 = vcmp.gt.s32.totalorder 0, %v1328
    %v1330 = vsel %vm1329, 0, %v1328
    %v1331 = vsub.s32 32, %v1330
    %v1332 = vshll.u32 %v1323, %v1330
    %v1333 = vshrl.u32 %v1315, %v1331
    %v1334 = vor.u32 %v1332, %v1333
    %v1335 = vsub.s32 4294967266, %v1330
    %v1336 = vadd.s32 %v1335, 127
    %v1337 = vshll.u32 %v1336, 23
    %v1338 = vor.u32 4788187, %v1337
    %v1339 = vand.u32 2147483647, %v1338
    %v1341 = vcvt.s32.f32 %v1334
    %v1342 = vmul.f32 %v1341, %v1339
    %v1343 = vxor.u32 %v1342, 2147483648
    %v1344 = vsel %vm1261, %v1343, %v1342
    %v1345 = vsub.s32 4, %v1321
    %v1346 = vsel %vm1261, %v1345, %v1321
    %v1347 = vsel %vm1260, %v1148, %v1344
    %v1348 = vsel %vm1260, 0, %v1346
    %v1349 = vcosq.f32.pop %v1347
    %v1350 = vsinq.f32.pop %v1347
    %vm1351 = vweird.f32 %v1148
    %v1352 = vadd.s32 %v1348, 3
    %v1353 = vand.u32 %v1352, 3
    %vm1354 = vcmp.lt.s32.totalorder %v1353, 2
    %vm1355 = vcmp.eq.s32.totalorder %v1353, 0
    %v1356 = vxor.u32 %v1350, 2147483648
    %v1357 = vsel %vm1355, %v1349, %v1356
    %vm1358 = vcmp.eq.s32.totalorder %v1353, 2
    %v1359 = vxor.u32 %v1349, 2147483648
    %v1360 = vsel %vm1358, %v1359, %v1350
    %v1361 = vsel %vm1354, %v1357, %v1360
    %v1362 = vsel %vm1351, nan, %v1361
    %v1363 = vand.u32 2147483647, %v1149
    %vm1364 = vcmp.le.f32.partialorder %v1363, 0.7853982
    %vm1365 = vcmp.lt.s32.totalorder %v1149, 0
    %v1366 = vand.u32 %v1149, 2139095040
    %v1367 = vshrl.u32 %v1366, 23
    %v1368 = vsub.s32 %v1367, 127
    %v1369 = vand.u32 2147483647, %v1149
    %v1370 = vand.u32 %v1369, 8388607
    %v1371 = vor.u32 %v1370, 8388608
    %v1372 = vsub.s32 0, %v1371
    %v1373 = vadd.s32 %v1368, 1
    %vm1374 = vcmp.gt.s32.totalorder %v1373, 0
    %v1375 = vsel %vm1374, %v1373, 0
    %v1376 = vshrl.u32 %v1375, 5
    %v1377 = vand.u32 %v1375, 31
    %v1378 = vsub.s32 32, %v1377
    %v1379 = vshrl.u32 683565275, %v1378
    %v1380 = vshll.u32 683565275, %v1377
    %v1381 = vshrl.u32 2475754826, %v1378
    %v1382 = vor.u32 %v1380, %v1381
    %v1383 = vshll.u32 2475754826, %v1377
    %v1384 = vshrl.u32 2131351028, %v1378
    %v1385 = vor.u32 %v1383, %v1384
    %v1386 = vshll.u32 2131351028, %v1377
    %v1387 = vshrl.u32 2102212464, %v1378
    %v1388 = vor.u32 %v1386, %v1387
    %v1389 = vshll.u32 2102212464, %v1377
    %v1390 = vshrl.u32 920167782, %v1378
    %v1391 = vor.u32 %v1389, %v1390
    %v1392 = vshll.u32 920167782, %v1377
    %v1393 = vshrl.u32 1326507024, %v1378
    %v1394 = vor.u32 %v1392, %v1393
    %vm1395 = vcmp.lt.s32.totalorder %v1376, 1
    %vm1396 = vcmp.lt.s32.totalorder %v1376, 2
    %vm1397 = vcmp.lt.s32.totalorder %v1376, 3
    %vm1398 = vcmp.lt.s32.totalorder %v1376, 4
    %v1399 = vsel %vm1395, %v1379, %v1382
    %v1400 = vsel %vm1398, %v1388, 2102212464
    %v1401 = vsel %vm1397, %v1385, %v1400
    %v1402 = vsel %vm1396, %v1399, %v1401
    %v1403 = vsel %vm1395, %v1382, %v1385
    %v1404 = vsel %vm1398, %v1391, 920167782
    %v1405 = vsel %vm1397, %v1388, %v1404
    %v1406 = vsel %vm1396, %v1403, %v1405
    %v1407 = vsel %vm1395, %v1385, %v1388
    %v1408 = vsel %vm1398, %v1394, 1326507024
    %v1409 = vsel %vm1397, %v1391, %v1408
    %v1410 = vsel %vm1396, %v1407, %v1409
    %v1411 = vshll.u32 %v1371, 8
    %v1412 = vmul.u32.u64.compose %v1411, %v1410
    %v1413 = vextract.low.u32 %v1412
    %v1414 = vextract.high.u32 %v1412
    %v1415 = vmul.u32.u64.compose %v1411, %v1406
    %v1416 = vextract.low.u32 %v1415
    %v1417 = vextract.high.u32 %v1415
    %v1418 = vmul.u32 %v1411, %v1402
    %v1419 = vadd.s32 %v1414, %v1416
    %vm1420 = vc.u32 %v1414, %v1416
    %v1421 = vadd.s32 %v1417, 1
    %v1422 = vsel %vm1420, %v1421, %v1417
    %v1423 = vadd.s32 %v1418, %v1422
    %v1424 = vadd.s32 %v1423, 536870912
    %v1425 = vshrl.u32 %v1424, 30
    %v1426 = vshll.u32 %v1425, 30
    %v1427 = vsub.s32 %v1423, %v1426
    %vm1428 = vcmp.lt.s32.totalorder %v1427, 0
    %v1429 = vsub.s32 0, %v1427
    %v1430 = vsel %vm1428, %v1429, %v1427
    %v1431 = vclz %v1430
    %v1432 = vsub.s32 %v1431, 2
    %vm1433 = vcmp.gt.s32.totalorder 0, %v1432
    %v1434 = vsel %vm1433, 0, %v1432
    %v1435 = vsub.s32 32, %v1434
    %v1436 = vshll.u32 %v1427, %v1434
    %v1437 = vshrl.u32 %v1419, %v1435
    %v1438 = vor.u32 %v1436, %v1437
    %v1439 = vsub.s32 4294967266, %v1434
    %v1440 = vadd.s32 %v1439, 127
    %v1441 = vshll.u32 %v1440, 23
    %v1442 = vor.u32 4788187, %v1441
    %v1443 = vand.u32 2147483647, %v1442
    %v1445 = vcvt.s32.f32 %v1438
    %v1446 = vmul.f32 %v1445, %v1443
    %v1447 = vxor.u32 %v1446, 2147483648
    %v1448 = vsel %vm1365, %v1447, %v1446
    %v1449 = vsub.s32 4, %v1425
    %v1450 = vsel %vm1365, %v1449, %v1425
    %v1451 = vsel %vm1364, %v1149, %v1448
    %v1452 = vsel %vm1364, 0, %v1450
    %v1453 = vcosq.f32.pop %v1451
    %v1454 = vsinq.f32.pop %v1451
    %vm1455 = vweird.f32 %v1149
    %v1456 = vadd.s32 %v1452, 3
    %v1457 = vand.u32 %v1456, 3
    %vm1458 = vcmp.lt.s32.totalorder %v1457, 2
    %vm1459 = vcmp.eq.s32.totalorder %v1457, 0
    %v1460 = vxor.u32 %v1454, 2147483648
    %v1461 = vsel %vm1459, %v1453, %v1460
    %vm1462 = vcmp.eq.s32.totalorder %v1457, 2
    %v1463 = vxor.u32 %v1453, 2147483648
    %v1464 = vsel %vm1462, %v1463, %v1454
    %v1465 = vsel %vm1458, %v1461, %v1464
    %v1466 = vsel %vm1455, nan, %v1465
    %v1467 = vand.u32 2147483647, %v1150
    %vm1468 = vcmp.le.f32.partialorder %v1467, 0.7853982
    %vm1469 = vcmp.lt.s32.totalorder %v1150, 0
    %v1470 = vand.u32 %v1150, 2139095040
    %v1471 = vshrl.u32 %v1470, 23
    %v1472 = vsub.s32 %v1471, 127
    %v1473 = vand.u32 2147483647, %v1150
    %v1474 = vand.u32 %v1473, 8388607
    %v1475 = vor.u32 %v1474, 8388608
    %v1476 = vsub.s32 0, %v1475
    %v1477 = vadd.s32 %v1472, 1
    %vm1478 = vcmp.gt.s32.totalorder %v1477, 0
    %v1479 = vsel %vm1478, %v1477, 0
    %v1480 = vshrl.u32 %v1479, 5
    %v1481 = vand.u32 %v1479, 31
    %v1482 = vsub.s32 32, %v1481
    %v1483 = vshrl.u32 683565275, %v1482
    %v1484 = vshll.u32 683565275, %v1481
    %v1485 = vshrl.u32 2475754826, %v1482
    %v1486 = vor.u32 %v1484, %v1485
    %v1487 = vshll.u32 2475754826, %v1481
    %v1488 = vshrl.u32 2131351028, %v1482
    %v1489 = vor.u32 %v1487, %v1488
    %v1490 = vshll.u32 2131351028, %v1481
    %v1491 = vshrl.u32 2102212464, %v1482
    %v1492 = vor.u32 %v1490, %v1491
    %v1493 = vshll.u32 2102212464, %v1481
    %v1494 = vshrl.u32 920167782, %v1482
    %v1495 = vor.u32 %v1493, %v1494
    %v1496 = vshll.u32 920167782, %v1481
    %v1497 = vshrl.u32 1326507024, %v1482
    %v1498 = vor.u32 %v1496, %v1497
    %vm1499 = vcmp.lt.s32.totalorder %v1480, 1
    %vm1500 = vcmp.lt.s32.totalorder %v1480, 2
    %vm1501 = vcmp.lt.s32.totalorder %v1480, 3
    %vm1502 = vcmp.lt.s32.totalorder %v1480, 4
    %v1503 = vsel %vm1499, %v1483, %v1486
    %v1504 = vsel %vm1502, %v1492, 2102212464
    %v1505 = vsel %vm1501, %v1489, %v1504
    %v1506 = vsel %vm1500, %v1503, %v1505
    %v1507 = vsel %vm1499, %v1486, %v1489
    %v1508 = vsel %vm1502, %v1495, 920167782
    %v1509 = vsel %vm1501, %v1492, %v1508
    %v1510 = vsel %vm1500, %v1507, %v1509
    %v1511 = vsel %vm1499, %v1489, %v1492
    %v1512 = vsel %vm1502, %v1498, 1326507024
    %v1513 = vsel %vm1501, %v1495, %v1512
    %v1514 = vsel %vm1500, %v1511, %v1513
    %v1515 = vshll.u32 %v1475, 8
    %v1516 = vmul.u32.u64.compose %v1515, %v1514
    %v1517 = vextract.low.u32 %v1516
    %v1518 = vextract.high.u32 %v1516
    %v1519 = vmul.u32.u64.compose %v1515, %v1510
    %v1520 = vextract.low.u32 %v1519
    %v1521 = vextract.high.u32 %v1519
    %v1522 = vmul.u32 %v1515, %v1506
    %v1523 = vadd.s32 %v1518, %v1520
    %vm1524 = vc.u32 %v1518, %v1520
    %v1525 = vadd.s32 %v1521, 1
    %v1526 = vsel %vm1524, %v1525, %v1521
    %v1527 = vadd.s32 %v1522, %v1526
    %v1528 = vadd.s32 %v1527, 536870912
    %v1529 = vshrl.u32 %v1528, 30
    %v1530 = vshll.u32 %v1529, 30
    %v1531 = vsub.s32 %v1527, %v1530
    %vm1532 = vcmp.lt.s32.totalorder %v1531, 0
    %v1533 = vsub.s32 0, %v1531
    %v1534 = vsel %vm1532, %v1533, %v1531
    %v1535 = vclz %v1534
    %v1536 = vsub.s32 %v1535, 2
    %vm1537 = vcmp.gt.s32.totalorder 0, %v1536
    %v1538 = vsel %vm1537, 0, %v1536
    %v1539 = vsub.s32 32, %v1538
    %v1540 = vshll.u32 %v1531, %v1538
    %v1541 = vshrl.u32 %v1523, %v1539
    %v1542 = vor.u32 %v1540, %v1541
    %v1543 = vsub.s32 4294967266, %v1538
    %v1544 = vadd.s32 %v1543, 127
    %v1545 = vshll.u32 %v1544, 23
    %v1546 = vor.u32 4788187, %v1545
    %v1547 = vand.u32 2147483647, %v1546
    %v1549 = vcvt.s32.f32 %v1542
    %v1550 = vmul.f32 %v1549, %v1547
    %v1551 = vxor.u32 %v1550, 2147483648
    %v1552 = vsel %vm1469, %v1551, %v1550
    %v1553 = vsub.s32 4, %v1529
    %v1554 = vsel %vm1469, %v1553, %v1529
    %v1555 = vsel %vm1468, %v1150, %v1552
    %v1556 = vsel %vm1468, 0, %v1554
    %v1557 = vcosq.f32.pop %v1555
    %v1558 = vsinq.f32.pop %v1555
    %vm1559 = vweird.f32 %v1150
    %v1560 = vadd.s32 %v1556, 3
    %v1561 = vand.u32 %v1560, 3
    %vm1562 = vcmp.lt.s32.totalorder %v1561, 2
    %vm1563 = vcmp.eq.s32.totalorder %v1561, 0
    %v1564 = vxor.u32 %v1558, 2147483648
    %v1565 = vsel %vm1563, %v1557, %v1564
    %vm1566 = vcmp.eq.s32.totalorder %v1561, 2
    %v1567 = vxor.u32 %v1557, 2147483648
    %v1568 = vsel %vm1566, %v1567, %v1558
    %v1569 = vsel %vm1562, %v1565, %v1568
    %v1570 = vsel %vm1559, nan, %v1569
    %v1571 = vand.u32 2147483647, %v1151
    %vm1572 = vcmp.le.f32.partialorder %v1571, 0.7853982
    %vm1573 = vcmp.lt.s32.totalorder %v1151, 0
    %v1574 = vand.u32 %v1151, 2139095040
    %v1575 = vshrl.u32 %v1574, 23
    %v1576 = vsub.s32 %v1575, 127
    %v1577 = vand.u32 2147483647, %v1151
    %v1578 = vand.u32 %v1577, 8388607
    %v1579 = vor.u32 %v1578, 8388608
    %v1580 = vsub.s32 0, %v1579
    %v1581 = vadd.s32 %v1576, 1
    %vm1582 = vcmp.gt.s32.totalorder %v1581, 0
    %v1583 = vsel %vm1582, %v1581, 0
    %v1584 = vshrl.u32 %v1583, 5
    %v1585 = vand.u32 %v1583, 31
    %v1586 = vsub.s32 32, %v1585
    %v1587 = vshrl.u32 683565275, %v1586
    %v1588 = vshll.u32 683565275, %v1585
    %v1589 = vshrl.u32 2475754826, %v1586
    %v1590 = vor.u32 %v1588, %v1589
    %v1591 = vshll.u32 2475754826, %v1585
    %v1592 = vshrl.u32 2131351028, %v1586
    %v1593 = vor.u32 %v1591, %v1592
    %v1594 = vshll.u32 2131351028, %v1585
    %v1595 = vshrl.u32 2102212464, %v1586
    %v1596 = vor.u32 %v1594, %v1595
    %v1597 = vshll.u32 2102212464, %v1585
    %v1598 = vshrl.u32 920167782, %v1586
    %v1599 = vor.u32 %v1597, %v1598
    %v1600 = vshll.u32 920167782, %v1585
    %v1601 = vshrl.u32 1326507024, %v1586
    %v1602 = vor.u32 %v1600, %v1601
    %vm1603 = vcmp.lt.s32.totalorder %v1584, 1
    %vm1604 = vcmp.lt.s32.totalorder %v1584, 2
    %vm1605 = vcmp.lt.s32.totalorder %v1584, 3
    %vm1606 = vcmp.lt.s32.totalorder %v1584, 4
    %v1607 = vsel %vm1603, %v1587, %v1590
    %v1608 = vsel %vm1606, %v1596, 2102212464
    %v1609 = vsel %vm1605, %v1593, %v1608
    %v1610 = vsel %vm1604, %v1607, %v1609
    %v1611 = vsel %vm1603, %v1590, %v1593
    %v1612 = vsel %vm1606, %v1599, 920167782
    %v1613 = vsel %vm1605, %v1596, %v1612
    %v1614 = vsel %vm1604, %v1611, %v1613
    %v1615 = vsel %vm1603, %v1593, %v1596
    %v1616 = vsel %vm1606, %v1602, 1326507024
    %v1617 = vsel %vm1605, %v1599, %v1616
    %v1618 = vsel %vm1604, %v1615, %v1617
    %v1619 = vshll.u32 %v1579, 8
    %v1620 = vmul.u32.u64.compose %v1619, %v1618
    %v1621 = vextract.low.u32 %v1620
    %v1622 = vextract.high.u32 %v1620
    %v1623 = vmul.u32.u64.compose %v1619, %v1614
    %v1624 = vextract.low.u32 %v1623
    %v1625 = vextract.high.u32 %v1623
    %v1626 = vmul.u32 %v1619, %v1610
    %v1627 = vadd.s32 %v1622, %v1624
    %vm1628 = vc.u32 %v1622, %v1624
    %v1629 = vadd.s32 %v1625, 1
    %v1630 = vsel %vm1628, %v1629, %v1625
    %v1631 = vadd.s32 %v1626, %v1630
    %v1632 = vadd.s32 %v1631, 536870912
    %v1633 = vshrl.u32 %v1632, 30
    %v1634 = vshll.u32 %v1633, 30
    %v1635 = vsub.s32 %v1631, %v1634
    %vm1636 = vcmp.lt.s32.totalorder %v1635, 0
    %v1637 = vsub.s32 0, %v1635
    %v1638 = vsel %vm1636, %v1637, %v1635
    %v1639 = vclz %v1638
    %v1640 = vsub.s32 %v1639, 2
    %vm1641 = vcmp.gt.s32.totalorder 0, %v1640
    %v1642 = vsel %vm1641, 0, %v1640
    %v1643 = vsub.s32 32, %v1642
    %v1644 = vshll.u32 %v1635, %v1642
    %v1645 = vshrl.u32 %v1627, %v1643
    %v1646 = vor.u32 %v1644, %v1645
    %v1647 = vsub.s32 4294967266, %v1642
    %v1648 = vadd.s32 %v1647, 127
    %v1649 = vshll.u32 %v1648, 23
    %v1650 = vor.u32 4788187, %v1649
    %v1651 = vand.u32 2147483647, %v1650
    %v1653 = vcvt.s32.f32 %v1646
    %v1654 = vmul.f32 %v1653, %v1651
    %v1655 = vxor.u32 %v1654, 2147483648
    %v1656 = vsel %vm1573, %v1655, %v1654
    %v1657 = vsub.s32 4, %v1633
    %v1658 = vsel %vm1573, %v1657, %v1633
    %v1659 = vsel %vm1572, %v1151, %v1656
    %v1660 = vsel %vm1572, 0, %v1658
    %v1661 = vcosq.f32.pop %v1659
    %v1662 = vsinq.f32.pop %v1659
    %vm1663 = vweird.f32 %v1151
    %v1664 = vadd.s32 %v1660, 3
    %v1665 = vand.u32 %v1664, 3
    %vm1666 = vcmp.lt.s32.totalorder %v1665, 2
    %vm1667 = vcmp.eq.s32.totalorder %v1665, 0
    %v1668 = vxor.u32 %v1662, 2147483648
    %v1669 = vsel %vm1667, %v1661, %v1668
    %vm1670 = vcmp.eq.s32.totalorder %v1665, 2
    %v1671 = vxor.u32 %v1661, 2147483648
    %v1672 = vsel %vm1670, %v1671, %v1662
    %v1673 = vsel %vm1666, %v1669, %v1672
    %v1674 = vsel %vm1663, nan, %v1673
    %v1675 = vand.u32 2147483647, %v1152
    %vm1676 = vcmp.le.f32.partialorder %v1675, 0.7853982
    %vm1677 = vcmp.lt.s32.totalorder %v1152, 0
    %v1678 = vand.u32 %v1152, 2139095040
    %v1679 = vshrl.u32 %v1678, 23
    %v1680 = vsub.s32 %v1679, 127
    %v1681 = vand.u32 2147483647, %v1152
    %v1682 = vand.u32 %v1681, 8388607
    %v1683 = vor.u32 %v1682, 8388608
    %v1684 = vsub.s32 0, %v1683
    %v1685 = vadd.s32 %v1680, 1
    %vm1686 = vcmp.gt.s32.totalorder %v1685, 0
    %v1687 = vsel %vm1686, %v1685, 0
    %v1688 = vshrl.u32 %v1687, 5
    %v1689 = vand.u32 %v1687, 31
    %v1690 = vsub.s32 32, %v1689
    %v1691 = vshrl.u32 683565275, %v1690
    %v1692 = vshll.u32 683565275, %v1689
    %v1693 = vshrl.u32 2475754826, %v1690
    %v1694 = vor.u32 %v1692, %v1693
    %v1695 = vshll.u32 2475754826, %v1689
    %v1696 = vshrl.u32 2131351028, %v1690
    %v1697 = vor.u32 %v1695, %v1696
    %v1698 = vshll.u32 2131351028, %v1689
    %v1699 = vshrl.u32 2102212464, %v1690
    %v1700 = vor.u32 %v1698, %v1699
    %v1701 = vshll.u32 2102212464, %v1689
    %v1702 = vshrl.u32 920167782, %v1690
    %v1703 = vor.u32 %v1701, %v1702
    %v1704 = vshll.u32 920167782, %v1689
    %v1705 = vshrl.u32 1326507024, %v1690
    %v1706 = vor.u32 %v1704, %v1705
    %vm1707 = vcmp.lt.s32.totalorder %v1688, 1
    %vm1708 = vcmp.lt.s32.totalorder %v1688, 2
    %vm1709 = vcmp.lt.s32.totalorder %v1688, 3
    %vm1710 = vcmp.lt.s32.totalorder %v1688, 4
    %v1711 = vsel %vm1707, %v1691, %v1694
    %v1712 = vsel %vm1710, %v1700, 2102212464
    %v1713 = vsel %vm1709, %v1697, %v1712
    %v1714 = vsel %vm1708, %v1711, %v1713
    %v1715 = vsel %vm1707, %v1694, %v1697
    %v1716 = vsel %vm1710, %v1703, 920167782
    %v1717 = vsel %vm1709, %v1700, %v1716
    %v1718 = vsel %vm1708, %v1715, %v1717
    %v1719 = vsel %vm1707, %v1697, %v1700
    %v1720 = vsel %vm1710, %v1706, 1326507024
    %v1721 = vsel %vm1709, %v1703, %v1720
    %v1722 = vsel %vm1708, %v1719, %v1721
    %v1723 = vshll.u32 %v1683, 8
    %v1724 = vmul.u32.u64.compose %v1723, %v1722
    %v1725 = vextract.low.u32 %v1724
    %v1726 = vextract.high.u32 %v1724
    %v1727 = vmul.u32.u64.compose %v1723, %v1718
    %v1728 = vextract.low.u32 %v1727
    %v1729 = vextract.high.u32 %v1727
    %v1730 = vmul.u32 %v1723, %v1714
    %v1731 = vadd.s32 %v1726, %v1728
    %vm1732 = vc.u32 %v1726, %v1728
    %v1733 = vadd.s32 %v1729, 1
    %v1734 = vsel %vm1732, %v1733, %v1729
    %v1735 = vadd.s32 %v1730, %v1734
    %v1736 = vadd.s32 %v1735, 536870912
    %v1737 = vshrl.u32 %v1736, 30
    %v1738 = vshll.u32 %v1737, 30
    %v1739 = vsub.s32 %v1735, %v1738
    %vm1740 = vcmp.lt.s32.totalorder %v1739, 0
    %v1741 = vsub.s32 0, %v1739
    %v1742 = vsel %vm1740, %v1741, %v1739
    %v1743 = vclz %v1742
    %v1744 = vsub.s32 %v1743, 2
    %vm1745 = vcmp.gt.s32.totalorder 0, %v1744
    %v1746 = vsel %vm1745, 0, %v1744
    %v1747 = vsub.s32 32, %v1746
    %v1748 = vshll.u32 %v1739, %v1746
    %v1749 = vshrl.u32 %v1731, %v1747
    %v1750 = vor.u32 %v1748, %v1749
    %v1751 = vsub.s32 4294967266, %v1746
    %v1752 = vadd.s32 %v1751, 127
    %v1753 = vshll.u32 %v1752, 23
    %v1754 = vor.u32 4788187, %v1753
    %v1755 = vand.u32 2147483647, %v1754
    %v1757 = vcvt.s32.f32 %v1750
    %v1758 = vmul.f32 %v1757, %v1755
    %v1759 = vxor.u32 %v1758, 2147483648
    %v1760 = vsel %vm1677, %v1759, %v1758
    %v1761 = vsub.s32 4, %v1737
    %v1762 = vsel %vm1677, %v1761, %v1737
    %v1763 = vsel %vm1676, %v1152, %v1760
    %v1764 = vsel %vm1676, 0, %v1762
    %v1765 = vcosq.f32.pop %v1763
    %v1766 = vsinq.f32.pop %v1763
    %vm1767 = vweird.f32 %v1152
    %v1768 = vadd.s32 %v1764, 3
    %v1769 = vand.u32 %v1768, 3
    %vm1770 = vcmp.lt.s32.totalorder %v1769, 2
    %vm1771 = vcmp.eq.s32.totalorder %v1769, 0
    %v1772 = vxor.u32 %v1766, 2147483648
    %v1773 = vsel %vm1771, %v1765, %v1772
    %vm1774 = vcmp.eq.s32.totalorder %v1769, 2
    %v1775 = vxor.u32 %v1765, 2147483648
    %v1776 = vsel %vm1774, %v1775, %v1766
    %v1777 = vsel %vm1770, %v1773, %v1776
    %v1778 = vsel %vm1767, nan, %v1777
    %v1779 = vand.u32 2147483647, %v1153
    %vm1780 = vcmp.le.f32.partialorder %v1779, 0.7853982
    %vm1781 = vcmp.lt.s32.totalorder %v1153, 0
    %v1782 = vand.u32 %v1153, 2139095040
    %v1783 = vshrl.u32 %v1782, 23
    %v1784 = vsub.s32 %v1783, 127
    %v1785 = vand.u32 2147483647, %v1153
    %v1786 = vand.u32 %v1785, 8388607
    %v1787 = vor.u32 %v1786, 8388608
    %v1788 = vsub.s32 0, %v1787
    %v1789 = vadd.s32 %v1784, 1
    %vm1790 = vcmp.gt.s32.totalorder %v1789, 0
    %v1791 = vsel %vm1790, %v1789, 0
    %v1792 = vshrl.u32 %v1791, 5
    %v1793 = vand.u32 %v1791, 31
    %v1794 = vsub.s32 32, %v1793
    %v1795 = vshrl.u32 683565275, %v1794
    %v1796 = vshll.u32 683565275, %v1793
    %v1797 = vshrl.u32 2475754826, %v1794
    %v1798 = vor.u32 %v1796, %v1797
    %v1799 = vshll.u32 2475754826, %v1793
    %v1800 = vshrl.u32 2131351028, %v1794
    %v1801 = vor.u32 %v1799, %v1800
    %v1802 = vshll.u32 2131351028, %v1793
    %v1803 = vshrl.u32 2102212464, %v1794
    %v1804 = vor.u32 %v1802, %v1803
    %v1805 = vshll.u32 2102212464, %v1793
    %v1806 = vshrl.u32 920167782, %v1794
    %v1807 = vor.u32 %v1805, %v1806
    %v1808 = vshll.u32 920167782, %v1793
    %v1809 = vshrl.u32 1326507024, %v1794
    %v1810 = vor.u32 %v1808, %v1809
    %vm1811 = vcmp.lt.s32.totalorder %v1792, 1
    %vm1812 = vcmp.lt.s32.totalorder %v1792, 2
    %vm1813 = vcmp.lt.s32.totalorder %v1792, 3
    %vm1814 = vcmp.lt.s32.totalorder %v1792, 4
    %v1815 = vsel %vm1811, %v1795, %v1798
    %v1816 = vsel %vm1814, %v1804, 2102212464
    %v1817 = vsel %vm1813, %v1801, %v1816
    %v1818 = vsel %vm1812, %v1815, %v1817
    %v1819 = vsel %vm1811, %v1798, %v1801
    %v1820 = vsel %vm1814, %v1807, 920167782
    %v1821 = vsel %vm1813, %v1804, %v1820
    %v1822 = vsel %vm1812, %v1819, %v1821
    %v1823 = vsel %vm1811, %v1801, %v1804
    %v1824 = vsel %vm1814, %v1810, 1326507024
    %v1825 = vsel %vm1813, %v1807, %v1824
    %v1826 = vsel %vm1812, %v1823, %v1825
    %v1827 = vshll.u32 %v1787, 8
    %v1828 = vmul.u32.u64.compose %v1827, %v1826
    %v1829 = vextract.low.u32 %v1828
    %v1830 = vextract.high.u32 %v1828
    %v1831 = vmul.u32.u64.compose %v1827, %v1822
    %v1832 = vextract.low.u32 %v1831
    %v1833 = vextract.high.u32 %v1831
    %v1834 = vmul.u32 %v1827, %v1818
    %v1835 = vadd.s32 %v1830, %v1832
    %vm1836 = vc.u32 %v1830, %v1832
    %v1837 = vadd.s32 %v1833, 1
    %v1838 = vsel %vm1836, %v1837, %v1833
    %v1839 = vadd.s32 %v1834, %v1838
    %v1840 = vadd.s32 %v1839, 536870912
    %v1841 = vshrl.u32 %v1840, 30
    %v1842 = vshll.u32 %v1841, 30
    %v1843 = vsub.s32 %v1839, %v1842
    %vm1844 = vcmp.lt.s32.totalorder %v1843, 0
    %v1845 = vsub.s32 0, %v1843
    %v1846 = vsel %vm1844, %v1845, %v1843
    %v1847 = vclz %v1846
    %v1848 = vsub.s32 %v1847, 2
    %vm1849 = vcmp.gt.s32.totalorder 0, %v1848
    %v1850 = vsel %vm1849, 0, %v1848
    %v1851 = vsub.s32 32, %v1850
    %v1852 = vshll.u32 %v1843, %v1850
    %v1853 = vshrl.u32 %v1835, %v1851
    %v1854 = vor.u32 %v1852, %v1853
    %v1855 = vsub.s32 4294967266, %v1850
    %v1856 = vadd.s32 %v1855, 127
    %v1857 = vshll.u32 %v1856, 23
    %v1858 = vor.u32 4788187, %v1857
    %v1859 = vand.u32 2147483647, %v1858
    %v1861 = vcvt.s32.f32 %v1854
    %v1862 = vmul.f32 %v1861, %v1859
    %v1863 = vxor.u32 %v1862, 2147483648
    %v1864 = vsel %vm1781, %v1863, %v1862
    %v1865 = vsub.s32 4, %v1841
    %v1866 = vsel %vm1781, %v1865, %v1841
    %v1867 = vsel %vm1780, %v1153, %v1864
    %v1868 = vsel %vm1780, 0, %v1866
    %v1869 = vcosq.f32.pop %v1867
    %v1870 = vsinq.f32.pop %v1867
    %vm1871 = vweird.f32 %v1153
    %v1872 = vadd.s32 %v1868, 3
    %v1873 = vand.u32 %v1872, 3
    %vm1874 = vcmp.lt.s32.totalorder %v1873, 2
    %vm1875 = vcmp.eq.s32.totalorder %v1873, 0
    %v1876 = vxor.u32 %v1870, 2147483648
    %v1877 = vsel %vm1875, %v1869, %v1876
    %vm1878 = vcmp.eq.s32.totalorder %v1873, 2
    %v1879 = vxor.u32 %v1869, 2147483648
    %v1880 = vsel %vm1878, %v1879, %v1870
    %v1881 = vsel %vm1874, %v1877, %v1880
    %v1882 = vsel %vm1871, nan, %v1881
    %v1883 = vand.u32 2147483647, %v1154
    %vm1884 = vcmp.le.f32.partialorder %v1883, 0.7853982
    %vm1885 = vcmp.lt.s32.totalorder %v1154, 0
    %v1886 = vand.u32 %v1154, 2139095040
    %v1887 = vshrl.u32 %v1886, 23
    %v1888 = vsub.s32 %v1887, 127
    %v1889 = vand.u32 2147483647, %v1154
    %v1890 = vand.u32 %v1889, 8388607
    %v1891 = vor.u32 %v1890, 8388608
    %v1892 = vsub.s32 0, %v1891
    %v1893 = vadd.s32 %v1888, 1
    %vm1894 = vcmp.gt.s32.totalorder %v1893, 0
    %v1895 = vsel %vm1894, %v1893, 0
    %v1896 = vshrl.u32 %v1895, 5
    %v1897 = vand.u32 %v1895, 31
    %v1898 = vsub.s32 32, %v1897
    %v1899 = vshrl.u32 683565275, %v1898
    %v1900 = vshll.u32 683565275, %v1897
    %v1901 = vshrl.u32 2475754826, %v1898
    %v1902 = vor.u32 %v1900, %v1901
    %v1903 = vshll.u32 2475754826, %v1897
    %v1904 = vshrl.u32 2131351028, %v1898
    %v1905 = vor.u32 %v1903, %v1904
    %v1906 = vshll.u32 2131351028, %v1897
    %v1907 = vshrl.u32 2102212464, %v1898
    %v1908 = vor.u32 %v1906, %v1907
    %v1909 = vshll.u32 2102212464, %v1897
    %v1910 = vshrl.u32 920167782, %v1898
    %v1911 = vor.u32 %v1909, %v1910
    %v1912 = vshll.u32 920167782, %v1897
    %v1913 = vshrl.u32 1326507024, %v1898
    %v1914 = vor.u32 %v1912, %v1913
    %vm1915 = vcmp.lt.s32.totalorder %v1896, 1
    %vm1916 = vcmp.lt.s32.totalorder %v1896, 2
    %vm1917 = vcmp.lt.s32.totalorder %v1896, 3
    %vm1918 = vcmp.lt.s32.totalorder %v1896, 4
    %v1919 = vsel %vm1915, %v1899, %v1902
    %v1920 = vsel %vm1918, %v1908, 2102212464
    %v1921 = vsel %vm1917, %v1905, %v1920
    %v1922 = vsel %vm1916, %v1919, %v1921
    %v1923 = vsel %vm1915, %v1902, %v1905
    %v1924 = vsel %vm1918, %v1911, 920167782
    %v1925 = vsel %vm1917, %v1908, %v1924
    %v1926 = vsel %vm1916, %v1923, %v1925
    %v1927 = vsel %vm1915, %v1905, %v1908
    %v1928 = vsel %vm1918, %v1914, 1326507024
    %v1929 = vsel %vm1917, %v1911, %v1928
    %v1930 = vsel %vm1916, %v1927, %v1929
    %v1931 = vshll.u32 %v1891, 8
    %v1932 = vmul.u32.u64.compose %v1931, %v1930
    %v1933 = vextract.low.u32 %v1932
    %v1934 = vextract.high.u32 %v1932
    %v1935 = vmul.u32.u64.compose %v1931, %v1926
    %v1936 = vextract.low.u32 %v1935
    %v1937 = vextract.high.u32 %v1935
    %v1938 = vmul.u32 %v1931, %v1922
    %v1939 = vadd.s32 %v1934, %v1936
    %vm1940 = vc.u32 %v1934, %v1936
    %v1941 = vadd.s32 %v1937, 1
    %v1942 = vsel %vm1940, %v1941, %v1937
    %v1943 = vadd.s32 %v1938, %v1942
    %v1944 = vadd.s32 %v1943, 536870912
    %v1945 = vshrl.u32 %v1944, 30
    %v1946 = vshll.u32 %v1945, 30
    %v1947 = vsub.s32 %v1943, %v1946
    %vm1948 = vcmp.lt.s32.totalorder %v1947, 0
    %v1949 = vsub.s32 0, %v1947
    %v1950 = vsel %vm1948, %v1949, %v1947
    %v1951 = vclz %v1950
    %v1952 = vsub.s32 %v1951, 2
    %vm1953 = vcmp.gt.s32.totalorder 0, %v1952
    %v1954 = vsel %vm1953, 0, %v1952
    %v1955 = vsub.s32 32, %v1954
    %v1956 = vshll.u32 %v1947, %v1954
    %v1957 = vshrl.u32 %v1939, %v1955
    %v1958 = vor.u32 %v1956, %v1957
    %v1959 = vsub.s32 4294967266, %v1954
    %v1960 = vadd.s32 %v1959, 127
    %v1961 = vshll.u32 %v1960, 23
    %v1962 = vor.u32 4788187, %v1961
    %v1963 = vand.u32 2147483647, %v1962
    %v1965 = vcvt.s32.f32 %v1958
    %v1966 = vmul.f32 %v1965, %v1963
    %v1967 = vxor.u32 %v1966, 2147483648
    %v1968 = vsel %vm1885, %v1967, %v1966
    %v1969 = vsub.s32 4, %v1945
    %v1970 = vsel %vm1885, %v1969, %v1945
    %v1971 = vsel %vm1884, %v1154, %v1968
    %v1972 = vsel %vm1884, 0, %v1970
    %v1973 = vcosq.f32.pop %v1971
    %v1974 = vsinq.f32.pop %v1971
    %vm1975 = vweird.f32 %v1154
    %v1976 = vadd.s32 %v1972, 3
    %v1977 = vand.u32 %v1976, 3
    %vm1978 = vcmp.lt.s32.totalorder %v1977, 2
    %vm1979 = vcmp.eq.s32.totalorder %v1977, 0
    %v1980 = vxor.u32 %v1974, 2147483648
    %v1981 = vsel %vm1979, %v1973, %v1980
    %vm1982 = vcmp.eq.s32.totalorder %v1977, 2
    %v1983 = vxor.u32 %v1973, 2147483648
    %v1984 = vsel %vm1982, %v1983, %v1974
    %v1985 = vsel %vm1978, %v1981, %v1984
    %v1986 = vsel %vm1975, nan, %v1985
    %v1987 = vmul.f32 %v1258, 1.4142135
    %v1988 = vmul.f32 %v1362, 1.4142135
    %v1989 = vmul.f32 %v1466, 1.4142135
    %v1990 = vmul.f32 %v1570, 1.4142135
    %v1991 = vmul.f32 %v1674, 1.4142135
    %v1992 = vmul.f32 %v1778, 1.4142135
    %v1993 = vmul.f32 %v1882, 1.4142135
    %v1994 = vmul.f32 %v1986, 1.4142135
    %v1995 = vld [vmem:[%s5] sm:$0xff]
    %v1996 = vld [vmem:[%s5 + $0x8] sm:$0xff]
    %v1997 = vld [vmem:[%s5 + $0x10] sm:$0xff]
    %v1998 = vld [vmem:[%s5 + $0x18] sm:$0xff]
    %v1999 = vld [vmem:[%s6] sm:$0xff]
    %v2000 = vld [vmem:[%s6 + $0x8] sm:$0xff]
    %v2001 = vld [vmem:[%s6 + $0x10] sm:$0xff]
    %v2002 = vld [vmem:[%s6 + $0x18] sm:$0xff]
    %2004 = vset.pattern.permute.xlu0 0
    %2005 = vperm.xlu0 %2004, %v1999
    %v2006 = vpop.permute.xlu0 %2005
    %2009 = vset.pattern.permute.xlu0 0
    %2010 = vperm.xlu0 %2009, %v2000
    %v2011 = vpop.permute.xlu0 %2010
    %2014 = vset.pattern.permute.xlu0 0
    %2015 = vperm.xlu0 %2014, %v2001
    %v2016 = vpop.permute.xlu0 %2015
    %2019 = vset.pattern.permute.xlu0 0
    %2020 = vperm.xlu0 %2019, %v2002
    %v2021 = vpop.permute.xlu0 %2020
    %v2024 = vsel %vm1045, %v1995, 0
    %v2027 = vsel %vm1045, %v1996, 0
    %v2030 = vsel %vm1045, %v1997, 0
    %v2033 = vsel %vm1045, %v1998, 0
    %2035 = vmatprep.subr.mxu0 0.0
    %2036 = vmatpush1.msra.mxu0 0.0
    %2037 = vmatprep.subr.mxu0 0.0
    %2038 = vmatpush1.msra.mxu0 0.0
    %2039 = vmatprep.subr.mxu0 0.0
    %2040 = vmatpush1.msra.mxu0 0.0
    %2041 = vmatprep.subr.mxu0 0.0
    %2042 = vmatpush1.msra.mxu0 0.0
    %2043 = vmatprep.subr.mxu0 0.0
    %2044 = vmatpush1.msra.mxu0 0.0
    %2045 = vmatprep.subr.mxu0 0.0
    %2046 = vmatpush1.msra.mxu0 0.0
    %2047 = vmatprep.subr.mxu0 0.0
    %2048 = vmatpush1.msra.mxu0 0.0
    %2049 = vmatprep.subr.mxu0 0.0
    %2050 = vmatpush1.msra.mxu0 0.0
    %2051 = vmatprep.subr.mxu0 0.0
    %2052 = vmatpush1.msra.mxu0 0.0
    %2053 = vmatprep.subr.mxu0 0.0
    %2054 = vmatpush1.msra.mxu0 0.0
    %2055 = vmatprep.subr.mxu0 0.0
    %2056 = vmatpush1.msra.mxu0 0.0
    %2057 = vmatprep.subr.mxu0 0.0
    %2058 = vmatpush1.msra.mxu0 0.0
    %2059 = vmatprep.subr.mxu0 %v1994
    %2060 = vmatpush1.msra.mxu0 %v1993
    %2061 = vmatprep.subr.mxu0 %v1992
    %2062 = vmatpush1.msra.mxu0 %v1991
    %2063 = vmatprep.subr.mxu0 %v1990
    %2064 = vmatpush1.msra.mxu0 %v1989
    %2065 = vmatprep.subr.mxu0 %v1988
    %2066 = vmatpush1.msra.mxu0 %v1987
    %2067 = vmatprep.subr.mxu0 0.0
    %2068 = vmatpush2.msra.mxu0 0.0
    %2069 = vmatprep.subr.mxu0 0.0
    %2070 = vmatpush2.msra.mxu0 0.0
    %2071 = vmatprep.subr.mxu0 0.0
    %2072 = vmatpush2.msra.mxu0 0.0
    %2073 = vmatprep.subr.mxu0 0.0
    %2074 = vmatpush2.msra.mxu0 0.0
    %2075 = vmatprep.subr.mxu0 0.0
    %2076 = vmatpush2.msra.mxu0 0.0
    %2077 = vmatprep.subr.mxu0 0.0
    %2078 = vmatpush2.msra.mxu0 0.0
    %2079 = vmatprep.subr.mxu0 0.0
    %2080 = vmatpush2.msra.mxu0 0.0
    %2081 = vmatprep.subr.mxu0 0.0
    %2082 = vmatpush2.msra.mxu0 0.0
    %2083 = vmatprep.subr.mxu0 0.0
    %2084 = vmatpush2.msra.mxu0 0.0
    %2085 = vmatprep.subr.mxu0 0.0
    %2086 = vmatpush2.msra.mxu0 0.0
    %2087 = vmatprep.subr.mxu0 0.0
    %2088 = vmatpush2.msra.mxu0 0.0
    %2089 = vmatprep.subr.mxu0 0.0
    %2090 = vmatpush2.msra.mxu0 0.0
    %2091 = vmatprep.subr.mxu0 0.0
    %2092 = vmatpush2.msra.mxu0 0.0
    %2093 = vmatprep.subr.mxu0 0.0
    %2094 = vmatpush2.msra.mxu0 0.0
    %2095 = vmatprep.subr.mxu0 0.0
    %2096 = vmatpush2.msra.mxu0 0.0
    %2097 = vmatprep.subr.mxu0 0.0
    %2098 = vmatpush2.msra.mxu0 0.0
    %2099 = vmatprep.mubr.f32.mxu0 0.0
    %2100 = vmatmul.mubr.f32.gmra.mxu0 %v2024
    %v2101 = vpop.f32.mrf.mxu0
    %v2102 = vadd.f32 %v2006, %v2101
    %v2103 = vpop.f32.mrf.mxu0
    %v2104 = vadd.f32 %v2006, %v2103
    %2105 = vmatprep.mubr.f32.mxu0 0.0
    %2106 = vmatmul.mubr.f32.gmra.mxu0 %v2027
    %v2107 = vpop.f32.mrf.mxu0
    %v2108 = vadd.f32 %v2011, %v2107
    %v2109 = vpop.f32.mrf.mxu0
    %v2110 = vadd.f32 %v2011, %v2109
    %2111 = vmatprep.mubr.f32.mxu0 0.0
    %2112 = vmatmul.mubr.f32.gmra.mxu0 %v2030
    %v2113 = vpop.f32.mrf.mxu0
    %v2114 = vadd.f32 %v2016, %v2113
    %v2115 = vpop.f32.mrf.mxu0
    %v2116 = vadd.f32 %v2016, %v2115
    %2117 = vmatprep.mubr.f32.mxu0 0.0
    %2118 = vmatmul.mubr.f32.gmra.mxu0 %v2033
    %v2119 = vpop.f32.mrf.mxu0
    %v2120 = vadd.f32 %v2021, %v2119
    %v2121 = vpop.f32.mrf.mxu0
    %v2122 = vadd.f32 %v2021, %v2121
    %2123 = vdwg.mxu0
    %v2124 = vadd.f32 %v2102, 0.7853982
    %v2125 = vadd.f32 %v2104, 0.7853982
    %v2126 = vadd.f32 %v2108, 0.7853982
    %v2127 = vadd.f32 %v2110, 0.7853982
    %v2128 = vadd.f32 %v2114, 0.7853982
    %v2129 = vadd.f32 %v2116, 0.7853982
    %v2130 = vadd.f32 %v2120, 0.7853982
    %v2131 = vadd.f32 %v2122, 0.7853982
    %v2132 = vand.u32 2147483647, %v2124
    %vm2133 = vcmp.le.f32.partialorder %v2132, 0.7853982
    %vm2134 = vcmp.lt.s32.totalorder %v2124, 0
    %v2135 = vand.u32 %v2124, 2139095040
    %v2136 = vshrl.u32 %v2135, 23
    %v2137 = vsub.s32 %v2136, 127
    %v2138 = vand.u32 2147483647, %v2124
    %v2139 = vand.u32 %v2138, 8388607
    %v2140 = vor.u32 %v2139, 8388608
    %v2141 = vsub.s32 0, %v2140
    %v2142 = vadd.s32 %v2137, 1
    %vm2143 = vcmp.gt.s32.totalorder %v2142, 0
    %v2144 = vsel %vm2143, %v2142, 0
    %v2145 = vshrl.u32 %v2144, 5
    %v2146 = vand.u32 %v2144, 31
    %v2147 = vsub.s32 32, %v2146
    %v2148 = vshrl.u32 683565275, %v2147
    %v2149 = vshll.u32 683565275, %v2146
    %v2150 = vshrl.u32 2475754826, %v2147
    %v2151 = vor.u32 %v2149, %v2150
    %v2152 = vshll.u32 2475754826, %v2146
    %v2153 = vshrl.u32 2131351028, %v2147
    %v2154 = vor.u32 %v2152, %v2153
    %v2155 = vshll.u32 2131351028, %v2146
    %v2156 = vshrl.u32 2102212464, %v2147
    %v2157 = vor.u32 %v2155, %v2156
    %v2158 = vshll.u32 2102212464, %v2146
    %v2159 = vshrl.u32 920167782, %v2147
    %v2160 = vor.u32 %v2158, %v2159
    %v2161 = vshll.u32 920167782, %v2146
    %v2162 = vshrl.u32 1326507024, %v2147
    %v2163 = vor.u32 %v2161, %v2162
    %vm2164 = vcmp.lt.s32.totalorder %v2145, 1
    %vm2165 = vcmp.lt.s32.totalorder %v2145, 2
    %vm2166 = vcmp.lt.s32.totalorder %v2145, 3
    %vm2167 = vcmp.lt.s32.totalorder %v2145, 4
    %v2168 = vsel %vm2164, %v2148, %v2151
    %v2169 = vsel %vm2167, %v2157, 2102212464
    %v2170 = vsel %vm2166, %v2154, %v2169
    %v2171 = vsel %vm2165, %v2168, %v2170
    %v2172 = vsel %vm2164, %v2151, %v2154
    %v2173 = vsel %vm2167, %v2160, 920167782
    %v2174 = vsel %vm2166, %v2157, %v2173
    %v2175 = vsel %vm2165, %v2172, %v2174
    %v2176 = vsel %vm2164, %v2154, %v2157
    %v2177 = vsel %vm2167, %v2163, 1326507024
    %v2178 = vsel %vm2166, %v2160, %v2177
    %v2179 = vsel %vm2165, %v2176, %v2178
    %v2180 = vshll.u32 %v2140, 8
    %v2181 = vmul.u32.u64.compose %v2180, %v2179
    %v2182 = vextract.low.u32 %v2181
    %v2183 = vextract.high.u32 %v2181
    %v2184 = vmul.u32.u64.compose %v2180, %v2175
    %v2185 = vextract.low.u32 %v2184
    %v2186 = vextract.high.u32 %v2184
    %v2187 = vmul.u32 %v2180, %v2171
    %v2188 = vadd.s32 %v2183, %v2185
    %vm2189 = vc.u32 %v2183, %v2185
    %v2190 = vadd.s32 %v2186, 1
    %v2191 = vsel %vm2189, %v2190, %v2186
    %v2192 = vadd.s32 %v2187, %v2191
    %v2193 = vadd.s32 %v2192, 536870912
    %v2194 = vshrl.u32 %v2193, 30
    %v2195 = vshll.u32 %v2194, 30
    %v2196 = vsub.s32 %v2192, %v2195
    %vm2197 = vcmp.lt.s32.totalorder %v2196, 0
    %v2198 = vsub.s32 0, %v2196
    %v2199 = vsel %vm2197, %v2198, %v2196
    %v2200 = vclz %v2199
    %v2201 = vsub.s32 %v2200, 2
    %vm2202 = vcmp.gt.s32.totalorder 0, %v2201
    %v2203 = vsel %vm2202, 0, %v2201
    %v2204 = vsub.s32 32, %v2203
    %v2205 = vshll.u32 %v2196, %v2203
    %v2206 = vshrl.u32 %v2188, %v2204
    %v2207 = vor.u32 %v2205, %v2206
    %v2208 = vsub.s32 4294967266, %v2203
    %v2209 = vadd.s32 %v2208, 127
    %v2210 = vshll.u32 %v2209, 23
    %v2211 = vor.u32 4788187, %v2210
    %v2212 = vand.u32 2147483647, %v2211
    %v2214 = vcvt.s32.f32 %v2207
    %v2215 = vmul.f32 %v2214, %v2212
    %v2216 = vxor.u32 %v2215, 2147483648
    %v2217 = vsel %vm2134, %v2216, %v2215
    %v2218 = vsub.s32 4, %v2194
    %v2219 = vsel %vm2134, %v2218, %v2194
    %v2220 = vsel %vm2133, %v2124, %v2217
    %v2221 = vsel %vm2133, 0, %v2219
    %v2222 = vcosq.f32.pop %v2220
    %v2223 = vsinq.f32.pop %v2220
    %vm2224 = vweird.f32 %v2124
    %v2225 = vadd.s32 %v2221, 3
    %v2226 = vand.u32 %v2225, 3
    %vm2227 = vcmp.lt.s32.totalorder %v2226, 2
    %vm2228 = vcmp.eq.s32.totalorder %v2226, 0
    %v2229 = vxor.u32 %v2223, 2147483648
    %v2230 = vsel %vm2228, %v2222, %v2229
    %vm2231 = vcmp.eq.s32.totalorder %v2226, 2
    %v2232 = vxor.u32 %v2222, 2147483648
    %v2233 = vsel %vm2231, %v2232, %v2223
    %v2234 = vsel %vm2227, %v2230, %v2233
    %v2235 = vsel %vm2224, nan, %v2234
    %v2236 = vand.u32 2147483647, %v2125
    %vm2237 = vcmp.le.f32.partialorder %v2236, 0.7853982
    %vm2238 = vcmp.lt.s32.totalorder %v2125, 0
    %v2239 = vand.u32 %v2125, 2139095040
    %v2240 = vshrl.u32 %v2239, 23
    %v2241 = vsub.s32 %v2240, 127
    %v2242 = vand.u32 2147483647, %v2125
    %v2243 = vand.u32 %v2242, 8388607
    %v2244 = vor.u32 %v2243, 8388608
    %v2245 = vsub.s32 0, %v2244
    %v2246 = vadd.s32 %v2241, 1
    %vm2247 = vcmp.gt.s32.totalorder %v2246, 0
    %v2248 = vsel %vm2247, %v2246, 0
    %v2249 = vshrl.u32 %v2248, 5
    %v2250 = vand.u32 %v2248, 31
    %v2251 = vsub.s32 32, %v2250
    %v2252 = vshrl.u32 683565275, %v2251
    %v2253 = vshll.u32 683565275, %v2250
    %v2254 = vshrl.u32 2475754826, %v2251
    %v2255 = vor.u32 %v2253, %v2254
    %v2256 = vshll.u32 2475754826, %v2250
    %v2257 = vshrl.u32 2131351028, %v2251
    %v2258 = vor.u32 %v2256, %v2257
    %v2259 = vshll.u32 2131351028, %v2250
    %v2260 = vshrl.u32 2102212464, %v2251
    %v2261 = vor.u32 %v2259, %v2260
    %v2262 = vshll.u32 2102212464, %v2250
    %v2263 = vshrl.u32 920167782, %v2251
    %v2264 = vor.u32 %v2262, %v2263
    %v2265 = vshll.u32 920167782, %v2250
    %v2266 = vshrl.u32 1326507024, %v2251
    %v2267 = vor.u32 %v2265, %v2266
    %vm2268 = vcmp.lt.s32.totalorder %v2249, 1
    %vm2269 = vcmp.lt.s32.totalorder %v2249, 2
    %vm2270 = vcmp.lt.s32.totalorder %v2249, 3
    %vm2271 = vcmp.lt.s32.totalorder %v2249, 4
    %v2272 = vsel %vm2268, %v2252, %v2255
    %v2273 = vsel %vm2271, %v2261, 2102212464
    %v2274 = vsel %vm2270, %v2258, %v2273
    %v2275 = vsel %vm2269, %v2272, %v2274
    %v2276 = vsel %vm2268, %v2255, %v2258
    %v2277 = vsel %vm2271, %v2264, 920167782
    %v2278 = vsel %vm2270, %v2261, %v2277
    %v2279 = vsel %vm2269, %v2276, %v2278
    %v2280 = vsel %vm2268, %v2258, %v2261
    %v2281 = vsel %vm2271, %v2267, 1326507024
    %v2282 = vsel %vm2270, %v2264, %v2281
    %v2283 = vsel %vm2269, %v2280, %v2282
    %v2284 = vshll.u32 %v2244, 8
    %v2285 = vmul.u32.u64.compose %v2284, %v2283
    %v2286 = vextract.low.u32 %v2285
    %v2287 = vextract.high.u32 %v2285
    %v2288 = vmul.u32.u64.compose %v2284, %v2279
    %v2289 = vextract.low.u32 %v2288
    %v2290 = vextract.high.u32 %v2288
    %v2291 = vmul.u32 %v2284, %v2275
    %v2292 = vadd.s32 %v2287, %v2289
    %vm2293 = vc.u32 %v2287, %v2289
    %v2294 = vadd.s32 %v2290, 1
    %v2295 = vsel %vm2293, %v2294, %v2290
    %v2296 = vadd.s32 %v2291, %v2295
    %v2297 = vadd.s32 %v2296, 536870912
    %v2298 = vshrl.u32 %v2297, 30
    %v2299 = vshll.u32 %v2298, 30
    %v2300 = vsub.s32 %v2296, %v2299
    %vm2301 = vcmp.lt.s32.totalorder %v2300, 0
    %v2302 = vsub.s32 0, %v2300
    %v2303 = vsel %vm2301, %v2302, %v2300
    %v2304 = vclz %v2303
    %v2305 = vsub.s32 %v2304, 2
    %vm2306 = vcmp.gt.s32.totalorder 0, %v2305
    %v2307 = vsel %vm2306, 0, %v2305
    %v2308 = vsub.s32 32, %v2307
    %v2309 = vshll.u32 %v2300, %v2307
    %v2310 = vshrl.u32 %v2292, %v2308
    %v2311 = vor.u32 %v2309, %v2310
    %v2312 = vsub.s32 4294967266, %v2307
    %v2313 = vadd.s32 %v2312, 127
    %v2314 = vshll.u32 %v2313, 23
    %v2315 = vor.u32 4788187, %v2314
    %v2316 = vand.u32 2147483647, %v2315
    %v2318 = vcvt.s32.f32 %v2311
    %v2319 = vmul.f32 %v2318, %v2316
    %v2320 = vxor.u32 %v2319, 2147483648
    %v2321 = vsel %vm2238, %v2320, %v2319
    %v2322 = vsub.s32 4, %v2298
    %v2323 = vsel %vm2238, %v2322, %v2298
    %v2324 = vsel %vm2237, %v2125, %v2321
    %v2325 = vsel %vm2237, 0, %v2323
    %v2326 = vcosq.f32.pop %v2324
    %v2327 = vsinq.f32.pop %v2324
    %vm2328 = vweird.f32 %v2125
    %v2329 = vadd.s32 %v2325, 3
    %v2330 = vand.u32 %v2329, 3
    %vm2331 = vcmp.lt.s32.totalorder %v2330, 2
    %vm2332 = vcmp.eq.s32.totalorder %v2330, 0
    %v2333 = vxor.u32 %v2327, 2147483648
    %v2334 = vsel %vm2332, %v2326, %v2333
    %vm2335 = vcmp.eq.s32.totalorder %v2330, 2
    %v2336 = vxor.u32 %v2326, 2147483648
    %v2337 = vsel %vm2335, %v2336, %v2327
    %v2338 = vsel %vm2331, %v2334, %v2337
    %v2339 = vsel %vm2328, nan, %v2338
    %v2340 = vand.u32 2147483647, %v2126
    %vm2341 = vcmp.le.f32.partialorder %v2340, 0.7853982
    %vm2342 = vcmp.lt.s32.totalorder %v2126, 0
    %v2343 = vand.u32 %v2126, 2139095040
    %v2344 = vshrl.u32 %v2343, 23
    %v2345 = vsub.s32 %v2344, 127
    %v2346 = vand.u32 2147483647, %v2126
    %v2347 = vand.u32 %v2346, 8388607
    %v2348 = vor.u32 %v2347, 8388608
    %v2349 = vsub.s32 0, %v2348
    %v2350 = vadd.s32 %v2345, 1
    %vm2351 = vcmp.gt.s32.totalorder %v2350, 0
    %v2352 = vsel %vm2351, %v2350, 0
    %v2353 = vshrl.u32 %v2352, 5
    %v2354 = vand.u32 %v2352, 31
    %v2355 = vsub.s32 32, %v2354
    %v2356 = vshrl.u32 683565275, %v2355
    %v2357 = vshll.u32 683565275, %v2354
    %v2358 = vshrl.u32 2475754826, %v2355
    %v2359 = vor.u32 %v2357, %v2358
    %v2360 = vshll.u32 2475754826, %v2354
    %v2361 = vshrl.u32 2131351028, %v2355
    %v2362 = vor.u32 %v2360, %v2361
    %v2363 = vshll.u32 2131351028, %v2354
    %v2364 = vshrl.u32 2102212464, %v2355
    %v2365 = vor.u32 %v2363, %v2364
    %v2366 = vshll.u32 2102212464, %v2354
    %v2367 = vshrl.u32 920167782, %v2355
    %v2368 = vor.u32 %v2366, %v2367
    %v2369 = vshll.u32 920167782, %v2354
    %v2370 = vshrl.u32 1326507024, %v2355
    %v2371 = vor.u32 %v2369, %v2370
    %vm2372 = vcmp.lt.s32.totalorder %v2353, 1
    %vm2373 = vcmp.lt.s32.totalorder %v2353, 2
    %vm2374 = vcmp.lt.s32.totalorder %v2353, 3
    %vm2375 = vcmp.lt.s32.totalorder %v2353, 4
    %v2376 = vsel %vm2372, %v2356, %v2359
    %v2377 = vsel %vm2375, %v2365, 2102212464
    %v2378 = vsel %vm2374, %v2362, %v2377
    %v2379 = vsel %vm2373, %v2376, %v2378
    %v2380 = vsel %vm2372, %v2359, %v2362
    %v2381 = vsel %vm2375, %v2368, 920167782
    %v2382 = vsel %vm2374, %v2365, %v2381
    %v2383 = vsel %vm2373, %v2380, %v2382
    %v2384 = vsel %vm2372, %v2362, %v2365
    %v2385 = vsel %vm2375, %v2371, 1326507024
    %v2386 = vsel %vm2374, %v2368, %v2385
    %v2387 = vsel %vm2373, %v2384, %v2386
    %v2388 = vshll.u32 %v2348, 8
    %v2389 = vmul.u32.u64.compose %v2388, %v2387
    %v2390 = vextract.low.u32 %v2389
    %v2391 = vextract.high.u32 %v2389
    %v2392 = vmul.u32.u64.compose %v2388, %v2383
    %v2393 = vextract.low.u32 %v2392
    %v2394 = vextract.high.u32 %v2392
    %v2395 = vmul.u32 %v2388, %v2379
    %v2396 = vadd.s32 %v2391, %v2393
    %vm2397 = vc.u32 %v2391, %v2393
    %v2398 = vadd.s32 %v2394, 1
    %v2399 = vsel %vm2397, %v2398, %v2394
    %v2400 = vadd.s32 %v2395, %v2399
    %v2401 = vadd.s32 %v2400, 536870912
    %v2402 = vshrl.u32 %v2401, 30
    %v2403 = vshll.u32 %v2402, 30
    %v2404 = vsub.s32 %v2400, %v2403
    %vm2405 = vcmp.lt.s32.totalorder %v2404, 0
    %v2406 = vsub.s32 0, %v2404
    %v2407 = vsel %vm2405, %v2406, %v2404
    %v2408 = vclz %v2407
    %v2409 = vsub.s32 %v2408, 2
    %vm2410 = vcmp.gt.s32.totalorder 0, %v2409
    %v2411 = vsel %vm2410, 0, %v2409
    %v2412 = vsub.s32 32, %v2411
    %v2413 = vshll.u32 %v2404, %v2411
    %v2414 = vshrl.u32 %v2396, %v2412
    %v2415 = vor.u32 %v2413, %v2414
    %v2416 = vsub.s32 4294967266, %v2411
    %v2417 = vadd.s32 %v2416, 127
    %v2418 = vshll.u32 %v2417, 23
    %v2419 = vor.u32 4788187, %v2418
    %v2420 = vand.u32 2147483647, %v2419
    %v2422 = vcvt.s32.f32 %v2415
    %v2423 = vmul.f32 %v2422, %v2420
    %v2424 = vxor.u32 %v2423, 2147483648
    %v2425 = vsel %vm2342, %v2424, %v2423
    %v2426 = vsub.s32 4, %v2402
    %v2427 = vsel %vm2342, %v2426, %v2402
    %v2428 = vsel %vm2341, %v2126, %v2425
    %v2429 = vsel %vm2341, 0, %v2427
    %v2430 = vcosq.f32.pop %v2428
    %v2431 = vsinq.f32.pop %v2428
    %vm2432 = vweird.f32 %v2126
    %v2433 = vadd.s32 %v2429, 3
    %v2434 = vand.u32 %v2433, 3
    %vm2435 = vcmp.lt.s32.totalorder %v2434, 2
    %vm2436 = vcmp.eq.s32.totalorder %v2434, 0
    %v2437 = vxor.u32 %v2431, 2147483648
    %v2438 = vsel %vm2436, %v2430, %v2437
    %vm2439 = vcmp.eq.s32.totalorder %v2434, 2
    %v2440 = vxor.u32 %v2430, 2147483648
    %v2441 = vsel %vm2439, %v2440, %v2431
    %v2442 = vsel %vm2435, %v2438, %v2441
    %v2443 = vsel %vm2432, nan, %v2442
    %v2444 = vand.u32 2147483647, %v2127
    %vm2445 = vcmp.le.f32.partialorder %v2444, 0.7853982
    %vm2446 = vcmp.lt.s32.totalorder %v2127, 0
    %v2447 = vand.u32 %v2127, 2139095040
    %v2448 = vshrl.u32 %v2447, 23
    %v2449 = vsub.s32 %v2448, 127
    %v2450 = vand.u32 2147483647, %v2127
    %v2451 = vand.u32 %v2450, 8388607
    %v2452 = vor.u32 %v2451, 8388608
    %v2453 = vsub.s32 0, %v2452
    %v2454 = vadd.s32 %v2449, 1
    %vm2455 = vcmp.gt.s32.totalorder %v2454, 0
    %v2456 = vsel %vm2455, %v2454, 0
    %v2457 = vshrl.u32 %v2456, 5
    %v2458 = vand.u32 %v2456, 31
    %v2459 = vsub.s32 32, %v2458
    %v2460 = vshrl.u32 683565275, %v2459
    %v2461 = vshll.u32 683565275, %v2458
    %v2462 = vshrl.u32 2475754826, %v2459
    %v2463 = vor.u32 %v2461, %v2462
    %v2464 = vshll.u32 2475754826, %v2458
    %v2465 = vshrl.u32 2131351028, %v2459
    %v2466 = vor.u32 %v2464, %v2465
    %v2467 = vshll.u32 2131351028, %v2458
    %v2468 = vshrl.u32 2102212464, %v2459
    %v2469 = vor.u32 %v2467, %v2468
    %v2470 = vshll.u32 2102212464, %v2458
    %v2471 = vshrl.u32 920167782, %v2459
    %v2472 = vor.u32 %v2470, %v2471
    %v2473 = vshll.u32 920167782, %v2458
    %v2474 = vshrl.u32 1326507024, %v2459
    %v2475 = vor.u32 %v2473, %v2474
    %vm2476 = vcmp.lt.s32.totalorder %v2457, 1
    %vm2477 = vcmp.lt.s32.totalorder %v2457, 2
    %vm2478 = vcmp.lt.s32.totalorder %v2457, 3
    %vm2479 = vcmp.lt.s32.totalorder %v2457, 4
    %v2480 = vsel %vm2476, %v2460, %v2463
    %v2481 = vsel %vm2479, %v2469, 2102212464
    %v2482 = vsel %vm2478, %v2466, %v2481
    %v2483 = vsel %vm2477, %v2480, %v2482
    %v2484 = vsel %vm2476, %v2463, %v2466
    %v2485 = vsel %vm2479, %v2472, 920167782
    %v2486 = vsel %vm2478, %v2469, %v2485
    %v2487 = vsel %vm2477, %v2484, %v2486
    %v2488 = vsel %vm2476, %v2466, %v2469
    %v2489 = vsel %vm2479, %v2475, 1326507024
    %v2490 = vsel %vm2478, %v2472, %v2489
    %v2491 = vsel %vm2477, %v2488, %v2490
    %v2492 = vshll.u32 %v2452, 8
    %v2493 = vmul.u32.u64.compose %v2492, %v2491
    %v2494 = vextract.low.u32 %v2493
    %v2495 = vextract.high.u32 %v2493
    %v2496 = vmul.u32.u64.compose %v2492, %v2487
    %v2497 = vextract.low.u32 %v2496
    %v2498 = vextract.high.u32 %v2496
    %v2499 = vmul.u32 %v2492, %v2483
    %v2500 = vadd.s32 %v2495, %v2497
    %vm2501 = vc.u32 %v2495, %v2497
    %v2502 = vadd.s32 %v2498, 1
    %v2503 = vsel %vm2501, %v2502, %v2498
    %v2504 = vadd.s32 %v2499, %v2503
    %v2505 = vadd.s32 %v2504, 536870912
    %v2506 = vshrl.u32 %v2505, 30
    %v2507 = vshll.u32 %v2506, 30
    %v2508 = vsub.s32 %v2504, %v2507
    %vm2509 = vcmp.lt.s32.totalorder %v2508, 0
    %v2510 = vsub.s32 0, %v2508
    %v2511 = vsel %vm2509, %v2510, %v2508
    %v2512 = vclz %v2511
    %v2513 = vsub.s32 %v2512, 2
    %vm2514 = vcmp.gt.s32.totalorder 0, %v2513
    %v2515 = vsel %vm2514, 0, %v2513
    %v2516 = vsub.s32 32, %v2515
    %v2517 = vshll.u32 %v2508, %v2515
    %v2518 = vshrl.u32 %v2500, %v2516
    %v2519 = vor.u32 %v2517, %v2518
    %v2520 = vsub.s32 4294967266, %v2515
    %v2521 = vadd.s32 %v2520, 127
    %v2522 = vshll.u32 %v2521, 23
    %v2523 = vor.u32 4788187, %v2522
    %v2524 = vand.u32 2147483647, %v2523
    %v2526 = vcvt.s32.f32 %v2519
    %v2527 = vmul.f32 %v2526, %v2524
    %v2528 = vxor.u32 %v2527, 2147483648
    %v2529 = vsel %vm2446, %v2528, %v2527
    %v2530 = vsub.s32 4, %v2506
    %v2531 = vsel %vm2446, %v2530, %v2506
    %v2532 = vsel %vm2445, %v2127, %v2529
    %v2533 = vsel %vm2445, 0, %v2531
    %v2534 = vcosq.f32.pop %v2532
    %v2535 = vsinq.f32.pop %v2532
    %vm2536 = vweird.f32 %v2127
    %v2537 = vadd.s32 %v2533, 3
    %v2538 = vand.u32 %v2537, 3
    %vm2539 = vcmp.lt.s32.totalorder %v2538, 2
    %vm2540 = vcmp.eq.s32.totalorder %v2538, 0
    %v2541 = vxor.u32 %v2535, 2147483648
    %v2542 = vsel %vm2540, %v2534, %v2541
    %vm2543 = vcmp.eq.s32.totalorder %v2538, 2
    %v2544 = vxor.u32 %v2534, 2147483648
    %v2545 = vsel %vm2543, %v2544, %v2535
    %v2546 = vsel %vm2539, %v2542, %v2545
    %v2547 = vsel %vm2536, nan, %v2546
    %v2548 = vand.u32 2147483647, %v2128
    %vm2549 = vcmp.le.f32.partialorder %v2548, 0.7853982
    %vm2550 = vcmp.lt.s32.totalorder %v2128, 0
    %v2551 = vand.u32 %v2128, 2139095040
    %v2552 = vshrl.u32 %v2551, 23
    %v2553 = vsub.s32 %v2552, 127
    %v2554 = vand.u32 2147483647, %v2128
    %v2555 = vand.u32 %v2554, 8388607
    %v2556 = vor.u32 %v2555, 8388608
    %v2557 = vsub.s32 0, %v2556
    %v2558 = vadd.s32 %v2553, 1
    %vm2559 = vcmp.gt.s32.totalorder %v2558, 0
    %v2560 = vsel %vm2559, %v2558, 0
    %v2561 = vshrl.u32 %v2560, 5
    %v2562 = vand.u32 %v2560, 31
    %v2563 = vsub.s32 32, %v2562
    %v2564 = vshrl.u32 683565275, %v2563
    %v2565 = vshll.u32 683565275, %v2562
    %v2566 = vshrl.u32 2475754826, %v2563
    %v2567 = vor.u32 %v2565, %v2566
    %v2568 = vshll.u32 2475754826, %v2562
    %v2569 = vshrl.u32 2131351028, %v2563
    %v2570 = vor.u32 %v2568, %v2569
    %v2571 = vshll.u32 2131351028, %v2562
    %v2572 = vshrl.u32 2102212464, %v2563
    %v2573 = vor.u32 %v2571, %v2572
    %v2574 = vshll.u32 2102212464, %v2562
    %v2575 = vshrl.u32 920167782, %v2563
    %v2576 = vor.u32 %v2574, %v2575
    %v2577 = vshll.u32 920167782, %v2562
    %v2578 = vshrl.u32 1326507024, %v2563
    %v2579 = vor.u32 %v2577, %v2578
    %vm2580 = vcmp.lt.s32.totalorder %v2561, 1
    %vm2581 = vcmp.lt.s32.totalorder %v2561, 2
    %vm2582 = vcmp.lt.s32.totalorder %v2561, 3
    %vm2583 = vcmp.lt.s32.totalorder %v2561, 4
    %v2584 = vsel %vm2580, %v2564, %v2567
    %v2585 = vsel %vm2583, %v2573, 2102212464
    %v2586 = vsel %vm2582, %v2570, %v2585
    %v2587 = vsel %vm2581, %v2584, %v2586
    %v2588 = vsel %vm2580, %v2567, %v2570
    %v2589 = vsel %vm2583, %v2576, 920167782
    %v2590 = vsel %vm2582, %v2573, %v2589
    %v2591 = vsel %vm2581, %v2588, %v2590
    %v2592 = vsel %vm2580, %v2570, %v2573
    %v2593 = vsel %vm2583, %v2579, 1326507024
    %v2594 = vsel %vm2582, %v2576, %v2593
    %v2595 = vsel %vm2581, %v2592, %v2594
    %v2596 = vshll.u32 %v2556, 8
    %v2597 = vmul.u32.u64.compose %v2596, %v2595
    %v2598 = vextract.low.u32 %v2597
    %v2599 = vextract.high.u32 %v2597
    %v2600 = vmul.u32.u64.compose %v2596, %v2591
    %v2601 = vextract.low.u32 %v2600
    %v2602 = vextract.high.u32 %v2600
    %v2603 = vmul.u32 %v2596, %v2587
    %v2604 = vadd.s32 %v2599, %v2601
    %vm2605 = vc.u32 %v2599, %v2601
    %v2606 = vadd.s32 %v2602, 1
    %v2607 = vsel %vm2605, %v2606, %v2602
    %v2608 = vadd.s32 %v2603, %v2607
    %v2609 = vadd.s32 %v2608, 536870912
    %v2610 = vshrl.u32 %v2609, 30
    %v2611 = vshll.u32 %v2610, 30
    %v2612 = vsub.s32 %v2608, %v2611
    %vm2613 = vcmp.lt.s32.totalorder %v2612, 0
    %v2614 = vsub.s32 0, %v2612
    %v2615 = vsel %vm2613, %v2614, %v2612
    %v2616 = vclz %v2615
    %v2617 = vsub.s32 %v2616, 2
    %vm2618 = vcmp.gt.s32.totalorder 0, %v2617
    %v2619 = vsel %vm2618, 0, %v2617
    %v2620 = vsub.s32 32, %v2619
    %v2621 = vshll.u32 %v2612, %v2619
    %v2622 = vshrl.u32 %v2604, %v2620
    %v2623 = vor.u32 %v2621, %v2622
    %v2624 = vsub.s32 4294967266, %v2619
    %v2625 = vadd.s32 %v2624, 127
    %v2626 = vshll.u32 %v2625, 23
    %v2627 = vor.u32 4788187, %v2626
    %v2628 = vand.u32 2147483647, %v2627
    %v2630 = vcvt.s32.f32 %v2623
    %v2631 = vmul.f32 %v2630, %v2628
    %v2632 = vxor.u32 %v2631, 2147483648
    %v2633 = vsel %vm2550, %v2632, %v2631
    %v2634 = vsub.s32 4, %v2610
    %v2635 = vsel %vm2550, %v2634, %v2610
    %v2636 = vsel %vm2549, %v2128, %v2633
    %v2637 = vsel %vm2549, 0, %v2635
    %v2638 = vcosq.f32.pop %v2636
    %v2639 = vsinq.f32.pop %v2636
    %vm2640 = vweird.f32 %v2128
    %v2641 = vadd.s32 %v2637, 3
    %v2642 = vand.u32 %v2641, 3
    %vm2643 = vcmp.lt.s32.totalorder %v2642, 2
    %vm2644 = vcmp.eq.s32.totalorder %v2642, 0
    %v2645 = vxor.u32 %v2639, 2147483648
    %v2646 = vsel %vm2644, %v2638, %v2645
    %vm2647 = vcmp.eq.s32.totalorder %v2642, 2
    %v2648 = vxor.u32 %v2638, 2147483648
    %v2649 = vsel %vm2647, %v2648, %v2639
    %v2650 = vsel %vm2643, %v2646, %v2649
    %v2651 = vsel %vm2640, nan, %v2650
    %v2652 = vand.u32 2147483647, %v2129
    %vm2653 = vcmp.le.f32.partialorder %v2652, 0.7853982
    %vm2654 = vcmp.lt.s32.totalorder %v2129, 0
    %v2655 = vand.u32 %v2129, 2139095040
    %v2656 = vshrl.u32 %v2655, 23
    %v2657 = vsub.s32 %v2656, 127
    %v2658 = vand.u32 2147483647, %v2129
    %v2659 = vand.u32 %v2658, 8388607
    %v2660 = vor.u32 %v2659, 8388608
    %v2661 = vsub.s32 0, %v2660
    %v2662 = vadd.s32 %v2657, 1
    %vm2663 = vcmp.gt.s32.totalorder %v2662, 0
    %v2664 = vsel %vm2663, %v2662, 0
    %v2665 = vshrl.u32 %v2664, 5
    %v2666 = vand.u32 %v2664, 31
    %v2667 = vsub.s32 32, %v2666
    %v2668 = vshrl.u32 683565275, %v2667
    %v2669 = vshll.u32 683565275, %v2666
    %v2670 = vshrl.u32 2475754826, %v2667
    %v2671 = vor.u32 %v2669, %v2670
    %v2672 = vshll.u32 2475754826, %v2666
    %v2673 = vshrl.u32 2131351028, %v2667
    %v2674 = vor.u32 %v2672, %v2673
    %v2675 = vshll.u32 2131351028, %v2666
    %v2676 = vshrl.u32 2102212464, %v2667
    %v2677 = vor.u32 %v2675, %v2676
    %v2678 = vshll.u32 2102212464, %v2666
    %v2679 = vshrl.u32 920167782, %v2667
    %v2680 = vor.u32 %v2678, %v2679
    %v2681 = vshll.u32 920167782, %v2666
    %v2682 = vshrl.u32 1326507024, %v2667
    %v2683 = vor.u32 %v2681, %v2682
    %vm2684 = vcmp.lt.s32.totalorder %v2665, 1
    %vm2685 = vcmp.lt.s32.totalorder %v2665, 2
    %vm2686 = vcmp.lt.s32.totalorder %v2665, 3
    %vm2687 = vcmp.lt.s32.totalorder %v2665, 4
    %v2688 = vsel %vm2684, %v2668, %v2671
    %v2689 = vsel %vm2687, %v2677, 2102212464
    %v2690 = vsel %vm2686, %v2674, %v2689
    %v2691 = vsel %vm2685, %v2688, %v2690
    %v2692 = vsel %vm2684, %v2671, %v2674
    %v2693 = vsel %vm2687, %v2680, 920167782
    %v2694 = vsel %vm2686, %v2677, %v2693
    %v2695 = vsel %vm2685, %v2692, %v2694
    %v2696 = vsel %vm2684, %v2674, %v2677
    %v2697 = vsel %vm2687, %v2683, 1326507024
    %v2698 = vsel %vm2686, %v2680, %v2697
    %v2699 = vsel %vm2685, %v2696, %v2698
    %v2700 = vshll.u32 %v2660, 8
    %v2701 = vmul.u32.u64.compose %v2700, %v2699
    %v2702 = vextract.low.u32 %v2701
    %v2703 = vextract.high.u32 %v2701
    %v2704 = vmul.u32.u64.compose %v2700, %v2695
    %v2705 = vextract.low.u32 %v2704
    %v2706 = vextract.high.u32 %v2704
    %v2707 = vmul.u32 %v2700, %v2691
    %v2708 = vadd.s32 %v2703, %v2705
    %vm2709 = vc.u32 %v2703, %v2705
    %v2710 = vadd.s32 %v2706, 1
    %v2711 = vsel %vm2709, %v2710, %v2706
    %v2712 = vadd.s32 %v2707, %v2711
    %v2713 = vadd.s32 %v2712, 536870912
    %v2714 = vshrl.u32 %v2713, 30
    %v2715 = vshll.u32 %v2714, 30
    %v2716 = vsub.s32 %v2712, %v2715
    %vm2717 = vcmp.lt.s32.totalorder %v2716, 0
    %v2718 = vsub.s32 0, %v2716
    %v2719 = vsel %vm2717, %v2718, %v2716
    %v2720 = vclz %v2719
    %v2721 = vsub.s32 %v2720, 2
    %vm2722 = vcmp.gt.s32.totalorder 0, %v2721
    %v2723 = vsel %vm2722, 0, %v2721
    %v2724 = vsub.s32 32, %v2723
    %v2725 = vshll.u32 %v2716, %v2723
    %v2726 = vshrl.u32 %v2708, %v2724
    %v2727 = vor.u32 %v2725, %v2726
    %v2728 = vsub.s32 4294967266, %v2723
    %v2729 = vadd.s32 %v2728, 127
    %v2730 = vshll.u32 %v2729, 23
    %v2731 = vor.u32 4788187, %v2730
    %v2732 = vand.u32 2147483647, %v2731
    %v2734 = vcvt.s32.f32 %v2727
    %v2735 = vmul.f32 %v2734, %v2732
    %v2736 = vxor.u32 %v2735, 2147483648
    %v2737 = vsel %vm2654, %v2736, %v2735
    %v2738 = vsub.s32 4, %v2714
    %v2739 = vsel %vm2654, %v2738, %v2714
    %v2740 = vsel %vm2653, %v2129, %v2737
    %v2741 = vsel %vm2653, 0, %v2739
    %v2742 = vcosq.f32.pop %v2740
    %v2743 = vsinq.f32.pop %v2740
    %vm2744 = vweird.f32 %v2129
    %v2745 = vadd.s32 %v2741, 3
    %v2746 = vand.u32 %v2745, 3
    %vm2747 = vcmp.lt.s32.totalorder %v2746, 2
    %vm2748 = vcmp.eq.s32.totalorder %v2746, 0
    %v2749 = vxor.u32 %v2743, 2147483648
    %v2750 = vsel %vm2748, %v2742, %v2749
    %vm2751 = vcmp.eq.s32.totalorder %v2746, 2
    %v2752 = vxor.u32 %v2742, 2147483648
    %v2753 = vsel %vm2751, %v2752, %v2743
    %v2754 = vsel %vm2747, %v2750, %v2753
    %v2755 = vsel %vm2744, nan, %v2754
    %v2756 = vand.u32 2147483647, %v2130
    %vm2757 = vcmp.le.f32.partialorder %v2756, 0.7853982
    %vm2758 = vcmp.lt.s32.totalorder %v2130, 0
    %v2759 = vand.u32 %v2130, 2139095040
    %v2760 = vshrl.u32 %v2759, 23
    %v2761 = vsub.s32 %v2760, 127
    %v2762 = vand.u32 2147483647, %v2130
    %v2763 = vand.u32 %v2762, 8388607
    %v2764 = vor.u32 %v2763, 8388608
    %v2765 = vsub.s32 0, %v2764
    %v2766 = vadd.s32 %v2761, 1
    %vm2767 = vcmp.gt.s32.totalorder %v2766, 0
    %v2768 = vsel %vm2767, %v2766, 0
    %v2769 = vshrl.u32 %v2768, 5
    %v2770 = vand.u32 %v2768, 31
    %v2771 = vsub.s32 32, %v2770
    %v2772 = vshrl.u32 683565275, %v2771
    %v2773 = vshll.u32 683565275, %v2770
    %v2774 = vshrl.u32 2475754826, %v2771
    %v2775 = vor.u32 %v2773, %v2774
    %v2776 = vshll.u32 2475754826, %v2770
    %v2777 = vshrl.u32 2131351028, %v2771
    %v2778 = vor.u32 %v2776, %v2777
    %v2779 = vshll.u32 2131351028, %v2770
    %v2780 = vshrl.u32 2102212464, %v2771
    %v2781 = vor.u32 %v2779, %v2780
    %v2782 = vshll.u32 2102212464, %v2770
    %v2783 = vshrl.u32 920167782, %v2771
    %v2784 = vor.u32 %v2782, %v2783
    %v2785 = vshll.u32 920167782, %v2770
    %v2786 = vshrl.u32 1326507024, %v2771
    %v2787 = vor.u32 %v2785, %v2786
    %vm2788 = vcmp.lt.s32.totalorder %v2769, 1
    %vm2789 = vcmp.lt.s32.totalorder %v2769, 2
    %vm2790 = vcmp.lt.s32.totalorder %v2769, 3
    %vm2791 = vcmp.lt.s32.totalorder %v2769, 4
    %v2792 = vsel %vm2788, %v2772, %v2775
    %v2793 = vsel %vm2791, %v2781, 2102212464
    %v2794 = vsel %vm2790, %v2778, %v2793
    %v2795 = vsel %vm2789, %v2792, %v2794
    %v2796 = vsel %vm2788, %v2775, %v2778
    %v2797 = vsel %vm2791, %v2784, 920167782
    %v2798 = vsel %vm2790, %v2781, %v2797
    %v2799 = vsel %vm2789, %v2796, %v2798
    %v2800 = vsel %vm2788, %v2778, %v2781
    %v2801 = vsel %vm2791, %v2787, 1326507024
    %v2802 = vsel %vm2790, %v2784, %v2801
    %v2803 = vsel %vm2789, %v2800, %v2802
    %v2804 = vshll.u32 %v2764, 8
    %v2805 = vmul.u32.u64.compose %v2804, %v2803
    %v2806 = vextract.low.u32 %v2805
    %v2807 = vextract.high.u32 %v2805
    %v2808 = vmul.u32.u64.compose %v2804, %v2799
    %v2809 = vextract.low.u32 %v2808
    %v2810 = vextract.high.u32 %v2808
    %v2811 = vmul.u32 %v2804, %v2795
    %v2812 = vadd.s32 %v2807, %v2809
    %vm2813 = vc.u32 %v2807, %v2809
    %v2814 = vadd.s32 %v2810, 1
    %v2815 = vsel %vm2813, %v2814, %v2810
    %v2816 = vadd.s32 %v2811, %v2815
    %v2817 = vadd.s32 %v2816, 536870912
    %v2818 = vshrl.u32 %v2817, 30
    %v2819 = vshll.u32 %v2818, 30
    %v2820 = vsub.s32 %v2816, %v2819
    %vm2821 = vcmp.lt.s32.totalorder %v2820, 0
    %v2822 = vsub.s32 0, %v2820
    %v2823 = vsel %vm2821, %v2822, %v2820
    %v2824 = vclz %v2823
    %v2825 = vsub.s32 %v2824, 2
    %vm2826 = vcmp.gt.s32.totalorder 0, %v2825
    %v2827 = vsel %vm2826, 0, %v2825
    %v2828 = vsub.s32 32, %v2827
    %v2829 = vshll.u32 %v2820, %v2827
    %v2830 = vshrl.u32 %v2812, %v2828
    %v2831 = vor.u32 %v2829, %v2830
    %v2832 = vsub.s32 4294967266, %v2827
    %v2833 = vadd.s32 %v2832, 127
    %v2834 = vshll.u32 %v2833, 23
    %v2835 = vor.u32 4788187, %v2834
    %v2836 = vand.u32 2147483647, %v2835
    %v2838 = vcvt.s32.f32 %v2831
    %v2839 = vmul.f32 %v2838, %v2836
    %v2840 = vxor.u32 %v2839, 2147483648
    %v2841 = vsel %vm2758, %v2840, %v2839
    %v2842 = vsub.s32 4, %v2818
    %v2843 = vsel %vm2758, %v2842, %v2818
    %v2844 = vsel %vm2757, %v2130, %v2841
    %v2845 = vsel %vm2757, 0, %v2843
    %v2846 = vcosq.f32.pop %v2844
    %v2847 = vsinq.f32.pop %v2844
    %vm2848 = vweird.f32 %v2130
    %v2849 = vadd.s32 %v2845, 3
    %v2850 = vand.u32 %v2849, 3
    %vm2851 = vcmp.lt.s32.totalorder %v2850, 2
    %vm2852 = vcmp.eq.s32.totalorder %v2850, 0
    %v2853 = vxor.u32 %v2847, 2147483648
    %v2854 = vsel %vm2852, %v2846, %v2853
    %vm2855 = vcmp.eq.s32.totalorder %v2850, 2
    %v2856 = vxor.u32 %v2846, 2147483648
    %v2857 = vsel %vm2855, %v2856, %v2847
    %v2858 = vsel %vm2851, %v2854, %v2857
    %v2859 = vsel %vm2848, nan, %v2858
    %v2860 = vand.u32 2147483647, %v2131
    %vm2861 = vcmp.le.f32.partialorder %v2860, 0.7853982
    %vm2862 = vcmp.lt.s32.totalorder %v2131, 0
    %v2863 = vand.u32 %v2131, 2139095040
    %v2864 = vshrl.u32 %v2863, 23
    %v2865 = vsub.s32 %v2864, 127
    %v2866 = vand.u32 2147483647, %v2131
    %v2867 = vand.u32 %v2866, 8388607
    %v2868 = vor.u32 %v2867, 8388608
    %v2869 = vsub.s32 0, %v2868
    %v2870 = vadd.s32 %v2865, 1
    %vm2871 = vcmp.gt.s32.totalorder %v2870, 0
    %v2872 = vsel %vm2871, %v2870, 0
    %v2873 = vshrl.u32 %v2872, 5
    %v2874 = vand.u32 %v2872, 31
    %v2875 = vsub.s32 32, %v2874
    %v2876 = vshrl.u32 683565275, %v2875
    %v2877 = vshll.u32 683565275, %v2874
    %v2878 = vshrl.u32 2475754826, %v2875
    %v2879 = vor.u32 %v2877, %v2878
    %v2880 = vshll.u32 2475754826, %v2874
    %v2881 = vshrl.u32 2131351028, %v2875
    %v2882 = vor.u32 %v2880, %v2881
    %v2883 = vshll.u32 2131351028, %v2874
    %v2884 = vshrl.u32 2102212464, %v2875
    %v2885 = vor.u32 %v2883, %v2884
    %v2886 = vshll.u32 2102212464, %v2874
    %v2887 = vshrl.u32 920167782, %v2875
    %v2888 = vor.u32 %v2886, %v2887
    %v2889 = vshll.u32 920167782, %v2874
    %v2890 = vshrl.u32 1326507024, %v2875
    %v2891 = vor.u32 %v2889, %v2890
    %vm2892 = vcmp.lt.s32.totalorder %v2873, 1
    %vm2893 = vcmp.lt.s32.totalorder %v2873, 2
    %vm2894 = vcmp.lt.s32.totalorder %v2873, 3
    %vm2895 = vcmp.lt.s32.totalorder %v2873, 4
    %v2896 = vsel %vm2892, %v2876, %v2879
    %v2897 = vsel %vm2895, %v2885, 2102212464
    %v2898 = vsel %vm2894, %v2882, %v2897
    %v2899 = vsel %vm2893, %v2896, %v2898
    %v2900 = vsel %vm2892, %v2879, %v2882
    %v2901 = vsel %vm2895, %v2888, 920167782
    %v2902 = vsel %vm2894, %v2885, %v2901
    %v2903 = vsel %vm2893, %v2900, %v2902
    %v2904 = vsel %vm2892, %v2882, %v2885
    %v2905 = vsel %vm2895, %v2891, 1326507024
    %v2906 = vsel %vm2894, %v2888, %v2905
    %v2907 = vsel %vm2893, %v2904, %v2906
    %v2908 = vshll.u32 %v2868, 8
    %v2909 = vmul.u32.u64.compose %v2908, %v2907
    %v2910 = vextract.low.u32 %v2909
    %v2911 = vextract.high.u32 %v2909
    %v2912 = vmul.u32.u64.compose %v2908, %v2903
    %v2913 = vextract.low.u32 %v2912
    %v2914 = vextract.high.u32 %v2912
    %v2915 = vmul.u32 %v2908, %v2899
    %v2916 = vadd.s32 %v2911, %v2913
    %vm2917 = vc.u32 %v2911, %v2913
    %v2918 = vadd.s32 %v2914, 1
    %v2919 = vsel %vm2917, %v2918, %v2914
    %v2920 = vadd.s32 %v2915, %v2919
    %v2921 = vadd.s32 %v2920, 536870912
    %v2922 = vshrl.u32 %v2921, 30
    %v2923 = vshll.u32 %v2922, 30
    %v2924 = vsub.s32 %v2920, %v2923
    %vm2925 = vcmp.lt.s32.totalorder %v2924, 0
    %v2926 = vsub.s32 0, %v2924
    %v2927 = vsel %vm2925, %v2926, %v2924
    %v2928 = vclz %v2927
    %v2929 = vsub.s32 %v2928, 2
    %vm2930 = vcmp.gt.s32.totalorder 0, %v2929
    %v2931 = vsel %vm2930, 0, %v2929
    %v2932 = vsub.s32 32, %v2931
    %v2933 = vshll.u32 %v2924, %v2931
    %v2934 = vshrl.u32 %v2916, %v2932
    %v2935 = vor.u32 %v2933, %v2934
    %v2936 = vsub.s32 4294967266, %v2931
    %v2937 = vadd.s32 %v2936, 127
    %v2938 = vshll.u32 %v2937, 23
    %v2939 = vor.u32 4788187, %v2938
    %v2940 = vand.u32 2147483647, %v2939
    %v2942 = vcvt.s32.f32 %v2935
    %v2943 = vmul.f32 %v2942, %v2940
    %v2944 = vxor.u32 %v2943, 2147483648
    %v2945 = vsel %vm2862, %v2944, %v2943
    %v2946 = vsub.s32 4, %v2922
    %v2947 = vsel %vm2862, %v2946, %v2922
    %v2948 = vsel %vm2861, %v2131, %v2945
    %v2949 = vsel %vm2861, 0, %v2947
    %v2950 = vcosq.f32.pop %v2948
    %v2951 = vsinq.f32.pop %v2948
    %vm2952 = vweird.f32 %v2131
    %v2953 = vadd.s32 %v2949, 3
    %v2954 = vand.u32 %v2953, 3
    %vm2955 = vcmp.lt.s32.totalorder %v2954, 2
    %vm2956 = vcmp.eq.s32.totalorder %v2954, 0
    %v2957 = vxor.u32 %v2951, 2147483648
    %v2958 = vsel %vm2956, %v2950, %v2957
    %vm2959 = vcmp.eq.s32.totalorder %v2954, 2
    %v2960 = vxor.u32 %v2950, 2147483648
    %v2961 = vsel %vm2959, %v2960, %v2951
    %v2962 = vsel %vm2955, %v2958, %v2961
    %v2963 = vsel %vm2952, nan, %v2962
    %v2964 = vmul.f32 %v2235, 1.4142135
    %v2965 = vmul.f32 %v2339, 1.4142135
    %v2966 = vmul.f32 %v2443, 1.4142135
    %v2967 = vmul.f32 %v2547, 1.4142135
    %v2968 = vmul.f32 %v2651, 1.4142135
    %v2969 = vmul.f32 %v2755, 1.4142135
    %v2970 = vmul.f32 %v2859, 1.4142135
    %v2971 = vmul.f32 %v2963, 1.4142135
    %v2972 = vld [vmem:[%s7] sm:$0xff]
    %v2973 = vld [vmem:[%s7 + $0x8] sm:$0xff]
    %v2974 = vld [vmem:[%s7 + $0x10] sm:$0xff]
    %v2975 = vld [vmem:[%s7 + $0x18] sm:$0xff]
    %v2976 = vld [vmem:[#allocation2] sm:$0x1]
    %2978 = vset.pattern.permute.xlu0 0
    %2979 = vperm.xlu0 %2978, %v2972
    %v2980 = vpop.permute.xlu0 %2979
    %2983 = vset.pattern.permute.xlu0 0
    %2984 = vperm.xlu0 %2983, %v2973
    %v2985 = vpop.permute.xlu0 %2984
    %2988 = vset.pattern.permute.xlu0 0
    %2989 = vperm.xlu0 %2988, %v2974
    %v2990 = vpop.permute.xlu0 %2989
    %2993 = vset.pattern.permute.xlu0 0
    %2994 = vperm.xlu0 %2993, %v2975
    %v2995 = vpop.permute.xlu0 %2994
    %v2997 = vmul.f32 %v2980, %v2964
    %v2998 = vmul.f32 %v2980, %v2965
    %v2999 = vmul.f32 %v2985, %v2966
    %v3000 = vmul.f32 %v2985, %v2967
    %v3001 = vmul.f32 %v2990, %v2968
    %v3002 = vmul.f32 %v2990, %v2969
    %v3003 = vmul.f32 %v2995, %v2970
    %v3004 = vmul.f32 %v2995, %v2971
    %v3005 = vadd.f32 %v2997, %v2999
    %v3006 = vadd.f32 %v3005, %v3001
    %v3007 = vadd.f32 %v3006, %v3003
    %v3008 = vrot.slane %v3007, 4
    %v3009 = vadd.f32 %v3007, %v3008
    %v3010 = vrot.slane %v3009, 2
    %v3011 = vadd.f32 %v3009, %v3010
    %v3012 = vrot.slane %v3011, 1
    %v3013 = vadd.f32 %v3011, %v3012
    %v3014 = vadd.f32 %v2998, %v3000
    %v3015 = vadd.f32 %v3014, %v3002
    %v3016 = vadd.f32 %v3015, %v3004
    %v3017 = vrot.slane %v3016, 4
    %v3018 = vadd.f32 %v3016, %v3017
    %v3019 = vrot.slane %v3018, 2
    %v3020 = vadd.f32 %v3018, %v3019
    %v3021 = vrot.slane %v3020, 1
    %v3022 = vadd.f32 %v3020, %v3021
    %3024 = vset.pattern.permute.xlu0 0
    %3025 = vperm.xlu0 %3024, %v2976
    %v3026 = vpop.permute.xlu0 %3025
    %v3028 = vlaneseq
    %v3029 = vshrl.u32 %v3028, 7
    %v3030 = vsub.s32 0, %v3029
    %v3031 = vrot.slane %v3026, %v3030
    %v3032 = vadd.f32 %v3013, %v3031
    %v3033 = vadd.f32 %v3022, %v3031
    %v3036 = vcombine.low %v3032, %v3033
    %v3038 = vunpack.c.l.s4 1966171168
    %v3039 = vunpack.c.0.s8 %v3038
    %v3040 = vlaneseq
    %v3041 = vshrl.u32 %v3040, 7
    %v3042 = vsub.s32 %v3039, %v3041
    %v3043 = vrot.slane %v3036, %v3042
    %v3045 = vunpack.c.l.s4 1966171168
    %v3046 = vunpack.c.0.s8 %v3045
    %v3047 = vlaneseq
    %v3048 = vshrl.u32 %v3047, 7
    %v3049 = vsub.s32 %v3046, %v3048
    %v3050 = vrot.slane %v3043, %v3049
    %v3052 = vlaneseq
    %vm3053 = vcmp.ge.s32.totalorder %v3052, 0
    %vm3054 = vcmp.lt.s32.totalorder %v3052, 256
    %vm3055 = vmand %vm3053, %vm3054
    %3056 = vst.msk [vmem:[#allocation3] sm:$0x3] %vm3055, %v3050
    // Predicated region
    $region38: #{tpu_custom_call.1} parent=1 // pred_check
      _
    $region39: #{tpu_custom_call.1} parent=1 // pred_check_branch
      %3058 = sbr.rel (0) target = $region41
    $region40: #{tpu_custom_call.1} parent=1 // pred_region
      %s3060 = ssub.s32 32, 32
      %3061 = vsyncadd [#allocation4], %s3060
      %s3063 = sshll.u32 [#allocation3], 4
      %s3064 = int_to_ptr.vmem [resolvable:$true] %s3063
      %3066 = dma.vmem_to_hbm [thread:$0]  %s3064, 32, %s9, [#allocation4]
    $region41: #{tpu_custom_call.1} parent=1 // pred_fallthru
      _
    // Predicated region
    $region42: #{tpu_custom_call.1} parent=1 // pred_check
      _
    $region43: #{tpu_custom_call.1} parent=1 // pred_check_branch
      %3068 = sbr.rel (0) target = $region45
    $region44: #{tpu_custom_call.1} parent=1 // pred_region
      %3069 = dma.done [#allocation4], 32
    $region45: #{tpu_custom_call.1} parent=1 // pred_fallthru
      _
    %3070 = vsyncpa [#allocation4], 1

</llo_original>
